<compile_context>
chip_gen: v7x
topology: tpu7x:2x2x1
jax: 0.10.0
libtpu: 0.0.40
codegen_flags: <defaults>
</compile_context>

<pallas_src>
import jax
import jax.numpy as jnp
from jax import lax
from jax.experimental import pallas as pl
from jax.experimental.pallas import tpu as pltpu

LANE = 128     # TPU lane width: channel dims are padded to a multiple of this
EPS = 1e-5


def _round_up(n, m=LANE):
    return ((n + m - 1) // m) * m


def bottleneck_kernel(x_ref, w1_ref, b1_ref, w2_ref, b2_ref, w3_ref, b3_ref,
                      out_ref):
    # x_ref: (1, H, W, Cp) bf16 block for one batch element (Cp = padded chans).
    _, H, W, Cp = x_ref.shape
    Pp = w1_ref.shape[1]            # padded planes
    Coutp = w3_ref.shape[1]         # padded planes * expansion (== Cp here)
    HW = H * W

    # ---- conv1 (1x1, BN1 scale pre-folded into w1) + bias + relu -----------
    x2d = x_ref[0].reshape(HW, Cp)                               # bf16
    h1 = jnp.dot(x2d, w1_ref[...], preferred_element_type=jnp.float32)
    h1 = jnp.maximum(h1 + b1_ref[...], 0.0)                      # (HW, Pp) f32

    # ---- conv2 (3x3, pad=1, stride=1) + bias + relu -------------------------
    # The 9 taps are built with cheap XLU sublane rotations of the flat
    # (H*W, Pp) activation plus narrow (HW, 1) border masks, and consumed as
    # accumulating tap-pair matmuls (K = 2*Pp) -- no materialized im2col buffer.
    frow = lax.broadcasted_iota(jnp.int32, (HW, 1), 0)           # flat y*W + x
    xcol = lax.broadcasted_iota(jnp.int32, (H, W, 1), 1).reshape(HW, 1)
    m_x_lo = xcol >= 1                 # valid when reading column x-1
    m_x_hi = xcol < (W - 1)            # valid when reading column x+1
    m_y_lo = frow >= W                 # valid when reading row    y-1
    m_y_hi = frow < (H - 1) * W        # valid when reading row    y+1

    def tap(i):
        dy, dx = i // 3, i % 3
        s = (dy - 1) * W + (dx - 1)        # flat offset of this tap
        # TODO(synk): roll directly in bf16 once packed-dtype sublane rotates
        # are confirmed supported by the Mosaic lowering; f32 roll is the
        # proven path, the bf16 cast happens immediately after.
        t = h1 if s == 0 else pltpu.roll(h1, (-s) % HW, 0)
        t = t.astype(jnp.bfloat16)
        mask = None
        if dy == 0:
            mask = m_y_lo
        elif dy == 2:
            mask = m_y_hi
        if dx == 0:
            mask = m_x_lo if mask is None else (mask & m_x_lo)
        elif dx == 2:
            mask = m_x_hi if mask is None else (mask & m_x_hi)
        if mask is not None:
            t = jnp.where(mask, t, 0.0)    # (HW,1) condition lane-broadcasts
        return t                            # (HW, Pp) bf16

    h2 = None
    for g in range(4):                      # taps (0,1), (2,3), (4,5), (6,7)
        pair = jnp.concatenate([tap(2 * g), tap(2 * g + 1)], axis=-1)
        part = jnp.dot(pair, w2_ref[pl.ds(2 * g * Pp, 2 * Pp), :],
                       preferred_element_type=jnp.float32)
        h2 = part if h2 is None else h2 + part
    h2 = h2 + jnp.dot(tap(8), w2_ref[pl.ds(8 * Pp, Pp), :],
                      preferred_element_type=jnp.float32)
    h2 = jnp.maximum(h2 + b2_ref[...], 0.0)                      # (HW, Pp) f32

    # ---- conv3 (1x1) + bias + residual add + relu ----------------------------
    h3 = jnp.dot(h2.astype(jnp.bfloat16), w3_ref[...],
                 preferred_element_type=jnp.float32)
    h3 = h3 + b3_ref[...]
    # Re-read the VMEM-resident input block for the residual instead of keeping
    # an f32 copy of x live across the whole kernel.
    resid = x_ref[0].reshape(HW, Coutp).astype(jnp.float32)
    out = jnp.maximum(h3 + resid, 0.0)                           # (HW, Coutp) f32
    out_ref[0] = out.reshape(H, W, Coutp).astype(out_ref.dtype)  # bf16 store


def bottleneck_pallas(x_nchw, kp):
    """x_nchw: (N, Cin, H, W) float32; kp: dict from to_kernel_params().
    Returns (N, Cout, H, W) bfloat16."""
    # TODO(synk): keep the surrounding model NHWC, channel-padded bf16
    # end-to-end to avoid these HBM round-trip transposes/pads on the hot path.
    x = jnp.transpose(x_nchw, (0, 2, 3, 1))                      # NCHW -> NHWC
    N, H, W, Cin = x.shape
    Cin_p, Pp = kp["w1"].shape
    Cout_p = kp["w3"].shape[1]
    Cout = kp["cout"]
    assert Cin == kp["cin"] and Cin_p == Cout_p, "residual needs Cin == Cout"

    # Pad channels to lane width and cast to bf16 (halves HBM traffic; MXU is
    # bf16-native).  Padded channels stay exactly zero end-to-end.
    x_p = jnp.pad(x, ((0, 0), (0, 0), (0, 0), (0, Cin_p - Cin))).astype(jnp.bfloat16)

    out_nhwc = pl.pallas_call(
        bottleneck_kernel,
        out_shape=jax.ShapeDtypeStruct((N, H, W, Cout_p), jnp.bfloat16),
        grid_spec=pltpu.PrefetchScalarGridSpec(
            num_scalar_prefetch=0,
            # TODO(synk): for stage-1 ResNet shapes (H=W=56, C=256) add a second
            # "parallel" grid axis over H row-tiles (1-row halo) so both v7x
            # TensorCores are fed and the block fits a 64 MiB VMEM.
            # TODO(synk): weights/biases have constant index_maps; single-buffer
            # them (pipeline_mode=pl.Buffered(1)) to save VMEM at deep stages.
            grid=(N,),
            in_specs=[
                pl.BlockSpec((1, H, W, Cin_p), lambda n: (n, 0, 0, 0)),
                pl.BlockSpec((Cin_p, Pp),      lambda n: (0, 0)),
                pl.BlockSpec((1, Pp),          lambda n: (0, 0)),
                pl.BlockSpec((9 * Pp, Pp),     lambda n: (0, 0)),
                pl.BlockSpec((1, Pp),          lambda n: (0, 0)),
                pl.BlockSpec((Pp, Cout_p),     lambda n: (0, 0)),
                pl.BlockSpec((1, Cout_p),      lambda n: (0, 0)),
            ],
            out_specs=pl.BlockSpec((1, H, W, Cout_p), lambda n: (n, 0, 0, 0)),
        ),
        compiler_params=pltpu.CompilerParams(
            dimension_semantics=("parallel",),
            vmem_limit_bytes=32 * 1024 * 1024,   # safe on v5e/v6e/v7x
        ),
    )(x_p, kp["w1"], kp["b1"], kp["w2"], kp["b2"], kp["w3"], kp["b3"])

    out = out_nhwc[..., :Cout]
    return jnp.transpose(out, (0, 3, 1, 2))                      # NHWC -> NCHW


# ---------------------------------------------------------------------------
# Parameter construction (deterministic, synthetic) + pure-JAX references
# ---------------------------------------------------------------------------
def make_params(inplanes, planes, key):
    ks = jax.random.split(key, 16)
    exp = 4
    p = {}
    # PyTorch-layout conv weights (OIHW), bias=False
    p["conv1_w"] = 0.2 * jax.random.normal(ks[0], (planes, inplanes, 1, 1), jnp.float32)
    p["conv2_w"] = 0.2 * jax.random.normal(ks[1], (planes, planes, 3, 3), jnp.float32)
    p["conv3_w"] = 0.2 * jax.random.normal(ks[2], (planes * exp, planes, 1, 1), jnp.float32)
    # BatchNorm params (eval-mode running stats)
    for i, c in zip((1, 2, 3), (planes, planes, planes * exp)):
        p[f"bn{i}_g"] = 1.0 + 0.1 * jax.random.normal(ks[3 * i], (c,), jnp.float32)
        p[f"bn{i}_b"] = 0.1 * jax.random.normal(ks[3 * i + 1], (c,), jnp.float32)
        p[f"bn{i}_m"] = 0.1 * jax.random.normal(ks[3 * i + 2], (c,), jnp.float32)
        p[f"bn{i}_v"] = jax.random.uniform(ks[12 + i], (c,), jnp.float32, 0.5, 1.5)
    return p


def _fold_scale_bias(p, i):
    s = p[f"bn{i}_g"] / jnp.sqrt(p[f"bn{i}_v"] + EPS)
    b = p[f"bn{i}_b"] - p[f"bn{i}_m"] * s
    return s, b


def to_kernel_params(p):
    P, Cin = p["conv1_w"].shape[:2]
    Cout = p["conv3_w"].shape[0]
    Pp, Cin_p, Cout_p = _round_up(P), _round_up(Cin), _round_up(Cout)

    s1, b1 = _fold_scale_bias(p, 1)
    s2, b2 = _fold_scale_bias(p, 2)
    s3, b3 = _fold_scale_bias(p, 3)

    # Fold BN scales into the conv weights' output columns (in f32, before the
    # bf16 cast) so the in-kernel epilogue is just `+ bias, ReLU`.
    w1 = jnp.transpose(p["conv1_w"][:, :, 0, 0]) * s1[None, :]        # (Cin, P)
    w1 = jnp.pad(w1, ((0, Cin_p - Cin), (0, Pp - P)))
    w2 = jnp.transpose(p["conv2_w"], (2, 3, 1, 0)) * s2[None, None, None, :]  # (kh,kw,in,out)
    w2 = jnp.pad(w2, ((0, 0), (0, 0), (0, Pp - P), (0, Pp - P)))
    w2 = w2.reshape(9 * Pp, Pp)                                        # tap-major (dy, dx)
    w3 = jnp.transpose(p["conv3_w"][:, :, 0, 0]) * s3[None, :]         # (P, Cout)
    w3 = jnp.pad(w3, ((0, Pp - P), (0, Cout_p - Cout)))

    # Zero-pad biases so padded channels stay exactly zero through ReLU.
    pad1 = lambda v, c, cp: jnp.pad(v, (0, cp - c))[None, :]
    return {
        "w1": w1.astype(jnp.bfloat16), "w2": w2.astype(jnp.bfloat16),
        "w3": w3.astype(jnp.bfloat16),
        "b1": pad1(b1, P, Pp), "b2": pad1(b2, P, Pp), "b3": pad1(b3, Cout, Cout_p),
        "cin": Cin, "cout": Cout,
    }


def _bn(y, p, i):
    g, b, m, v = (p[f"bn{i}_g"], p[f"bn{i}_b"], p[f"bn{i}_m"], p[f"bn{i}_v"])
    rs = lambda a: a[None, :, None, None]
    return (y - rs(m)) / jnp.sqrt(rs(v) + EPS) * rs(g) + rs(b)


def bottleneck_ref_f32(x, p):
    """Pure-JAX NCHW reference (eval-mode BN), full f32."""
    dn = ("NCHW", "OIHW", "NCHW")
    out = lax.conv_general_dilated(x, p["conv1_w"], (1, 1), "VALID", dimension_numbers=dn)
    out = jax.nn.relu(_bn(out, p, 1))
    out = lax.conv_general_dilated(out, p["conv2_w"], (1, 1), ((1, 1), (1, 1)), dimension_numbers=dn)
    out = jax.nn.relu(_bn(out, p, 2))
    out = lax.conv_general_dilated(out, p["conv3_w"], (1, 1), "VALID", dimension_numbers=dn)
    out = _bn(out, p, 3)
    return jax.nn.relu(out + x)


def bottleneck_ref_mixed(x, p):
    """Reference mirroring the kernel's precision: BN scale folded into the f32
    weights before the bf16 cast, bf16 conv operands, f32 accumulation and
    bias/ReLU epilogues, bf16-rounded residual."""
    dn = ("NCHW", "OIHW", "NCHW")
    bf = jnp.bfloat16
    rs = lambda a: a[None, :, None, None]
    s1, b1 = _fold_scale_bias(p, 1)
    s2, b2 = _fold_scale_bias(p, 2)
    s3, b3 = _fold_scale_bias(p, 3)
    w1 = p["conv1_w"] * s1[:, None, None, None]
    w2 = p["conv2_w"] * s2[:, None, None, None]
    w3 = p["conv3_w"] * s3[:, None, None, None]
    xb = x.astype(bf)
    out = lax.conv_general_dilated(xb, w1.astype(bf), (1, 1), "VALID",
                                   dimension_numbers=dn, preferred_element_type=jnp.float32)
    out = jax.nn.relu(out + rs(b1))
    out = lax.conv_general_dilated(out.astype(bf), w2.astype(bf), (1, 1),
                                   ((1, 1), (1, 1)), dimension_numbers=dn,
                                   preferred_element_type=jnp.float32)
    out = jax.nn.relu(out + rs(b2))
    out = lax.conv_general_dilated(out.astype(bf), w3.astype(bf), (1, 1), "VALID",
                                   dimension_numbers=dn, preferred_element_type=jnp.float32)
    out = out + rs(b3)
    return jax.nn.relu(out + xb.astype(jnp.float32))


if __name__ == "__main__":
    # downsample=None ⇒ stride=1 and inplanes == planes * expansion
    N, inplanes, planes, H, W = 2, 16, 4, 16, 16

    key = jax.random.PRNGKey(0)
    kx, kp_key = jax.random.split(key)
    x = jax.random.normal(kx, (N, inplanes, H, W), jnp.float32)

    params = make_params(inplanes, planes, kp_key)
    kparams = to_kernel_params(params)

    out = bottleneck_pallas(x, kparams)
    out = jax.block_until_ready(out)
    out_f32 = out.astype(jnp.float32)

    ref_mixed = bottleneck_ref_mixed(x, params)   # same precision path as kernel
    ref_full = bottleneck_ref_f32(x, params)      # pure f32 (loose sanity check)
    assert out.shape == ref_full.shape == (N, planes * 4, H, W)
    # bf16 output rounding dominates the kernel-vs-ref_mixed difference.
    assert jnp.allclose(out_f32, ref_mixed, atol=2e-2, rtol=2e-2), (
        float(jnp.max(jnp.abs(out_f32 - ref_mixed))))
    assert jnp.allclose(out_f32, ref_full, atol=1e-1, rtol=1e-1), (
        float(jnp.max(jnp.abs(out_f32 - ref_full))))

    print("KERNEL_OK")
</pallas_src>

<mosaic_0001>
module attributes {stable_mosaic.version = 11 : i64} {
  func.func @bottleneck_kernel(%arg0: i32, %arg1: memref<1x16x16x128xbf16, #tpu.memory_space<vmem>>, %arg2: memref<128x128xbf16, #tpu.memory_space<vmem>>, %arg3: memref<1x128xf32, #tpu.memory_space<vmem>>, %arg4: memref<1152x128xbf16, #tpu.memory_space<vmem>>, %arg5: memref<1x128xf32, #tpu.memory_space<vmem>>, %arg6: memref<128x128xbf16, #tpu.memory_space<vmem>>, %arg7: memref<1x128xf32, #tpu.memory_space<vmem>>, %arg8: memref<1x16x16x128xbf16, #tpu.memory_space<vmem>>) attributes {dimension_semantics = [#tpu.dimension_semantics<parallel>], iteration_bounds = array<i64: 2>, scalar_prefetch = 0 : i64, scratch_operands = 0 : i64, tpu.core_type = #tpu.core_type<tc>, window_params = [{transform_indices = @transform_0, window_bounds = array<i64: 1, 16, 16, 128>}, {pipeline_mode = #tpu.pipeline_mode<synchronous>, transform_indices = @transform_1, window_bounds = array<i64: 128, 128>}, {pipeline_mode = #tpu.pipeline_mode<synchronous>, transform_indices = @transform_2, window_bounds = array<i64: 1, 128>}, {pipeline_mode = #tpu.pipeline_mode<synchronous>, transform_indices = @transform_3, window_bounds = array<i64: 1152, 128>}, {pipeline_mode = #tpu.pipeline_mode<synchronous>, transform_indices = @transform_4, window_bounds = array<i64: 1, 128>}, {pipeline_mode = #tpu.pipeline_mode<synchronous>, transform_indices = @transform_5, window_bounds = array<i64: 128, 128>}, {pipeline_mode = #tpu.pipeline_mode<synchronous>, transform_indices = @transform_6, window_bounds = array<i64: 1, 128>}, {transform_indices = @transform_7, window_bounds = array<i64: 1, 16, 16, 128>}]} {
    %c0 = arith.constant 0 : index
    %c0_0 = arith.constant 0 : index
    %c0_1 = arith.constant 0 : index
    %c0_2 = arith.constant 0 : index
    %0 = vector.load %arg1[%c0, %c0_0, %c0_1, %c0_2] : memref<1x16x16x128xbf16, #tpu.memory_space<vmem>>, vector<1x16x16x128xbf16>
    %1 = vector.shape_cast %0 : vector<1x16x16x128xbf16> to vector<16x16x128xbf16>
    %2 = vector.shape_cast %1 : vector<16x16x128xbf16> to vector<256x128xbf16>
    %c0_3 = arith.constant 0 : index
    %c0_4 = arith.constant 0 : index
    %3 = vector.load %arg2[%c0_3, %c0_4] : memref<128x128xbf16, #tpu.memory_space<vmem>>, vector<128x128xbf16>
    %cst = arith.constant dense<0.000000e+00> : vector<256x128xf32>
    %4 = tpu.matmul %2, %3, %cst {dimension_numbers = #tpu.dot_dimension_numbers<[1], [0], [0], [1], [0, 0, 1, 1], [], []>} : vector<256x128xbf16>, vector<128x128xbf16>, vector<256x128xf32> -> vector<256x128xf32>
    %c0_5 = arith.constant 0 : index
    %c0_6 = arith.constant 0 : index
    %5 = vector.load %arg3[%c0_5, %c0_6] : memref<1x128xf32, #tpu.memory_space<vmem>>, vector<1x128xf32>
    %6 = vector.broadcast %5 : vector<1x128xf32> to vector<256x128xf32>
    %7 = arith.addf %4, %6 : vector<256x128xf32>
    %cst_7 = arith.constant 0.000000e+00 : f32
    %8 = vector.broadcast %cst_7 : f32 to vector<256x128xf32>
    %9 = arith.maximumf %7, %8 : vector<256x128xf32>
    %10 = tpu.iota {dimensions = array<i32: 0>} : vector<256x1xi32>
    %11 = tpu.iota {dimensions = array<i32: 1>} : vector<16x16x1xi32>
    %12 = vector.shape_cast %11 : vector<16x16x1xi32> to vector<256x1xi32>
    %c1_i32 = arith.constant 1 : i32
    %13 = vector.broadcast %c1_i32 : i32 to vector<256x1xi32>
    %14 = arith.cmpi sge, %12, %13 : vector<256x1xi32>
    %c15_i32 = arith.constant 15 : i32
    %15 = vector.broadcast %c15_i32 : i32 to vector<256x1xi32>
    %16 = arith.cmpi slt, %12, %15 : vector<256x1xi32>
    %c16_i32 = arith.constant 16 : i32
    %17 = vector.broadcast %c16_i32 : i32 to vector<256x1xi32>
    %18 = arith.cmpi sge, %10, %17 : vector<256x1xi32>
    %c240_i32 = arith.constant 240 : i32
    %19 = vector.broadcast %c240_i32 : i32 to vector<256x1xi32>
    %20 = arith.cmpi slt, %10, %19 : vector<256x1xi32>
    %c17_i32 = arith.constant 17 : i32
    %21 = tpu.dynamic_rotate %9 by %c17_i32 dim 0 : vector<256x128xf32>, i32 -> vector<256x128xf32>
    %22 = arith.truncf %21 : vector<256x128xf32> to vector<256x128xbf16>
    %23 = arith.andi %18, %14 : vector<256x1xi1>
    %cst_8 = arith.constant 0.000000e+00 : f32
    %24 = arith.truncf %cst_8 : f32 to bf16
    %25 = vector.shape_cast %23 : vector<256x1xi1> to vector<256x1xi1>
    %26 = vector.broadcast %25 : vector<256x1xi1> to vector<256x128xi1>
    %27 = vector.broadcast %24 : bf16 to vector<256x128xbf16>
    %28 = arith.select %26, %22, %27 : vector<256x128xi1>, vector<256x128xbf16>
    %c16_i32_9 = arith.constant 16 : i32
    %29 = tpu.dynamic_rotate %9 by %c16_i32_9 dim 0 : vector<256x128xf32>, i32 -> vector<256x128xf32>
    %30 = arith.truncf %29 : vector<256x128xf32> to vector<256x128xbf16>
    %cst_10 = arith.constant 0.000000e+00 : f32
    %31 = arith.truncf %cst_10 : f32 to bf16
    %32 = vector.shape_cast %18 : vector<256x1xi1> to vector<256x1xi1>
    %33 = vector.broadcast %32 : vector<256x1xi1> to vector<256x128xi1>
    %34 = vector.broadcast %31 : bf16 to vector<256x128xbf16>
    %35 = arith.select %33, %30, %34 : vector<256x128xi1>, vector<256x128xbf16>
    %36 = tpu.concatenate %28, %35 in 1 : vector<256x128xbf16>, vector<256x128xbf16> -> vector<256x256xbf16>
    %c0_11 = arith.constant 0 : index
    %c0_12 = arith.constant 0 : index
    %37 = vector.load %arg4[%c0_11, %c0_12] : memref<1152x128xbf16, #tpu.memory_space<vmem>>, vector<256x128xbf16>
    %cst_13 = arith.constant dense<0.000000e+00> : vector<256x128xf32>
    %38 = tpu.matmul %36, %37, %cst_13 {dimension_numbers = #tpu.dot_dimension_numbers<[1], [0], [0], [1], [0, 0, 1, 1], [], []>} : vector<256x256xbf16>, vector<256x128xbf16>, vector<256x128xf32> -> vector<256x128xf32>
    %c15_i32_14 = arith.constant 15 : i32
    %39 = tpu.dynamic_rotate %9 by %c15_i32_14 dim 0 : vector<256x128xf32>, i32 -> vector<256x128xf32>
    %40 = arith.truncf %39 : vector<256x128xf32> to vector<256x128xbf16>
    %41 = arith.andi %18, %16 : vector<256x1xi1>
    %cst_15 = arith.constant 0.000000e+00 : f32
    %42 = arith.truncf %cst_15 : f32 to bf16
    %43 = vector.shape_cast %41 : vector<256x1xi1> to vector<256x1xi1>
    %44 = vector.broadcast %43 : vector<256x1xi1> to vector<256x128xi1>
    %45 = vector.broadcast %42 : bf16 to vector<256x128xbf16>
    %46 = arith.select %44, %40, %45 : vector<256x128xi1>, vector<256x128xbf16>
    %c1_i32_16 = arith.constant 1 : i32
    %47 = tpu.dynamic_rotate %9 by %c1_i32_16 dim 0 : vector<256x128xf32>, i32 -> vector<256x128xf32>
    %48 = arith.truncf %47 : vector<256x128xf32> to vector<256x128xbf16>
    %cst_17 = arith.constant 0.000000e+00 : f32
    %49 = arith.truncf %cst_17 : f32 to bf16
    %50 = vector.shape_cast %14 : vector<256x1xi1> to vector<256x1xi1>
    %51 = vector.broadcast %50 : vector<256x1xi1> to vector<256x128xi1>
    %52 = vector.broadcast %49 : bf16 to vector<256x128xbf16>
    %53 = arith.select %51, %48, %52 : vector<256x128xi1>, vector<256x128xbf16>
    %54 = tpu.concatenate %46, %53 in 1 : vector<256x128xbf16>, vector<256x128xbf16> -> vector<256x256xbf16>
    %c256 = arith.constant 256 : index
    %c0_18 = arith.constant 0 : index
    %55 = vector.load %arg4[%c256, %c0_18] : memref<1152x128xbf16, #tpu.memory_space<vmem>>, vector<256x128xbf16>
    %cst_19 = arith.constant dense<0.000000e+00> : vector<256x128xf32>
    %56 = tpu.matmul %54, %55, %cst_19 {dimension_numbers = #tpu.dot_dimension_numbers<[1], [0], [0], [1], [0, 0, 1, 1], [], []>} : vector<256x256xbf16>, vector<256x128xbf16>, vector<256x128xf32> -> vector<256x128xf32>
    %57 = arith.addf %38, %56 : vector<256x128xf32>
    %58 = arith.truncf %9 : vector<256x128xf32> to vector<256x128xbf16>
    %c255_i32 = arith.constant 255 : i32
    %59 = tpu.dynamic_rotate %9 by %c255_i32 dim 0 : vector<256x128xf32>, i32 -> vector<256x128xf32>
    %60 = arith.truncf %59 : vector<256x128xf32> to vector<256x128xbf16>
    %cst_20 = arith.constant 0.000000e+00 : f32
    %61 = arith.truncf %cst_20 : f32 to bf16
    %62 = vector.shape_cast %16 : vector<256x1xi1> to vector<256x1xi1>
    %63 = vector.broadcast %62 : vector<256x1xi1> to vector<256x128xi1>
    %64 = vector.broadcast %61 : bf16 to vector<256x128xbf16>
    %65 = arith.select %63, %60, %64 : vector<256x128xi1>, vector<256x128xbf16>
    %66 = tpu.concatenate %58, %65 in 1 : vector<256x128xbf16>, vector<256x128xbf16> -> vector<256x256xbf16>
    %c512 = arith.constant 512 : index
    %c0_21 = arith.constant 0 : index
    %67 = vector.load %arg4[%c512, %c0_21] : memref<1152x128xbf16, #tpu.memory_space<vmem>>, vector<256x128xbf16>
    %cst_22 = arith.constant dense<0.000000e+00> : vector<256x128xf32>
    %68 = tpu.matmul %66, %67, %cst_22 {dimension_numbers = #tpu.dot_dimension_numbers<[1], [0], [0], [1], [0, 0, 1, 1], [], []>} : vector<256x256xbf16>, vector<256x128xbf16>, vector<256x128xf32> -> vector<256x128xf32>
    %69 = arith.addf %57, %68 : vector<256x128xf32>
    %c241_i32 = arith.constant 241 : i32
    %70 = tpu.dynamic_rotate %9 by %c241_i32 dim 0 : vector<256x128xf32>, i32 -> vector<256x128xf32>
    %71 = arith.truncf %70 : vector<256x128xf32> to vector<256x128xbf16>
    %72 = arith.andi %20, %14 : vector<256x1xi1>
    %cst_23 = arith.constant 0.000000e+00 : f32
    %73 = arith.truncf %cst_23 : f32 to bf16
    %74 = vector.shape_cast %72 : vector<256x1xi1> to vector<256x1xi1>
    %75 = vector.broadcast %74 : vector<256x1xi1> to vector<256x128xi1>
    %76 = vector.broadcast %73 : bf16 to vector<256x128xbf16>
    %77 = arith.select %75, %71, %76 : vector<256x128xi1>, vector<256x128xbf16>
    %c240_i32_24 = arith.constant 240 : i32
    %78 = tpu.dynamic_rotate %9 by %c240_i32_24 dim 0 : vector<256x128xf32>, i32 -> vector<256x128xf32>
    %79 = arith.truncf %78 : vector<256x128xf32> to vector<256x128xbf16>
    %cst_25 = arith.constant 0.000000e+00 : f32
    %80 = arith.truncf %cst_25 : f32 to bf16
    %81 = vector.shape_cast %20 : vector<256x1xi1> to vector<256x1xi1>
    %82 = vector.broadcast %81 : vector<256x1xi1> to vector<256x128xi1>
    %83 = vector.broadcast %80 : bf16 to vector<256x128xbf16>
    %84 = arith.select %82, %79, %83 : vector<256x128xi1>, vector<256x128xbf16>
    %85 = tpu.concatenate %77, %84 in 1 : vector<256x128xbf16>, vector<256x128xbf16> -> vector<256x256xbf16>
    %c768 = arith.constant 768 : index
    %c0_26 = arith.constant 0 : index
    %86 = vector.load %arg4[%c768, %c0_26] : memref<1152x128xbf16, #tpu.memory_space<vmem>>, vector<256x128xbf16>
    %cst_27 = arith.constant dense<0.000000e+00> : vector<256x128xf32>
    %87 = tpu.matmul %85, %86, %cst_27 {dimension_numbers = #tpu.dot_dimension_numbers<[1], [0], [0], [1], [0, 0, 1, 1], [], []>} : vector<256x256xbf16>, vector<256x128xbf16>, vector<256x128xf32> -> vector<256x128xf32>
    %88 = arith.addf %69, %87 : vector<256x128xf32>
    %c239_i32 = arith.constant 239 : i32
    %89 = tpu.dynamic_rotate %9 by %c239_i32 dim 0 : vector<256x128xf32>, i32 -> vector<256x128xf32>
    %90 = arith.truncf %89 : vector<256x128xf32> to vector<256x128xbf16>
    %91 = arith.andi %20, %16 : vector<256x1xi1>
    %cst_28 = arith.constant 0.000000e+00 : f32
    %92 = arith.truncf %cst_28 : f32 to bf16
    %93 = vector.shape_cast %91 : vector<256x1xi1> to vector<256x1xi1>
    %94 = vector.broadcast %93 : vector<256x1xi1> to vector<256x128xi1>
    %95 = vector.broadcast %92 : bf16 to vector<256x128xbf16>
    %96 = arith.select %94, %90, %95 : vector<256x128xi1>, vector<256x128xbf16>
    %c1024 = arith.constant 1024 : index
    %c0_29 = arith.constant 0 : index
    %97 = vector.load %arg4[%c1024, %c0_29] : memref<1152x128xbf16, #tpu.memory_space<vmem>>, vector<128x128xbf16>
    %cst_30 = arith.constant dense<0.000000e+00> : vector<256x128xf32>
    %98 = tpu.matmul %96, %97, %cst_30 {dimension_numbers = #tpu.dot_dimension_numbers<[1], [0], [0], [1], [0, 0, 1, 1], [], []>} : vector<256x128xbf16>, vector<128x128xbf16>, vector<256x128xf32> -> vector<256x128xf32>
    %99 = arith.addf %88, %98 : vector<256x128xf32>
    %c0_31 = arith.constant 0 : index
    %c0_32 = arith.constant 0 : index
    %100 = vector.load %arg5[%c0_31, %c0_32] : memref<1x128xf32, #tpu.memory_space<vmem>>, vector<1x128xf32>
    %101 = vector.broadcast %100 : vector<1x128xf32> to vector<256x128xf32>
    %102 = arith.addf %99, %101 : vector<256x128xf32>
    %cst_33 = arith.constant 0.000000e+00 : f32
    %103 = vector.broadcast %cst_33 : f32 to vector<256x128xf32>
    %104 = arith.maximumf %102, %103 : vector<256x128xf32>
    %105 = arith.truncf %104 : vector<256x128xf32> to vector<256x128xbf16>
    %c0_34 = arith.constant 0 : index
    %c0_35 = arith.constant 0 : index
    %106 = vector.load %arg6[%c0_34, %c0_35] : memref<128x128xbf16, #tpu.memory_space<vmem>>, vector<128x128xbf16>
    %cst_36 = arith.constant dense<0.000000e+00> : vector<256x128xf32>
    %107 = tpu.matmul %105, %106, %cst_36 {dimension_numbers = #tpu.dot_dimension_numbers<[1], [0], [0], [1], [0, 0, 1, 1], [], []>} : vector<256x128xbf16>, vector<128x128xbf16>, vector<256x128xf32> -> vector<256x128xf32>
    %c0_37 = arith.constant 0 : index
    %c0_38 = arith.constant 0 : index
    %108 = vector.load %arg7[%c0_37, %c0_38] : memref<1x128xf32, #tpu.memory_space<vmem>>, vector<1x128xf32>
    %109 = vector.broadcast %108 : vector<1x128xf32> to vector<256x128xf32>
    %110 = arith.addf %107, %109 : vector<256x128xf32>
    %c0_39 = arith.constant 0 : index
    %c0_40 = arith.constant 0 : index
    %c0_41 = arith.constant 0 : index
    %c0_42 = arith.constant 0 : index
    %111 = vector.load %arg1[%c0_39, %c0_40, %c0_41, %c0_42] : memref<1x16x16x128xbf16, #tpu.memory_space<vmem>>, vector<1x16x16x128xbf16>
    %112 = vector.shape_cast %111 : vector<1x16x16x128xbf16> to vector<16x16x128xbf16>
    %113 = vector.shape_cast %112 : vector<16x16x128xbf16> to vector<256x128xbf16>
    %114 = arith.extf %113 : vector<256x128xbf16> to vector<256x128xf32>
    %115 = arith.addf %110, %114 : vector<256x128xf32>
    %cst_43 = arith.constant 0.000000e+00 : f32
    %116 = vector.broadcast %cst_43 : f32 to vector<256x128xf32>
    %117 = arith.maximumf %115, %116 : vector<256x128xf32>
    %118 = vector.shape_cast %117 : vector<256x128xf32> to vector<16x16x128xf32>
    %119 = arith.truncf %118 : vector<16x16x128xf32> to vector<16x16x128xbf16>
    %c0_44 = arith.constant 0 : index
    %c0_45 = arith.constant 0 : index
    %c0_46 = arith.constant 0 : index
    %c0_47 = arith.constant 0 : index
    %120 = vector.load %arg8[%c0_44, %c0_45, %c0_46, %c0_47] : memref<1x16x16x128xbf16, #tpu.memory_space<vmem>>, vector<1x16x16x128xbf16>
    %121 = vector.shape_cast %120 : vector<1x16x16x128xbf16> to vector<16x16x128xbf16>
    %122 = vector.shape_cast %119 : vector<16x16x128xbf16> to vector<1x16x16x128xbf16>
    tpu.vector_store %arg8[%c0_44, %c0_45, %c0_46, %c0_47], %122 {strides = array<i32>} : memref<1x16x16x128xbf16, #tpu.memory_space<vmem>>, vector<1x16x16x128xbf16>,
    return
  }
  func.func @transform_0(%arg0: i32) -> (i32, i32, i32, i32) {
    %c0_i32 = arith.constant 0 : i32
    %c0_i32_0 = arith.constant 0 : i32
    %c0_i32_1 = arith.constant 0 : i32
    %c0_i32_2 = arith.constant 0 : i32
    return %arg0, %c0_i32, %c0_i32_0, %c0_i32_1 : i32, i32, i32, i32
  }
  func.func @transform_1(%arg0: i32) -> (i32, i32) {
    %c0_i32 = arith.constant 0 : i32
    %c0_i32_0 = arith.constant 0 : i32
    %c0_i32_1 = arith.constant 0 : i32
    return %c0_i32, %c0_i32_0 : i32, i32
  }
  func.func @transform_2(%arg0: i32) -> (i32, i32) {
    %c0_i32 = arith.constant 0 : i32
    %c0_i32_0 = arith.constant 0 : i32
    %c0_i32_1 = arith.constant 0 : i32
    return %c0_i32, %c0_i32_0 : i32, i32
  }
  func.func @transform_3(%arg0: i32) -> (i32, i32) {
    %c0_i32 = arith.constant 0 : i32
    %c0_i32_0 = arith.constant 0 : i32
    %c0_i32_1 = arith.constant 0 : i32
    return %c0_i32, %c0_i32_0 : i32, i32
  }
  func.func @transform_4(%arg0: i32) -> (i32, i32) {
    %c0_i32 = arith.constant 0 : i32
    %c0_i32_0 = arith.constant 0 : i32
    %c0_i32_1 = arith.constant 0 : i32
    return %c0_i32, %c0_i32_0 : i32, i32
  }
  func.func @transform_5(%arg0: i32) -> (i32, i32) {
    %c0_i32 = arith.constant 0 : i32
    %c0_i32_0 = arith.constant 0 : i32
    %c0_i32_1 = arith.constant 0 : i32
    return %c0_i32, %c0_i32_0 : i32, i32
  }
  func.func @transform_6(%arg0: i32) -> (i32, i32) {
    %c0_i32 = arith.constant 0 : i32
    %c0_i32_0 = arith.constant 0 : i32
    %c0_i32_1 = arith.constant 0 : i32
    return %c0_i32, %c0_i32_0 : i32, i32
  }
  func.func @transform_7(%arg0: i32) -> (i32, i32, i32, i32) {
    %c0_i32 = arith.constant 0 : i32
    %c0_i32_0 = arith.constant 0 : i32
    %c0_i32_1 = arith.constant 0 : i32
    %c0_i32_2 = arith.constant 0 : i32
    return %arg0, %c0_i32, %c0_i32_0, %c0_i32_1 : i32, i32, i32, i32
  }
}

</mosaic_0001>

<llo_original>
// kernel: tpu_custom_call.1
$region0: #{tpu_custom_call.1}
  #allocation0 [shape = 'u32[]', space=smem, size = 0x4, offset = 0x4, fixed_abs, tag = 'smem constant byte address 0x4 - core index']
  #allocation1 [shape = 'u32[144,128]{1,0:T(1,128)}', space=vmem, size = 0x12000, scoped, tag = 'internal scratch']
  %s0 = inlined_call_operand.hbm [shape: bf16[2,16,16,128], index: 0, kind: input, shape index: {}]
  %s1 = inlined_call_operand.hbm [shape: bf16[128,128], index: 1, kind: input, shape index: {}]
  %s2 = inlined_call_operand.vmem [shape: f32[1,128], index: 2, kind: input, shape index: {}]
  %s3 = inlined_call_operand.hbm [shape: bf16[1152,128], index: 3, kind: input, shape index: {}]
  %s4 = inlined_call_operand.vmem [shape: f32[1,128], index: 4, kind: input, shape index: {}]
  %s5 = inlined_call_operand.hbm [shape: bf16[128,128], index: 5, kind: input, shape index: {}]
  %s6 = inlined_call_operand.vmem [shape: f32[1,128], index: 6, kind: input, shape index: {}]
  %s7 = inlined_call_operand.hbm [shape: bf16[2,16,16,128], index: 7, kind: output, shape index: {}]
  %s8 = sld [smem:[#allocation0]]
  $region77: #{tpu_custom_call.1} parent=0
    _
  %s10 = ssub.s32 1, %s8
  %s11 = scalar_select 0, %s10, %s8
  $region1: #{tpu_custom_call.1} parent=0
    #allocation2 [shape = 'u8[131072]{0}', space=vmem, size = 0x20000, scoped, tag = 'input window, operand 0']
    #allocation3 [shape = 's32[2]{0}', space=sflag, size = 0x8, scoped, tag = 'scoped memory for tpu_custom_call.1']
    #allocation4 [shape = 's32[2]{0}', space=sflag, size = 0x8, scoped, tag = 'scoped memory for tpu_custom_call.1']
    #allocation5 [shape = 'u8[32768]{0}', space=vmem, size = 0x8000, scoped, tag = 'input window, operand 1, single buffered']
    #allocation6 [shape = 's32[1]{0}', space=sflag, size = 0x4, scoped, tag = 'scoped memory for tpu_custom_call.1']
    #allocation7 [shape = 'u8[294912]{0}', space=vmem, size = 0x48000, scoped, tag = 'input window, operand 3, single buffered']
    #allocation8 [shape = 'u8[32768]{0}', space=vmem, size = 0x8000, scoped, tag = 'input window, operand 5, single buffered']
    #allocation9 [shape = 's32[1]{0}', space=sflag, size = 0x4, scoped, tag = 'scoped memory for tpu_custom_call.1']
    #allocation10 [shape = 'u8[131072]{0}', space=vmem, size = 0x20000, scoped, tag = 'output window, operand 0']
    %12 = vsyncpa [#allocation3], 0
    %s13 = scalar_lea.sflag [#allocation3], 1
    %14 = vsyncpa %s13, 0
    %15 = vsyncpa [#allocation6], 0
    %16 = vsyncpa [#allocation9], 0
    %17 = vsyncpa [#allocation4], 0
    %s18 = scalar_lea.sflag [#allocation4], 1
    %19 = vsyncpa %s18, 0
    loop: start=0, step=1, limit=4
    $region2: #{tpu_custom_call.1} parent=1 // loop_pre_header
      _
    $region3: #{tpu_custom_call.1} parent=1 // loop_header
      %s21 = sphi 0, %s25
      %p22 = scmp.ge.s32.totalorder %s21, 4
      %s31 = sphi 0, %s33
      %s34 = sphi 0, %s31
      %s35 = sphi 0, %s34
      %s51 = sphi 0, %s35
      %s55 = sphi 0, %s55
      %s57 = sphi 0, %s55
      %s58 = sphi 0, %s57
      %s72 = sphi 0, %s58
      %s76 = sphi 0, %s76
      %s78 = sphi 0, %s76
      %s79 = sphi 0, %s78
      %s93 = sphi 0, %s79
      %s97 = sphi 0, %s97
      %s99 = sphi 0, %s97
      %s100 = sphi 0, %s99
      %s114 = sphi 0, %s100
      %s118 = sphi 0, %s118
      %s120 = sphi 0, %s118
      %s121 = sphi 0, %s120
      %s135 = sphi 0, %s121
      %s139 = sphi 0, %s139
      %s141 = sphi 0, %s139
      %s142 = sphi 0, %s141
      %s156 = sphi 0, %s142
      %s160 = sphi 0, %s160
      %s162 = sphi 0, %s160
      %s163 = sphi 0, %s162
      %s177 = sphi 0, %s163
      %s183 = sphi 0, %s185
      %s186 = sphi 0, %s183
      %s187 = sphi 0, %s186
      %s203 = sphi 0, %s187
    $region4: #{tpu_custom_call.1} parent=1 // loop_header_branch
      %24 = sbr.rel (%p22) target = $region8
    $region5: #{tpu_custom_call.1} parent=1 // loop_body
      %s26 = ssub.s32 %s21, 1
      %s27 = ssub.s32 %s21, 2
      %s28 = sadd.s32 %s21, 1
      %s29 = ssub.s32 %s21, %s28
      %p30 = scmp.eq.s32.totalorder %s29, 0
      %s32 = sadd.s32 %s31, 1
      %s33 = scalar_select %p30, %s31, %s32
      %p36 = pneg %p30
      %p37 = scmp.eq.s32.totalorder %s21, 1
      %p38 = por %p36, %p37
      %p39 = scmp.ne.s32.totalorder %s31, %s34
      %p40 = scmp.eq.s32.totalorder %s21, 0
      %p41 = por %p39, %p40
      %p42 = scmp.ne.s32.totalorder %s31, %s34
      %p43 = scmp.eq.s32.totalorder %s26, 1
      %p44 = por %p42, %p43
      %p45 = scmp.ne.s32.totalorder %s34, %s35
      %p46 = scmp.eq.s32.totalorder %s26, 0
      %p47 = por %p45, %p46
      %p48 = scmp.ne.s32.totalorder %s34, %s35
      %p49 = scmp.eq.s32.totalorder %s27, 1
      %p50 = por %p48, %p49
      %p52 = scmp.ne.s32.totalorder %s35, %s51
      %p53 = scmp.eq.s32.totalorder %s27, 0
      %p54 = por %p52, %p53
      %s56 = sadd.s32 %s55, 1
      %p59 = scmp.eq.s32.totalorder %s21, 1
      %p60 = scmp.ne.s32.totalorder %s55, %s57
      %p61 = scmp.eq.s32.totalorder %s21, 0
      %p62 = por %p60, %p61
      %p63 = scmp.ne.s32.totalorder %s55, %s57
      %p64 = scmp.eq.s32.totalorder %s26, 1
      %p65 = por %p63, %p64
      %p66 = scmp.ne.s32.totalorder %s57, %s58
      %p67 = scmp.eq.s32.totalorder %s26, 0
      %p68 = por %p66, %p67
      %p69 = scmp.ne.s32.totalorder %s57, %s58
      %p70 = scmp.eq.s32.totalorder %s27, 1
      %p71 = por %p69, %p70
      %p73 = scmp.ne.s32.totalorder %s58, %s72
      %p74 = scmp.eq.s32.totalorder %s27, 0
      %p75 = por %p73, %p74
      %s77 = sadd.s32 %s76, 1
      %p80 = scmp.eq.s32.totalorder %s21, 1
      %p81 = scmp.ne.s32.totalorder %s76, %s78
      %p82 = scmp.eq.s32.totalorder %s21, 0
      %p83 = por %p81, %p82
      %p84 = scmp.ne.s32.totalorder %s76, %s78
      %p85 = scmp.eq.s32.totalorder %s26, 1
      %p86 = por %p84, %p85
      %p87 = scmp.ne.s32.totalorder %s78, %s79
      %p88 = scmp.eq.s32.totalorder %s26, 0
      %p89 = por %p87, %p88
      %p90 = scmp.ne.s32.totalorder %s78, %s79
      %p91 = scmp.eq.s32.totalorder %s27, 1
      %p92 = por %p90, %p91
      %p94 = scmp.ne.s32.totalorder %s79, %s93
      %p95 = scmp.eq.s32.totalorder %s27, 0
      %p96 = por %p94, %p95
      %s98 = sadd.s32 %s97, 1
      %p101 = scmp.eq.s32.totalorder %s21, 1
      %p102 = scmp.ne.s32.totalorder %s97, %s99
      %p103 = scmp.eq.s32.totalorder %s21, 0
      %p104 = por %p102, %p103
      %p105 = scmp.ne.s32.totalorder %s97, %s99
      %p106 = scmp.eq.s32.totalorder %s26, 1
      %p107 = por %p105, %p106
      %p108 = scmp.ne.s32.totalorder %s99, %s100
      %p109 = scmp.eq.s32.totalorder %s26, 0
      %p110 = por %p108, %p109
      %p111 = scmp.ne.s32.totalorder %s99, %s100
      %p112 = scmp.eq.s32.totalorder %s27, 1
      %p113 = por %p111, %p112
      %p115 = scmp.ne.s32.totalorder %s100, %s114
      %p116 = scmp.eq.s32.totalorder %s27, 0
      %p117 = por %p115, %p116
      %s119 = sadd.s32 %s118, 1
      %p122 = scmp.eq.s32.totalorder %s21, 1
      %p123 = scmp.ne.s32.totalorder %s118, %s120
      %p124 = scmp.eq.s32.totalorder %s21, 0
      %p125 = por %p123, %p124
      %p126 = scmp.ne.s32.totalorder %s118, %s120
      %p127 = scmp.eq.s32.totalorder %s26, 1
      %p128 = por %p126, %p127
      %p129 = scmp.ne.s32.totalorder %s120, %s121
      %p130 = scmp.eq.s32.totalorder %s26, 0
      %p131 = por %p129, %p130
      %p132 = scmp.ne.s32.totalorder %s120, %s121
      %p133 = scmp.eq.s32.totalorder %s27, 1
      %p134 = por %p132, %p133
      %p136 = scmp.ne.s32.totalorder %s121, %s135
      %p137 = scmp.eq.s32.totalorder %s27, 0
      %p138 = por %p136, %p137
      %s140 = sadd.s32 %s139, 1
      %p143 = scmp.eq.s32.totalorder %s21, 1
      %p144 = scmp.ne.s32.totalorder %s139, %s141
      %p145 = scmp.eq.s32.totalorder %s21, 0
      %p146 = por %p144, %p145
      %p147 = scmp.ne.s32.totalorder %s139, %s141
      %p148 = scmp.eq.s32.totalorder %s26, 1
      %p149 = por %p147, %p148
      %p150 = scmp.ne.s32.totalorder %s141, %s142
      %p151 = scmp.eq.s32.totalorder %s26, 0
      %p152 = por %p150, %p151
      %p153 = scmp.ne.s32.totalorder %s141, %s142
      %p154 = scmp.eq.s32.totalorder %s27, 1
      %p155 = por %p153, %p154
      %p157 = scmp.ne.s32.totalorder %s142, %s156
      %p158 = scmp.eq.s32.totalorder %s27, 0
      %p159 = por %p157, %p158
      %s161 = sadd.s32 %s160, 1
      %p164 = scmp.eq.s32.totalorder %s21, 1
      %p165 = scmp.ne.s32.totalorder %s160, %s162
      %p166 = scmp.eq.s32.totalorder %s21, 0
      %p167 = por %p165, %p166
      %p168 = scmp.ne.s32.totalorder %s160, %s162
      %p169 = scmp.eq.s32.totalorder %s26, 1
      %p170 = por %p168, %p169
      %p171 = scmp.ne.s32.totalorder %s162, %s163
      %p172 = scmp.eq.s32.totalorder %s26, 0
      %p173 = por %p171, %p172
      %p174 = scmp.ne.s32.totalorder %s162, %s163
      %p175 = scmp.eq.s32.totalorder %s27, 1
      %p176 = por %p174, %p175
      %p178 = scmp.ne.s32.totalorder %s163, %s177
      %p179 = scmp.eq.s32.totalorder %s27, 0
      %p180 = por %p178, %p179
      %s181 = ssub.s32 %s21, %s28
      %p182 = scmp.eq.s32.totalorder %s181, 0
      %s184 = sadd.s32 %s183, 1
      %s185 = scalar_select %p182, %s183, %s184
      %p188 = pneg %p182
      %p189 = scmp.eq.s32.totalorder %s21, 1
      %p190 = por %p188, %p189
      %p191 = scmp.ne.s32.totalorder %s183, %s186
      %p192 = scmp.eq.s32.totalorder %s21, 0
      %p193 = por %p191, %p192
      %p194 = scmp.ne.s32.totalorder %s183, %s186
      %p195 = scmp.eq.s32.totalorder %s26, 1
      %p196 = por %p194, %p195
      %p197 = scmp.ne.s32.totalorder %s186, %s187
      %p198 = scmp.eq.s32.totalorder %s26, 0
      %p199 = por %p197, %p198
      %p200 = scmp.ne.s32.totalorder %s186, %s187
      %p201 = scmp.eq.s32.totalorder %s27, 1
      %p202 = por %p200, %p201
      %p204 = scmp.ne.s32.totalorder %s187, %s203
      %p205 = scmp.eq.s32.totalorder %s27, 0
      %p206 = por %p204, %p205
      %p207 = scmp.le.s32.totalorder 1, %s21
      %p208 = scmp.lt.s32.totalorder %s21, 3
      %p209 = pnand %p207, %p208
      %p210 = pneg %p209
      // Predicated region
      $region9: #{tpu_custom_call.1} parent=5 // pred_check
        _
      $region10: #{tpu_custom_call.1} parent=5 // pred_check_branch
        %212 = sbr.rel (%p209) target = $region12
      $region11: #{tpu_custom_call.1} parent=5 // pred_region
        %s213 = ssub.s32 %s21, 1
        // Predicated region
        $region13: #{tpu_custom_call.1} parent=11 // pred_check
          %p214 = pneg %p68
        $region14: #{tpu_custom_call.1} parent=11 // pred_check_branch
          %216 = sbr.rel (%p214) target = $region16
        $region15: #{tpu_custom_call.1} parent=11 // pred_region
          %s218 = ssub.s32 1024, 1024
          %219 = vsyncadd [#allocation6], %s218
          %s220 = sshll.u32 [#allocation5], 4
          %s221 = int_to_ptr.vmem [resolvable:$true] %s220
          %226 = dma.hbm_to_vmem [thread:$0]  %s1, 1024, %s221, [#allocation6], 64, 64, 4
        $region16: #{tpu_custom_call.1} parent=11 // pred_fallthru
          _
        // Predicated region
        $region17: #{tpu_custom_call.1} parent=11 // pred_check
          %p227 = pneg %p89
        $region18: #{tpu_custom_call.1} parent=11 // pred_check_branch
          %229 = sbr.rel (%p227) target = $region20
        $region19: #{tpu_custom_call.1} parent=11 // pred_region
          _
        $region20: #{tpu_custom_call.1} parent=11 // pred_fallthru
          _
        // Predicated region
        $region21: #{tpu_custom_call.1} parent=11 // pred_check
          %p230 = pneg %p110
        $region22: #{tpu_custom_call.1} parent=11 // pred_check_branch
          %232 = sbr.rel (%p230) target = $region24
        $region23: #{tpu_custom_call.1} parent=11 // pred_region
          %s234 = ssub.s32 9216, 9216
          %235 = vsyncadd [#allocation6], %s234
          %s236 = sshll.u32 [#allocation7], 4
          %s237 = int_to_ptr.vmem [resolvable:$true] %s236
          %242 = dma.hbm_to_vmem [thread:$0]  %s3, 9216, %s237, [#allocation6], 64, 64, 4
        $region24: #{tpu_custom_call.1} parent=11 // pred_fallthru
          _
        // Predicated region
        $region25: #{tpu_custom_call.1} parent=11 // pred_check
          %p243 = pneg %p131
        $region26: #{tpu_custom_call.1} parent=11 // pred_check_branch
          %245 = sbr.rel (%p243) target = $region28
        $region27: #{tpu_custom_call.1} parent=11 // pred_region
          _
        $region28: #{tpu_custom_call.1} parent=11 // pred_fallthru
          _
        // Predicated region
        $region29: #{tpu_custom_call.1} parent=11 // pred_check
          %p246 = pneg %p152
        $region30: #{tpu_custom_call.1} parent=11 // pred_check_branch
          %248 = sbr.rel (%p246) target = $region32
        $region31: #{tpu_custom_call.1} parent=11 // pred_region
          %s250 = ssub.s32 1024, 1024
          %251 = vsyncadd [#allocation9], %s250
          %s252 = sshll.u32 [#allocation8], 4
          %s253 = int_to_ptr.vmem [resolvable:$true] %s252
          %258 = dma.hbm_to_vmem [thread:$0]  %s5, 1024, %s253, [#allocation9], 64, 64, 4
        $region32: #{tpu_custom_call.1} parent=11 // pred_fallthru
          _
        // Predicated region
        $region33: #{tpu_custom_call.1} parent=11 // pred_check
          %p259 = pneg %p173
        $region34: #{tpu_custom_call.1} parent=11 // pred_check_branch
          %261 = sbr.rel (%p259) target = $region36
        $region35: #{tpu_custom_call.1} parent=11 // pred_region
          _
        $region36: #{tpu_custom_call.1} parent=11 // pred_fallthru
          _
      $region12: #{tpu_custom_call.1} parent=5 // pred_fallthru
        _
      %p262 = scmp.lt.s32.totalorder %s21, 2
      // Predicated region
      $region37: #{tpu_custom_call.1} parent=5 // pred_check
        %p263 = pneg %p262
      $region38: #{tpu_custom_call.1} parent=5 // pred_check_branch
        %265 = sbr.rel (%p263) target = $region40
      $region39: #{tpu_custom_call.1} parent=5 // pred_region
        // Predicated region
        $region41: #{tpu_custom_call.1} parent=39 // pred_check
          %p266 = pneg %p41
        $region42: #{tpu_custom_call.1} parent=39 // pred_check_branch
          %268 = sbr.rel (%p266) target = $region44
        $region43: #{tpu_custom_call.1} parent=39 // pred_region
          %s269 = sand.u32 %s31, 1
          %s270 = scalar_lea.sflag [#allocation3], %s269
          %s271 = sand.u32 %s31, 1
          %s272 = smul.addr %s271, 128
          %s273 = scalar_lea.vmem [#allocation2], %s272
          %s275 = ssub.s32 2048, 2048
          %276 = vsyncadd %s270, %s275
          %s277 = smul.addr %s21, 32
          %s278 = smul.addr %s277, 64
          %s279 = scalar_lea.hbm %s0, %s278
          %s280 = sshll.u32 %s273, 4
          %s281 = int_to_ptr.vmem [resolvable:$true] %s280
          %286 = dma.hbm_to_vmem [thread:$0]  %s279, 2048, %s281, %s270, 64, 64, 4
        $region44: #{tpu_custom_call.1} parent=39 // pred_fallthru
          _
      $region40: #{tpu_custom_call.1} parent=5 // pred_fallthru
        _
      %p287 = scmp.le.s32.totalorder 1, %s21
      %p288 = scmp.lt.s32.totalorder %s21, 3
      %p289 = pnand %p287, %p288
      %p290 = pneg %p289
      // Predicated region
      $region45: #{tpu_custom_call.1} parent=5 // pred_check
        _
      $region46: #{tpu_custom_call.1} parent=5 // pred_check_branch
        %292 = sbr.rel (%p289) target = $region48
      $region47: #{tpu_custom_call.1} parent=5 // pred_region
        %s293 = ssub.s32 %s21, 1
        %s294 = sand.u32 %s34, 1
        %s295 = scalar_lea.sflag [#allocation3], %s294
        %s296 = sand.u32 %s34, 1
        %s297 = smul.addr %s296, 128
        %s298 = scalar_lea.vmem [#allocation2], %s297
        // Predicated region
        $region49: #{tpu_custom_call.1} parent=47 // pred_check
          %p299 = pneg %p47
        $region50: #{tpu_custom_call.1} parent=47 // pred_check_branch
          %301 = sbr.rel (%p299) target = $region52
        $region51: #{tpu_custom_call.1} parent=47 // pred_region
          %302 = dma.done %s295, 2048
        $region52: #{tpu_custom_call.1} parent=47 // pred_fallthru
          _
        // Predicated region
        $region53: #{tpu_custom_call.1} parent=47 // pred_check
          %p303 = pneg %p68
        $region54: #{tpu_custom_call.1} parent=47 // pred_check_branch
          %305 = sbr.rel (%p303) target = $region56
        $region55: #{tpu_custom_call.1} parent=47 // pred_region
          %306 = dma.done [#allocation6], 1024
        $region56: #{tpu_custom_call.1} parent=47 // pred_fallthru
          _
        // Predicated region
        $region57: #{tpu_custom_call.1} parent=47 // pred_check
          %p307 = pneg %p110
        $region58: #{tpu_custom_call.1} parent=47 // pred_check_branch
          %309 = sbr.rel (%p307) target = $region60
        $region59: #{tpu_custom_call.1} parent=47 // pred_region
          %310 = dma.done [#allocation6], 9216
        $region60: #{tpu_custom_call.1} parent=47 // pred_fallthru
          _
        // Predicated region
        $region61: #{tpu_custom_call.1} parent=47 // pred_check
          %p311 = pneg %p152
        $region62: #{tpu_custom_call.1} parent=47 // pred_check_branch
          %313 = sbr.rel (%p311) target = $region64
        $region63: #{tpu_custom_call.1} parent=47 // pred_region
          %314 = dma.done [#allocation9], 1024
        $region64: #{tpu_custom_call.1} parent=47 // pred_fallthru
          _
        %s315 = sand.u32 %s34, 1
        %s316 = scalar_lea.sflag [#allocation3], %s315
        %s317 = sand.u32 %s34, 1
        %s318 = smul.addr %s317, 128
        %s319 = scalar_lea.vmem [#allocation2], %s318
        %p320 = pneg %p47
        %p321 = pneg %p44
        %p322 = pneg %p68
        %p323 = pneg %p65
        %p324 = pneg %p89
        %p325 = pneg %p86
        %p326 = pneg %p110
        %p327 = pneg %p107
        %p328 = pneg %p131
        %p329 = pneg %p128
        %p330 = pneg %p152
        %p331 = pneg %p149
        %p332 = pneg %p173
        %p333 = pneg %p170
        %p334 = pneg %p199
        %p335 = pneg %p196
        %s336 = sand.u32 %s186, 1
        %s337 = scalar_lea.sflag [#allocation4], %s336
        %s338 = sand.u32 %s186, 1
        %s339 = smul.addr %s338, 128
        %s340 = scalar_lea.vmem [#allocation10], %s339
        %v344 = vld [vmem:[%s298] sm:$0xf]
        %v345 = vld [vmem:[%s298 + $0x4] sm:$0xf]
        %v346 = vld [vmem:[%s298 + $0x8] sm:$0xf]
        %v347 = vld [vmem:[%s298 + $0xc] sm:$0xf]
        %v348 = vld [vmem:[%s298 + $0x10] sm:$0xf]
        %v349 = vld [vmem:[%s298 + $0x14] sm:$0xf]
        %v350 = vld [vmem:[%s298 + $0x18] sm:$0xf]
        %v351 = vld [vmem:[%s298 + $0x1c] sm:$0xf]
        %v352 = vld [vmem:[%s298 + $0x20] sm:$0xf]
        %v353 = vld [vmem:[%s298 + $0x24] sm:$0xf]
        %v354 = vld [vmem:[%s298 + $0x28] sm:$0xf]
        %v355 = vld [vmem:[%s298 + $0x2c] sm:$0xf]
        %v356 = vld [vmem:[%s298 + $0x30] sm:$0xf]
        %v357 = vld [vmem:[%s298 + $0x34] sm:$0xf]
        %v358 = vld [vmem:[%s298 + $0x38] sm:$0xf]
        %v359 = vld [vmem:[%s298 + $0x3c] sm:$0xf]
        %v360 = vld [vmem:[%s298 + $0x40] sm:$0xf]
        %v361 = vld [vmem:[%s298 + $0x44] sm:$0xf]
        %v362 = vld [vmem:[%s298 + $0x48] sm:$0xf]
        %v363 = vld [vmem:[%s298 + $0x4c] sm:$0xf]
        %v364 = vld [vmem:[%s298 + $0x50] sm:$0xf]
        %v365 = vld [vmem:[%s298 + $0x54] sm:$0xf]
        %v366 = vld [vmem:[%s298 + $0x58] sm:$0xf]
        %v367 = vld [vmem:[%s298 + $0x5c] sm:$0xf]
        %v368 = vld [vmem:[%s298 + $0x60] sm:$0xf]
        %v369 = vld [vmem:[%s298 + $0x64] sm:$0xf]
        %v370 = vld [vmem:[%s298 + $0x68] sm:$0xf]
        %v371 = vld [vmem:[%s298 + $0x6c] sm:$0xf]
        %v372 = vld [vmem:[%s298 + $0x70] sm:$0xf]
        %v373 = vld [vmem:[%s298 + $0x74] sm:$0xf]
        %v374 = vld [vmem:[%s298 + $0x78] sm:$0xf]
        %v375 = vld [vmem:[%s298 + $0x7c] sm:$0xf]
        %v376 = vld [vmem:[#allocation5] sm:$0xf]
        %v377 = vld [vmem:[#allocation5 + $0x4] sm:$0xf]
        %v378 = vld [vmem:[#allocation5 + $0x8] sm:$0xf]
        %v379 = vld [vmem:[#allocation5 + $0xc] sm:$0xf]
        %v380 = vld [vmem:[#allocation5 + $0x10] sm:$0xf]
        %v381 = vld [vmem:[#allocation5 + $0x14] sm:$0xf]
        %v382 = vld [vmem:[#allocation5 + $0x18] sm:$0xf]
        %v383 = vld [vmem:[#allocation5 + $0x1c] sm:$0xf]
        %v384 = vld [vmem:[#allocation5 + $0x20] sm:$0xf]
        %v385 = vld [vmem:[#allocation5 + $0x24] sm:$0xf]
        %v386 = vld [vmem:[#allocation5 + $0x28] sm:$0xf]
        %v387 = vld [vmem:[#allocation5 + $0x2c] sm:$0xf]
        %v388 = vld [vmem:[#allocation5 + $0x30] sm:$0xf]
        %v389 = vld [vmem:[#allocation5 + $0x34] sm:$0xf]
        %v390 = vld [vmem:[#allocation5 + $0x38] sm:$0xf]
        %v391 = vld [vmem:[#allocation5 + $0x3c] sm:$0xf]
        %v392 = vld [vmem:[%s2] sm:$0x1]
        %v394 = vlaneseq
        %v395 = vshrl.u32 %v394, 7
        %v396 = vsub.s32 0, %v395
        %v397 = vrot.slane %v392, %v396
        %v431 = vunpack.c.l.b16 %v344
        %v432 = vunpack.c.l.b16 %v345
        %v433 = vunpack.c.l.b16 %v346
        %v434 = vunpack.c.l.b16 %v347
        %v435 = vunpack.c.l.b16 %v348
        %v436 = vunpack.c.l.b16 %v349
        %v437 = vunpack.c.l.b16 %v350
        %v438 = vunpack.c.l.b16 %v351
        %v439 = vunpack.c.l.b16 %v352
        %v440 = vunpack.c.l.b16 %v353
        %v441 = vunpack.c.l.b16 %v354
        %v442 = vunpack.c.l.b16 %v355
        %v443 = vunpack.c.l.b16 %v356
        %v444 = vunpack.c.l.b16 %v357
        %v445 = vunpack.c.l.b16 %v358
        %v446 = vunpack.c.l.b16 %v359
        %v447 = vunpack.c.l.b16 %v360
        %v448 = vunpack.c.l.b16 %v361
        %v449 = vunpack.c.l.b16 %v362
        %v450 = vunpack.c.l.b16 %v363
        %v451 = vunpack.c.l.b16 %v364
        %v452 = vunpack.c.l.b16 %v365
        %v453 = vunpack.c.l.b16 %v366
        %v454 = vunpack.c.l.b16 %v367
        %v455 = vunpack.c.l.b16 %v368
        %v456 = vunpack.c.l.b16 %v369
        %v457 = vunpack.c.l.b16 %v370
        %v458 = vunpack.c.l.b16 %v371
        %v459 = vunpack.c.l.b16 %v372
        %v460 = vunpack.c.l.b16 %v373
        %v461 = vunpack.c.l.b16 %v374
        %v462 = vunpack.c.l.b16 %v375
        %v463 = vpack.c.b16 %v432, %v431
        %v464 = vpack.c.b16 %v434, %v433
        %v465 = vpack.c.b16 %v436, %v435
        %v466 = vpack.c.b16 %v438, %v437
        %v467 = vpack.c.b16 %v440, %v439
        %v468 = vpack.c.b16 %v442, %v441
        %v469 = vpack.c.b16 %v444, %v443
        %v470 = vpack.c.b16 %v446, %v445
        %v471 = vpack.c.b16 %v448, %v447
        %v472 = vpack.c.b16 %v450, %v449
        %v473 = vpack.c.b16 %v452, %v451
        %v474 = vpack.c.b16 %v454, %v453
        %v475 = vpack.c.b16 %v456, %v455
        %v476 = vpack.c.b16 %v458, %v457
        %v477 = vpack.c.b16 %v460, %v459
        %v478 = vpack.c.b16 %v462, %v461
        %v511 = vunpack.c.l.b16 %v376
        %v512 = vunpack.c.l.b16 %v377
        %v513 = vunpack.c.l.b16 %v378
        %v514 = vunpack.c.l.b16 %v379
        %v515 = vunpack.c.l.b16 %v380
        %v516 = vunpack.c.l.b16 %v381
        %v517 = vunpack.c.l.b16 %v382
        %v518 = vunpack.c.l.b16 %v383
        %v519 = vunpack.c.l.b16 %v384
        %v520 = vunpack.c.l.b16 %v385
        %v521 = vunpack.c.l.b16 %v386
        %v522 = vunpack.c.l.b16 %v387
        %v523 = vunpack.c.l.b16 %v388
        %v524 = vunpack.c.l.b16 %v389
        %v525 = vunpack.c.l.b16 %v390
        %v526 = vunpack.c.l.b16 %v391
        %v527 = vpack.c.b16 %v512, %v511
        %v528 = vpack.c.b16 %v514, %v513
        %v529 = vpack.c.b16 %v516, %v515
        %v530 = vpack.c.b16 %v518, %v517
        %v531 = vpack.c.b16 %v520, %v519
        %v532 = vpack.c.b16 %v522, %v521
        %v533 = vpack.c.b16 %v524, %v523
        %v534 = vpack.c.b16 %v526, %v525
        %543 = vmatprep.subr.bf16.mxu0 0
        %544 = vmatpush1.bf16.msra.mxu0 %v527
        %545 = vmatprep.subr.bf16.mxu0 0
        %546 = vmatpush1.bf16.msra.mxu0 %v528
        %547 = vmatprep.subr.bf16.mxu0 0
        %548 = vmatpush1.bf16.msra.mxu0 %v529
        %549 = vmatprep.subr.bf16.mxu0 0
        %550 = vmatpush1.bf16.msra.mxu0 %v530
        %551 = vmatprep.subr.bf16.mxu0 0
        %552 = vmatpush1.bf16.msra.mxu0 %v531
        %553 = vmatprep.subr.bf16.mxu0 0
        %554 = vmatpush1.bf16.msra.mxu0 %v532
        %555 = vmatprep.subr.bf16.mxu0 0
        %556 = vmatpush1.bf16.msra.mxu0 %v533
        %557 = vmatprep.subr.bf16.mxu0 0
        %558 = vmatpush1.bf16.msra.mxu0 %v534
        %559 = vmatprep.subr.bf16.mxu0 0
        %560 = vmatpush1.bf16.msra.mxu0 0
        %561 = vmatprep.subr.bf16.mxu0 0
        %562 = vmatpush1.bf16.msra.mxu0 0
        %563 = vmatprep.subr.bf16.mxu0 0
        %564 = vmatpush1.bf16.msra.mxu0 0
        %565 = vmatprep.subr.bf16.mxu0 0
        %566 = vmatpush1.bf16.msra.mxu0 0
        %567 = vmatprep.subr.bf16.mxu0 0
        %568 = vmatpush1.bf16.msra.mxu0 0
        %569 = vmatprep.subr.bf16.mxu0 0
        %570 = vmatpush1.bf16.msra.mxu0 0
        %571 = vmatprep.subr.bf16.mxu0 0
        %572 = vmatpush1.bf16.msra.mxu0 0
        %573 = vmatprep.subr.bf16.mxu0 0
        %574 = vmatpush1.bf16.msra.mxu0 0
        %575 = vmatprep.mubr.bf16.mxu0 0
        %576 = vmatmul.mubr.bf16.gmra.mrb[0].mxu0 %v463
        %v577 = vpop.f32.mrb[0].mxu0
        %v578 = vadd.f32 %v397, %v577
        %v579 = vpop.f32.mrb[0].mxu0
        %v580 = vpop.f32.mrb[0].mxu0
        %v581 = vadd.f32 %v397, %v580
        %v582 = vpop.f32.mrb[0].mxu0
        %583 = vmatprep.mubr.bf16.mxu0 0
        %584 = vmatmul.mubr.bf16.gmra.mrb[0].mxu0 %v464
        %v585 = vpop.f32.mrb[0].mxu0
        %v586 = vadd.f32 %v397, %v585
        %v587 = vpop.f32.mrb[0].mxu0
        %v588 = vpop.f32.mrb[0].mxu0
        %v589 = vadd.f32 %v397, %v588
        %v590 = vpop.f32.mrb[0].mxu0
        %591 = vmatprep.mubr.bf16.mxu0 0
        %592 = vmatmul.mubr.bf16.gmra.mrb[0].mxu0 %v465
        %v593 = vpop.f32.mrb[0].mxu0
        %v594 = vadd.f32 %v397, %v593
        %v595 = vpop.f32.mrb[0].mxu0
        %v596 = vpop.f32.mrb[0].mxu0
        %v597 = vadd.f32 %v397, %v596
        %v598 = vpop.f32.mrb[0].mxu0
        %599 = vmatprep.mubr.bf16.mxu0 0
        %600 = vmatmul.mubr.bf16.gmra.mrb[0].mxu0 %v466
        %v601 = vpop.f32.mrb[0].mxu0
        %v602 = vadd.f32 %v397, %v601
        %v603 = vpop.f32.mrb[0].mxu0
        %v604 = vpop.f32.mrb[0].mxu0
        %v605 = vadd.f32 %v397, %v604
        %v606 = vpop.f32.mrb[0].mxu0
        %607 = vmatprep.mubr.bf16.mxu0 0
        %608 = vmatmul.mubr.bf16.gmra.mrb[0].mxu0 %v467
        %v609 = vpop.f32.mrb[0].mxu0
        %v610 = vadd.f32 %v397, %v609
        %v611 = vpop.f32.mrb[0].mxu0
        %v612 = vpop.f32.mrb[0].mxu0
        %v613 = vadd.f32 %v397, %v612
        %v614 = vpop.f32.mrb[0].mxu0
        %615 = vmatprep.mubr.bf16.mxu0 0
        %616 = vmatmul.mubr.bf16.gmra.mrb[0].mxu0 %v468
        %v617 = vpop.f32.mrb[0].mxu0
        %v618 = vadd.f32 %v397, %v617
        %v619 = vpop.f32.mrb[0].mxu0
        %v620 = vpop.f32.mrb[0].mxu0
        %v621 = vadd.f32 %v397, %v620
        %v622 = vpop.f32.mrb[0].mxu0
        %623 = vmatprep.mubr.bf16.mxu0 0
        %624 = vmatmul.mubr.bf16.gmra.mrb[0].mxu0 %v469
        %v625 = vpop.f32.mrb[0].mxu0
        %v626 = vadd.f32 %v397, %v625
        %v627 = vpop.f32.mrb[0].mxu0
        %v628 = vpop.f32.mrb[0].mxu0
        %v629 = vadd.f32 %v397, %v628
        %v630 = vpop.f32.mrb[0].mxu0
        %631 = vmatprep.mubr.bf16.mxu0 0
        %632 = vmatmul.mubr.bf16.gmra.mrb[0].mxu0 %v470
        %v633 = vpop.f32.mrb[0].mxu0
        %v634 = vadd.f32 %v397, %v633
        %v635 = vpop.f32.mrb[0].mxu0
        %v636 = vpop.f32.mrb[0].mxu0
        %v637 = vadd.f32 %v397, %v636
        %v638 = vpop.f32.mrb[0].mxu0
        %639 = vmatprep.mubr.bf16.mxu0 0
        %640 = vmatmul.mubr.bf16.gmra.mrb[0].mxu0 %v471
        %v641 = vpop.f32.mrb[0].mxu0
        %v642 = vadd.f32 %v397, %v641
        %v643 = vpop.f32.mrb[0].mxu0
        %v644 = vpop.f32.mrb[0].mxu0
        %v645 = vadd.f32 %v397, %v644
        %v646 = vpop.f32.mrb[0].mxu0
        %647 = vmatprep.mubr.bf16.mxu0 0
        %648 = vmatmul.mubr.bf16.gmra.mrb[0].mxu0 %v472
        %v649 = vpop.f32.mrb[0].mxu0
        %v650 = vadd.f32 %v397, %v649
        %v651 = vpop.f32.mrb[0].mxu0
        %v652 = vpop.f32.mrb[0].mxu0
        %v653 = vadd.f32 %v397, %v652
        %v654 = vpop.f32.mrb[0].mxu0
        %655 = vmatprep.mubr.bf16.mxu0 0
        %656 = vmatmul.mubr.bf16.gmra.mrb[0].mxu0 %v473
        %v657 = vpop.f32.mrb[0].mxu0
        %v658 = vadd.f32 %v397, %v657
        %v659 = vpop.f32.mrb[0].mxu0
        %v660 = vpop.f32.mrb[0].mxu0
        %v661 = vadd.f32 %v397, %v660
        %v662 = vpop.f32.mrb[0].mxu0
        %663 = vmatprep.mubr.bf16.mxu0 0
        %664 = vmatmul.mubr.bf16.gmra.mrb[0].mxu0 %v474
        %v665 = vpop.f32.mrb[0].mxu0
        %v666 = vadd.f32 %v397, %v665
        %v667 = vpop.f32.mrb[0].mxu0
        %v668 = vpop.f32.mrb[0].mxu0
        %v669 = vadd.f32 %v397, %v668
        %v670 = vpop.f32.mrb[0].mxu0
        %671 = vmatprep.mubr.bf16.mxu0 0
        %672 = vmatmul.mubr.bf16.gmra.mrb[0].mxu0 %v475
        %v673 = vpop.f32.mrb[0].mxu0
        %v674 = vadd.f32 %v397, %v673
        %v675 = vpop.f32.mrb[0].mxu0
        %v676 = vpop.f32.mrb[0].mxu0
        %v677 = vadd.f32 %v397, %v676
        %v678 = vpop.f32.mrb[0].mxu0
        %679 = vmatprep.mubr.bf16.mxu0 0
        %680 = vmatmul.mubr.bf16.gmra.mrb[0].mxu0 %v476
        %v681 = vpop.f32.mrb[0].mxu0
        %v682 = vadd.f32 %v397, %v681
        %v683 = vpop.f32.mrb[0].mxu0
        %v684 = vpop.f32.mrb[0].mxu0
        %v685 = vadd.f32 %v397, %v684
        %v686 = vpop.f32.mrb[0].mxu0
        %687 = vmatprep.mubr.bf16.mxu0 0
        %688 = vmatmul.mubr.bf16.gmra.mrb[0].mxu0 %v477
        %v689 = vpop.f32.mrb[0].mxu0
        %v690 = vadd.f32 %v397, %v689
        %v691 = vpop.f32.mrb[0].mxu0
        %v692 = vpop.f32.mrb[0].mxu0
        %v693 = vadd.f32 %v397, %v692
        %v694 = vpop.f32.mrb[0].mxu0
        %695 = vmatprep.mubr.bf16.mxu0 0
        %696 = vmatmul.mubr.bf16.gmra.mrb[0].mxu0 %v478
        %v697 = vpop.f32.mrb[0].mxu0
        %v698 = vadd.f32 %v397, %v697
        %v699 = vpop.f32.mrb[0].mxu0
        %v700 = vpop.f32.mrb[0].mxu0
        %v701 = vadd.f32 %v397, %v700
        %v702 = vpop.f32.mrb[0].mxu0
        %703 = vdwg.mxu0
        %v704 = vmax.f32 %v578, 0.0
        %v705 = vmax.f32 %v581, 0.0
        %v706 = vmax.f32 %v586, 0.0
        %v707 = vmax.f32 %v589, 0.0
        %v708 = vmax.f32 %v594, 0.0
        %v709 = vmax.f32 %v597, 0.0
        %v710 = vmax.f32 %v602, 0.0
        %v711 = vmax.f32 %v605, 0.0
        %v712 = vmax.f32 %v610, 0.0
        %v713 = vmax.f32 %v613, 0.0
        %v714 = vmax.f32 %v618, 0.0
        %v715 = vmax.f32 %v621, 0.0
        %v716 = vmax.f32 %v626, 0.0
        %v717 = vmax.f32 %v629, 0.0
        %v718 = vmax.f32 %v634, 0.0
        %v719 = vmax.f32 %v637, 0.0
        %v720 = vmax.f32 %v642, 0.0
        %v721 = vmax.f32 %v645, 0.0
        %v722 = vmax.f32 %v650, 0.0
        %v723 = vmax.f32 %v653, 0.0
        %v724 = vmax.f32 %v658, 0.0
        %v725 = vmax.f32 %v661, 0.0
        %v726 = vmax.f32 %v666, 0.0
        %v727 = vmax.f32 %v669, 0.0
        %v728 = vmax.f32 %v674, 0.0
        %v729 = vmax.f32 %v677, 0.0
        %v730 = vmax.f32 %v682, 0.0
        %v731 = vmax.f32 %v685, 0.0
        %v732 = vmax.f32 %v690, 0.0
        %v733 = vmax.f32 %v693, 0.0
        %v734 = vmax.f32 %v698, 0.0
        %v735 = vmax.f32 %v701, 0.0
        %v736 = vlaneseq
        %v737 = vshrl.u32 %v736, 7
        %v738 = vadd.s32 %v737, 8
        %v739 = vadd.s32 %v737, 16
        %v740 = vadd.s32 %v737, 24
        %v741 = vadd.s32 %v737, 32
        %v742 = vadd.s32 %v737, 40
        %v743 = vadd.s32 %v737, 48
        %v744 = vadd.s32 %v737, 56
        %v745 = vadd.s32 %v737, 64
        %v746 = vadd.s32 %v737, 72
        %v747 = vadd.s32 %v737, 80
        %v748 = vadd.s32 %v737, 88
        %v749 = vadd.s32 %v737, 96
        %v750 = vadd.s32 %v737, 104
        %v751 = vadd.s32 %v737, 112
        %v752 = vadd.s32 %v737, 120
        %v753 = vadd.s32 %v737, 128
        %v754 = vadd.s32 %v737, 136
        %v755 = vadd.s32 %v737, 144
        %v756 = vadd.s32 %v737, 152
        %v757 = vadd.s32 %v737, 160
        %v758 = vadd.s32 %v737, 168
        %v759 = vadd.s32 %v737, 176
        %v760 = vadd.s32 %v737, 184
        %v761 = vadd.s32 %v737, 192
        %v762 = vadd.s32 %v737, 200
        %v763 = vadd.s32 %v737, 208
        %v764 = vadd.s32 %v737, 216
        %v765 = vadd.s32 %v737, 224
        %v766 = vadd.s32 %v737, 232
        %v767 = vadd.s32 %v737, 240
        %v768 = vadd.s32 %v737, 248
        %vm769 = vcmp.ge.s32.totalorder %v737, 1
        %vm770 = vcmp.ge.s32.totalorder %v738, 1
        %vm771 = vcmp.lt.s32.totalorder %v737, 15
        %vm772 = vcmp.lt.s32.totalorder %v738, 15
        %vm773 = vcmp.ge.s32.totalorder %v737, 16
        %vm774 = vcmp.ge.s32.totalorder %v738, 16
        %vm775 = vcmp.ge.s32.totalorder %v739, 16
        %vm776 = vcmp.ge.s32.totalorder %v740, 16
        %vm777 = vcmp.ge.s32.totalorder %v741, 16
        %vm778 = vcmp.ge.s32.totalorder %v742, 16
        %vm779 = vcmp.ge.s32.totalorder %v743, 16
        %vm780 = vcmp.ge.s32.totalorder %v744, 16
        %vm781 = vcmp.ge.s32.totalorder %v745, 16
        %vm782 = vcmp.ge.s32.totalorder %v746, 16
        %vm783 = vcmp.ge.s32.totalorder %v747, 16
        %vm784 = vcmp.ge.s32.totalorder %v748, 16
        %vm785 = vcmp.ge.s32.totalorder %v749, 16
        %vm786 = vcmp.ge.s32.totalorder %v750, 16
        %vm787 = vcmp.ge.s32.totalorder %v751, 16
        %vm788 = vcmp.ge.s32.totalorder %v752, 16
        %vm789 = vcmp.ge.s32.totalorder %v753, 16
        %vm790 = vcmp.ge.s32.totalorder %v754, 16
        %vm791 = vcmp.ge.s32.totalorder %v755, 16
        %vm792 = vcmp.ge.s32.totalorder %v756, 16
        %vm793 = vcmp.ge.s32.totalorder %v757, 16
        %vm794 = vcmp.ge.s32.totalorder %v758, 16
        %vm795 = vcmp.ge.s32.totalorder %v759, 16
        %vm796 = vcmp.ge.s32.totalorder %v760, 16
        %vm797 = vcmp.ge.s32.totalorder %v761, 16
        %vm798 = vcmp.ge.s32.totalorder %v762, 16
        %vm799 = vcmp.ge.s32.totalorder %v763, 16
        %vm800 = vcmp.ge.s32.totalorder %v764, 16
        %vm801 = vcmp.ge.s32.totalorder %v765, 16
        %vm802 = vcmp.ge.s32.totalorder %v766, 16
        %vm803 = vcmp.ge.s32.totalorder %v767, 16
        %vm804 = vcmp.ge.s32.totalorder %v768, 16
        %vm805 = vcmp.lt.s32.totalorder %v737, 240
        %vm806 = vcmp.lt.s32.totalorder %v738, 240
        %vm807 = vcmp.lt.s32.totalorder %v739, 240
        %vm808 = vcmp.lt.s32.totalorder %v740, 240
        %vm809 = vcmp.lt.s32.totalorder %v741, 240
        %vm810 = vcmp.lt.s32.totalorder %v742, 240
        %vm811 = vcmp.lt.s32.totalorder %v743, 240
        %vm812 = vcmp.lt.s32.totalorder %v744, 240
        %vm813 = vcmp.lt.s32.totalorder %v745, 240
        %vm814 = vcmp.lt.s32.totalorder %v746, 240
        %vm815 = vcmp.lt.s32.totalorder %v747, 240
        %vm816 = vcmp.lt.s32.totalorder %v748, 240
        %vm817 = vcmp.lt.s32.totalorder %v749, 240
        %vm818 = vcmp.lt.s32.totalorder %v750, 240
        %vm819 = vcmp.lt.s32.totalorder %v751, 240
        %vm820 = vcmp.lt.s32.totalorder %v752, 240
        %vm821 = vcmp.lt.s32.totalorder %v753, 240
        %vm822 = vcmp.lt.s32.totalorder %v754, 240
        %vm823 = vcmp.lt.s32.totalorder %v755, 240
        %vm824 = vcmp.lt.s32.totalorder %v756, 240
        %vm825 = vcmp.lt.s32.totalorder %v757, 240
        %vm826 = vcmp.lt.s32.totalorder %v758, 240
        %vm827 = vcmp.lt.s32.totalorder %v759, 240
        %vm828 = vcmp.lt.s32.totalorder %v760, 240
        %vm829 = vcmp.lt.s32.totalorder %v761, 240
        %vm830 = vcmp.lt.s32.totalorder %v762, 240
        %vm831 = vcmp.lt.s32.totalorder %v763, 240
        %vm832 = vcmp.lt.s32.totalorder %v764, 240
        %vm833 = vcmp.lt.s32.totalorder %v765, 240
        %vm834 = vcmp.lt.s32.totalorder %v766, 240
        %vm835 = vcmp.lt.s32.totalorder %v767, 240
        %vm836 = vcmp.lt.s32.totalorder %v768, 240
        %v837 = vrot.slane %v704, 7
        %v838 = vrot.slane %v705, 7
        %v839 = vrot.slane %v706, 7
        %v840 = vrot.slane %v707, 7
        %v841 = vrot.slane %v708, 7
        %v842 = vrot.slane %v709, 7
        %v843 = vrot.slane %v710, 7
        %v844 = vrot.slane %v711, 7
        %v845 = vrot.slane %v712, 7
        %v846 = vrot.slane %v713, 7
        %v847 = vrot.slane %v714, 7
        %v848 = vrot.slane %v715, 7
        %v849 = vrot.slane %v716, 7
        %v850 = vrot.slane %v717, 7
        %v851 = vrot.slane %v718, 7
        %v852 = vrot.slane %v719, 7
        %v853 = vrot.slane %v720, 7
        %v854 = vrot.slane %v721, 7
        %v855 = vrot.slane %v722, 7
        %v856 = vrot.slane %v723, 7
        %v857 = vrot.slane %v724, 7
        %v858 = vrot.slane %v725, 7
        %v859 = vrot.slane %v726, 7
        %v860 = vrot.slane %v727, 7
        %v861 = vrot.slane %v728, 7
        %v862 = vrot.slane %v729, 7
        %v863 = vrot.slane %v730, 7
        %v864 = vrot.slane %v731, 7
        %v865 = vrot.slane %v732, 7
        %v866 = vrot.slane %v733, 7
        %v867 = vrot.slane %v734, 7
        %v868 = vrot.slane %v735, 7
        %vm869 = vcmp.lt.s32.totalorder %v737, 1
        %v870 = vsel %vm869, %v867, %v868
        %v871 = vsel %vm869, %v866, %v867
        %v872 = vsel %vm869, %v865, %v866
        %v873 = vsel %vm869, %v864, %v865
        %v874 = vsel %vm869, %v863, %v864
        %v875 = vsel %vm869, %v862, %v863
        %v876 = vsel %vm869, %v861, %v862
        %v877 = vsel %vm869, %v860, %v861
        %v878 = vsel %vm869, %v859, %v860
        %v879 = vsel %vm869, %v858, %v859
        %v880 = vsel %vm869, %v857, %v858
        %v881 = vsel %vm869, %v856, %v857
        %v882 = vsel %vm869, %v855, %v856
        %v883 = vsel %vm869, %v854, %v855
        %v884 = vsel %vm869, %v853, %v854
        %v885 = vsel %vm869, %v852, %v853
        %v886 = vsel %vm869, %v851, %v852
        %v887 = vsel %vm869, %v850, %v851
        %v888 = vsel %vm869, %v849, %v850
        %v889 = vsel %vm869, %v848, %v849
        %v890 = vsel %vm869, %v847, %v848
        %v891 = vsel %vm869, %v846, %v847
        %v892 = vsel %vm869, %v845, %v846
        %v893 = vsel %vm869, %v844, %v845
        %v894 = vsel %vm869, %v843, %v844
        %v895 = vsel %vm869, %v842, %v843
        %v896 = vsel %vm869, %v841, %v842
        %v897 = vsel %vm869, %v840, %v841
        %v898 = vsel %vm869, %v839, %v840
        %v899 = vsel %vm869, %v838, %v839
        %v900 = vsel %vm869, %v837, %v838
        %v901 = vsel %vm869, %v868, %v837
        %v902 = vpack.c.bf16 %v870, %v871
        %v903 = vpack.c.bf16 %v900, %v901
        %v904 = vpack.c.bf16 %v898, %v899
        %v905 = vpack.c.bf16 %v896, %v897
        %v906 = vpack.c.bf16 %v894, %v895
        %v907 = vpack.c.bf16 %v892, %v893
        %v908 = vpack.c.bf16 %v890, %v891
        %v909 = vpack.c.bf16 %v888, %v889
        %v910 = vpack.c.bf16 %v886, %v887
        %v911 = vpack.c.bf16 %v884, %v885
        %v912 = vpack.c.bf16 %v882, %v883
        %v913 = vpack.c.bf16 %v880, %v881
        %v914 = vpack.c.bf16 %v878, %v879
        %v915 = vpack.c.bf16 %v876, %v877
        %v916 = vpack.c.bf16 %v874, %v875
        %v917 = vpack.c.bf16 %v872, %v873
        %vm918 = vmand %vm773, %vm769
        %vm919 = vmand %vm774, %vm770
        %vm920 = vmand %vm775, %vm769
        %vm921 = vmand %vm776, %vm770
        %vm922 = vmand %vm777, %vm769
        %vm923 = vmand %vm778, %vm770
        %vm924 = vmand %vm779, %vm769
        %vm925 = vmand %vm780, %vm770
        %vm926 = vmand %vm781, %vm769
        %vm927 = vmand %vm782, %vm770
        %vm928 = vmand %vm783, %vm769
        %vm929 = vmand %vm784, %vm770
        %vm930 = vmand %vm785, %vm769
        %vm931 = vmand %vm786, %vm770
        %vm932 = vmand %vm787, %vm769
        %vm933 = vmand %vm788, %vm770
        %vm934 = vmand %vm789, %vm769
        %vm935 = vmand %vm790, %vm770
        %vm936 = vmand %vm791, %vm769
        %vm937 = vmand %vm792, %vm770
        %vm938 = vmand %vm793, %vm769
        %vm939 = vmand %vm794, %vm770
        %vm940 = vmand %vm795, %vm769
        %vm941 = vmand %vm796, %vm770
        %vm942 = vmand %vm797, %vm769
        %vm943 = vmand %vm798, %vm770
        %vm944 = vmand %vm799, %vm769
        %vm945 = vmand %vm800, %vm770
        %vm946 = vmand %vm801, %vm769
        %vm947 = vmand %vm802, %vm770
        %vm948 = vmand %vm803, %vm769
        %vm949 = vmand %vm804, %vm770
        %v950 = vsel %vm918, 1, 0
        %v951 = vsel %vm919, 1, 0
        %v952 = vsel %vm920, 1, 0
        %v953 = vsel %vm921, 1, 0
        %v954 = vsel %vm922, 1, 0
        %v955 = vsel %vm923, 1, 0
        %v956 = vsel %vm924, 1, 0
        %v957 = vsel %vm925, 1, 0
        %v958 = vsel %vm926, 1, 0
        %v959 = vsel %vm927, 1, 0
        %v960 = vsel %vm928, 1, 0
        %v961 = vsel %vm929, 1, 0
        %v962 = vsel %vm930, 1, 0
        %v963 = vsel %vm931, 1, 0
        %v964 = vsel %vm932, 1, 0
        %v965 = vsel %vm933, 1, 0
        %v966 = vsel %vm934, 1, 0
        %v967 = vsel %vm935, 1, 0
        %v968 = vsel %vm936, 1, 0
        %v969 = vsel %vm937, 1, 0
        %v970 = vsel %vm938, 1, 0
        %v971 = vsel %vm939, 1, 0
        %v972 = vsel %vm940, 1, 0
        %v973 = vsel %vm941, 1, 0
        %v974 = vsel %vm942, 1, 0
        %v975 = vsel %vm943, 1, 0
        %v976 = vsel %vm944, 1, 0
        %v977 = vsel %vm945, 1, 0
        %v978 = vsel %vm946, 1, 0
        %v979 = vsel %vm947, 1, 0
        %v980 = vsel %vm948, 1, 0
        %v981 = vsel %vm949, 1, 0
        %vm982 = vcmp.eq.s32.totalorder %v950, 1
        %vm983 = vcmp.eq.s32.totalorder %v951, 1
        %vm984 = vcmp.eq.s32.totalorder %v952, 1
        %vm985 = vcmp.eq.s32.totalorder %v953, 1
        %vm986 = vcmp.eq.s32.totalorder %v954, 1
        %vm987 = vcmp.eq.s32.totalorder %v955, 1
        %vm988 = vcmp.eq.s32.totalorder %v956, 1
        %vm989 = vcmp.eq.s32.totalorder %v957, 1
        %vm990 = vcmp.eq.s32.totalorder %v958, 1
        %vm991 = vcmp.eq.s32.totalorder %v959, 1
        %vm992 = vcmp.eq.s32.totalorder %v960, 1
        %vm993 = vcmp.eq.s32.totalorder %v961, 1
        %vm994 = vcmp.eq.s32.totalorder %v962, 1
        %vm995 = vcmp.eq.s32.totalorder %v963, 1
        %vm996 = vcmp.eq.s32.totalorder %v964, 1
        %vm997 = vcmp.eq.s32.totalorder %v965, 1
        %vm998 = vcmp.eq.s32.totalorder %v966, 1
        %vm999 = vcmp.eq.s32.totalorder %v967, 1
        %vm1000 = vcmp.eq.s32.totalorder %v968, 1
        %vm1001 = vcmp.eq.s32.totalorder %v969, 1
        %vm1002 = vcmp.eq.s32.totalorder %v970, 1
        %vm1003 = vcmp.eq.s32.totalorder %v971, 1
        %vm1004 = vcmp.eq.s32.totalorder %v972, 1
        %vm1005 = vcmp.eq.s32.totalorder %v973, 1
        %vm1006 = vcmp.eq.s32.totalorder %v974, 1
        %vm1007 = vcmp.eq.s32.totalorder %v975, 1
        %vm1008 = vcmp.eq.s32.totalorder %v976, 1
        %vm1009 = vcmp.eq.s32.totalorder %v977, 1
        %vm1010 = vcmp.eq.s32.totalorder %v978, 1
        %vm1011 = vcmp.eq.s32.totalorder %v979, 1
        %vm1012 = vcmp.eq.s32.totalorder %v980, 1
        %vm1013 = vcmp.eq.s32.totalorder %v981, 1
        %vm1014 = vmpackc.low %vm982, %vm982
        %vm1015 = vmpackc.low %vm983, %vm983
        %vm1016 = vmpackc.low %vm984, %vm984
        %vm1017 = vmpackc.low %vm985, %vm985
        %vm1018 = vmpackc.low %vm986, %vm986
        %vm1019 = vmpackc.low %vm987, %vm987
        %vm1020 = vmpackc.low %vm988, %vm988
        %vm1021 = vmpackc.low %vm989, %vm989
        %vm1022 = vmpackc.low %vm990, %vm990
        %vm1023 = vmpackc.low %vm991, %vm991
        %vm1024 = vmpackc.low %vm992, %vm992
        %vm1025 = vmpackc.low %vm993, %vm993
        %vm1026 = vmpackc.low %vm994, %vm994
        %vm1027 = vmpackc.low %vm995, %vm995
        %vm1028 = vmpackc.low %vm996, %vm996
        %vm1029 = vmpackc.low %vm997, %vm997
        %vm1030 = vmpackc.low %vm998, %vm998
        %vm1031 = vmpackc.low %vm999, %vm999
        %vm1032 = vmpackc.low %vm1000, %vm1000
        %vm1033 = vmpackc.low %vm1001, %vm1001
        %vm1034 = vmpackc.low %vm1002, %vm1002
        %vm1035 = vmpackc.low %vm1003, %vm1003
        %vm1036 = vmpackc.low %vm1004, %vm1004
        %vm1037 = vmpackc.low %vm1005, %vm1005
        %vm1038 = vmpackc.low %vm1006, %vm1006
        %vm1039 = vmpackc.low %vm1007, %vm1007
        %vm1040 = vmpackc.low %vm1008, %vm1008
        %vm1041 = vmpackc.low %vm1009, %vm1009
        %vm1042 = vmpackc.low %vm1010, %vm1010
        %vm1043 = vmpackc.low %vm1011, %vm1011
        %vm1044 = vmpackc.low %vm1012, %vm1012
        %vm1045 = vmpackc.low %vm1013, %vm1013
        %v1046 = vsel %vm1014, 65537, 0
        %v1047 = vsel %vm1015, 65537, 0
        %v1048 = vsel %vm1016, 65537, 0
        %v1049 = vsel %vm1017, 65537, 0
        %v1050 = vsel %vm1018, 65537, 0
        %v1051 = vsel %vm1019, 65537, 0
        %v1052 = vsel %vm1020, 65537, 0
        %v1053 = vsel %vm1021, 65537, 0
        %v1054 = vsel %vm1022, 65537, 0
        %v1055 = vsel %vm1023, 65537, 0
        %v1056 = vsel %vm1024, 65537, 0
        %v1057 = vsel %vm1025, 65537, 0
        %v1058 = vsel %vm1026, 65537, 0
        %v1059 = vsel %vm1027, 65537, 0
        %v1060 = vsel %vm1028, 65537, 0
        %v1061 = vsel %vm1029, 65537, 0
        %v1062 = vsel %vm1030, 65537, 0
        %v1063 = vsel %vm1031, 65537, 0
        %v1064 = vsel %vm1032, 65537, 0
        %v1065 = vsel %vm1033, 65537, 0
        %v1066 = vsel %vm1034, 65537, 0
        %v1067 = vsel %vm1035, 65537, 0
        %v1068 = vsel %vm1036, 65537, 0
        %v1069 = vsel %vm1037, 65537, 0
        %v1070 = vsel %vm1038, 65537, 0
        %v1071 = vsel %vm1039, 65537, 0
        %v1072 = vsel %vm1040, 65537, 0
        %v1073 = vsel %vm1041, 65537, 0
        %v1074 = vsel %vm1042, 65537, 0
        %v1075 = vsel %vm1043, 65537, 0
        %v1076 = vsel %vm1044, 65537, 0
        %v1077 = vsel %vm1045, 65537, 0
        %v1078 = vunpack.c.l.b16 %v1046
        %v1079 = vunpack.c.l.b16 %v1047
        %v1080 = vunpack.c.l.b16 %v1048
        %v1081 = vunpack.c.l.b16 %v1049
        %v1082 = vunpack.c.l.b16 %v1050
        %v1083 = vunpack.c.l.b16 %v1051
        %v1084 = vunpack.c.l.b16 %v1052
        %v1085 = vunpack.c.l.b16 %v1053
        %v1086 = vunpack.c.l.b16 %v1054
        %v1087 = vunpack.c.l.b16 %v1055
        %v1088 = vunpack.c.l.b16 %v1056
        %v1089 = vunpack.c.l.b16 %v1057
        %v1090 = vunpack.c.l.b16 %v1058
        %v1091 = vunpack.c.l.b16 %v1059
        %v1092 = vunpack.c.l.b16 %v1060
        %v1093 = vunpack.c.l.b16 %v1061
        %v1094 = vunpack.c.l.b16 %v1062
        %v1095 = vunpack.c.l.b16 %v1063
        %v1096 = vunpack.c.l.b16 %v1064
        %v1097 = vunpack.c.l.b16 %v1065
        %v1098 = vunpack.c.l.b16 %v1066
        %v1099 = vunpack.c.l.b16 %v1067
        %v1100 = vunpack.c.l.b16 %v1068
        %v1101 = vunpack.c.l.b16 %v1069
        %v1102 = vunpack.c.l.b16 %v1070
        %v1103 = vunpack.c.l.b16 %v1071
        %v1104 = vunpack.c.l.b16 %v1072
        %v1105 = vunpack.c.l.b16 %v1073
        %v1106 = vunpack.c.l.b16 %v1074
        %v1107 = vunpack.c.l.b16 %v1075
        %v1108 = vunpack.c.l.b16 %v1076
        %v1109 = vunpack.c.l.b16 %v1077
        %v1110 = vpack.c.b16 %v1079, %v1078
        %v1111 = vpack.c.b16 %v1081, %v1080
        %v1112 = vpack.c.b16 %v1083, %v1082
        %v1113 = vpack.c.b16 %v1085, %v1084
        %v1114 = vpack.c.b16 %v1087, %v1086
        %v1115 = vpack.c.b16 %v1089, %v1088
        %v1116 = vpack.c.b16 %v1091, %v1090
        %v1117 = vpack.c.b16 %v1093, %v1092
        %v1118 = vpack.c.b16 %v1095, %v1094
        %v1119 = vpack.c.b16 %v1097, %v1096
        %v1120 = vpack.c.b16 %v1099, %v1098
        %v1121 = vpack.c.b16 %v1101, %v1100
        %v1122 = vpack.c.b16 %v1103, %v1102
        %v1123 = vpack.c.b16 %v1105, %v1104
        %v1124 = vpack.c.b16 %v1107, %v1106
        %v1125 = vpack.c.b16 %v1109, %v1108
        %vm1126 = vcmp.ne.s16.totalorder %v1110, 0
        %vm1127 = vcmp.ne.s16.totalorder %v1111, 0
        %vm1128 = vcmp.ne.s16.totalorder %v1112, 0
        %vm1129 = vcmp.ne.s16.totalorder %v1113, 0
        %vm1130 = vcmp.ne.s16.totalorder %v1114, 0
        %vm1131 = vcmp.ne.s16.totalorder %v1115, 0
        %vm1132 = vcmp.ne.s16.totalorder %v1116, 0
        %vm1133 = vcmp.ne.s16.totalorder %v1117, 0
        %vm1134 = vcmp.ne.s16.totalorder %v1118, 0
        %vm1135 = vcmp.ne.s16.totalorder %v1119, 0
        %vm1136 = vcmp.ne.s16.totalorder %v1120, 0
        %vm1137 = vcmp.ne.s16.totalorder %v1121, 0
        %vm1138 = vcmp.ne.s16.totalorder %v1122, 0
        %vm1139 = vcmp.ne.s16.totalorder %v1123, 0
        %vm1140 = vcmp.ne.s16.totalorder %v1124, 0
        %vm1141 = vcmp.ne.s16.totalorder %v1125, 0
        %v1142 = vsel %vm1126, %v902, 0
        %v1143 = vsel %vm1127, %v903, 0
        %v1144 = vsel %vm1128, %v904, 0
        %v1145 = vsel %vm1129, %v905, 0
        %v1146 = vsel %vm1130, %v906, 0
        %v1147 = vsel %vm1131, %v907, 0
        %v1148 = vsel %vm1132, %v908, 0
        %v1149 = vsel %vm1133, %v909, 0
        %v1150 = vsel %vm1134, %v910, 0
        %v1151 = vsel %vm1135, %v911, 0
        %v1152 = vsel %vm1136, %v912, 0
        %v1153 = vsel %vm1137, %v913, 0
        %v1154 = vsel %vm1138, %v914, 0
        %v1155 = vsel %vm1139, %v915, 0
        %v1156 = vsel %vm1140, %v916, 0
        %v1157 = vsel %vm1141, %v917, 0
        %v1158 = vpack.c.bf16 %v735, %v734
        %v1159 = vpack.c.bf16 %v705, %v704
        %v1160 = vpack.c.bf16 %v707, %v706
        %v1161 = vpack.c.bf16 %v709, %v708
        %v1162 = vpack.c.bf16 %v711, %v710
        %v1163 = vpack.c.bf16 %v713, %v712
        %v1164 = vpack.c.bf16 %v715, %v714
        %v1165 = vpack.c.bf16 %v717, %v716
        %v1166 = vpack.c.bf16 %v719, %v718
        %v1167 = vpack.c.bf16 %v721, %v720
        %v1168 = vpack.c.bf16 %v723, %v722
        %v1169 = vpack.c.bf16 %v725, %v724
        %v1170 = vpack.c.bf16 %v727, %v726
        %v1171 = vpack.c.bf16 %v729, %v728
        %v1172 = vpack.c.bf16 %v731, %v730
        %v1173 = vpack.c.bf16 %v733, %v732
        %v1174 = vsel %vm773, 1, 0
        %v1175 = vsel %vm774, 1, 0
        %v1176 = vsel %vm775, 1, 0
        %v1177 = vsel %vm776, 1, 0
        %v1178 = vsel %vm777, 1, 0
        %v1179 = vsel %vm778, 1, 0
        %v1180 = vsel %vm779, 1, 0
        %v1181 = vsel %vm780, 1, 0
        %v1182 = vsel %vm781, 1, 0
        %v1183 = vsel %vm782, 1, 0
        %v1184 = vsel %vm783, 1, 0
        %v1185 = vsel %vm784, 1, 0
        %v1186 = vsel %vm785, 1, 0
        %v1187 = vsel %vm786, 1, 0
        %v1188 = vsel %vm787, 1, 0
        %v1189 = vsel %vm788, 1, 0
        %v1190 = vsel %vm789, 1, 0
        %v1191 = vsel %vm790, 1, 0
        %v1192 = vsel %vm791, 1, 0
        %v1193 = vsel %vm792, 1, 0
        %v1194 = vsel %vm793, 1, 0
        %v1195 = vsel %vm794, 1, 0
        %v1196 = vsel %vm795, 1, 0
        %v1197 = vsel %vm796, 1, 0
        %v1198 = vsel %vm797, 1, 0
        %v1199 = vsel %vm798, 1, 0
        %v1200 = vsel %vm799, 1, 0
        %v1201 = vsel %vm800, 1, 0
        %v1202 = vsel %vm801, 1, 0
        %v1203 = vsel %vm802, 1, 0
        %v1204 = vsel %vm803, 1, 0
        %v1205 = vsel %vm804, 1, 0
        %vm1206 = vcmp.eq.s32.totalorder %v1174, 1
        %vm1207 = vcmp.eq.s32.totalorder %v1175, 1
        %vm1208 = vcmp.eq.s32.totalorder %v1176, 1
        %vm1209 = vcmp.eq.s32.totalorder %v1177, 1
        %vm1210 = vcmp.eq.s32.totalorder %v1178, 1
        %vm1211 = vcmp.eq.s32.totalorder %v1179, 1
        %vm1212 = vcmp.eq.s32.totalorder %v1180, 1
        %vm1213 = vcmp.eq.s32.totalorder %v1181, 1
        %vm1214 = vcmp.eq.s32.totalorder %v1182, 1
        %vm1215 = vcmp.eq.s32.totalorder %v1183, 1
        %vm1216 = vcmp.eq.s32.totalorder %v1184, 1
        %vm1217 = vcmp.eq.s32.totalorder %v1185, 1
        %vm1218 = vcmp.eq.s32.totalorder %v1186, 1
        %vm1219 = vcmp.eq.s32.totalorder %v1187, 1
        %vm1220 = vcmp.eq.s32.totalorder %v1188, 1
        %vm1221 = vcmp.eq.s32.totalorder %v1189, 1
        %vm1222 = vcmp.eq.s32.totalorder %v1190, 1
        %vm1223 = vcmp.eq.s32.totalorder %v1191, 1
        %vm1224 = vcmp.eq.s32.totalorder %v1192, 1
        %vm1225 = vcmp.eq.s32.totalorder %v1193, 1
        %vm1226 = vcmp.eq.s32.totalorder %v1194, 1
        %vm1227 = vcmp.eq.s32.totalorder %v1195, 1
        %vm1228 = vcmp.eq.s32.totalorder %v1196, 1
        %vm1229 = vcmp.eq.s32.totalorder %v1197, 1
        %vm1230 = vcmp.eq.s32.totalorder %v1198, 1
        %vm1231 = vcmp.eq.s32.totalorder %v1199, 1
        %vm1232 = vcmp.eq.s32.totalorder %v1200, 1
        %vm1233 = vcmp.eq.s32.totalorder %v1201, 1
        %vm1234 = vcmp.eq.s32.totalorder %v1202, 1
        %vm1235 = vcmp.eq.s32.totalorder %v1203, 1
        %vm1236 = vcmp.eq.s32.totalorder %v1204, 1
        %vm1237 = vcmp.eq.s32.totalorder %v1205, 1
        %vm1238 = vmpackc.low %vm1206, %vm1206
        %vm1239 = vmpackc.low %vm1207, %vm1207
        %vm1240 = vmpackc.low %vm1208, %vm1208
        %vm1241 = vmpackc.low %vm1209, %vm1209
        %vm1242 = vmpackc.low %vm1210, %vm1210
        %vm1243 = vmpackc.low %vm1211, %vm1211
        %vm1244 = vmpackc.low %vm1212, %vm1212
        %vm1245 = vmpackc.low %vm1213, %vm1213
        %vm1246 = vmpackc.low %vm1214, %vm1214
        %vm1247 = vmpackc.low %vm1215, %vm1215
        %vm1248 = vmpackc.low %vm1216, %vm1216
        %vm1249 = vmpackc.low %vm1217, %vm1217
        %vm1250 = vmpackc.low %vm1218, %vm1218
        %vm1251 = vmpackc.low %vm1219, %vm1219
        %vm1252 = vmpackc.low %vm1220, %vm1220
        %vm1253 = vmpackc.low %vm1221, %vm1221
        %vm1254 = vmpackc.low %vm1222, %vm1222
        %vm1255 = vmpackc.low %vm1223, %vm1223
        %vm1256 = vmpackc.low %vm1224, %vm1224
        %vm1257 = vmpackc.low %vm1225, %vm1225
        %vm1258 = vmpackc.low %vm1226, %vm1226
        %vm1259 = vmpackc.low %vm1227, %vm1227
        %vm1260 = vmpackc.low %vm1228, %vm1228
        %vm1261 = vmpackc.low %vm1229, %vm1229
        %vm1262 = vmpackc.low %vm1230, %vm1230
        %vm1263 = vmpackc.low %vm1231, %vm1231
        %vm1264 = vmpackc.low %vm1232, %vm1232
        %vm1265 = vmpackc.low %vm1233, %vm1233
        %vm1266 = vmpackc.low %vm1234, %vm1234
        %vm1267 = vmpackc.low %vm1235, %vm1235
        %vm1268 = vmpackc.low %vm1236, %vm1236
        %vm1269 = vmpackc.low %vm1237, %vm1237
        %v1270 = vsel %vm1238, 65537, 0
        %v1271 = vsel %vm1239, 65537, 0
        %v1272 = vsel %vm1240, 65537, 0
        %v1273 = vsel %vm1241, 65537, 0
        %v1274 = vsel %vm1242, 65537, 0
        %v1275 = vsel %vm1243, 65537, 0
        %v1276 = vsel %vm1244, 65537, 0
        %v1277 = vsel %vm1245, 65537, 0
        %v1278 = vsel %vm1246, 65537, 0
        %v1279 = vsel %vm1247, 65537, 0
        %v1280 = vsel %vm1248, 65537, 0
        %v1281 = vsel %vm1249, 65537, 0
        %v1282 = vsel %vm1250, 65537, 0
        %v1283 = vsel %vm1251, 65537, 0
        %v1284 = vsel %vm1252, 65537, 0
        %v1285 = vsel %vm1253, 65537, 0
        %v1286 = vsel %vm1254, 65537, 0
        %v1287 = vsel %vm1255, 65537, 0
        %v1288 = vsel %vm1256, 65537, 0
        %v1289 = vsel %vm1257, 65537, 0
        %v1290 = vsel %vm1258, 65537, 0
        %v1291 = vsel %vm1259, 65537, 0
        %v1292 = vsel %vm1260, 65537, 0
        %v1293 = vsel %vm1261, 65537, 0
        %v1294 = vsel %vm1262, 65537, 0
        %v1295 = vsel %vm1263, 65537, 0
        %v1296 = vsel %vm1264, 65537, 0
        %v1297 = vsel %vm1265, 65537, 0
        %v1298 = vsel %vm1266, 65537, 0
        %v1299 = vsel %vm1267, 65537, 0
        %v1300 = vsel %vm1268, 65537, 0
        %v1301 = vsel %vm1269, 65537, 0
        %v1302 = vunpack.c.l.b16 %v1270
        %v1303 = vunpack.c.l.b16 %v1271
        %v1304 = vunpack.c.l.b16 %v1272
        %v1305 = vunpack.c.l.b16 %v1273
        %v1306 = vunpack.c.l.b16 %v1274
        %v1307 = vunpack.c.l.b16 %v1275
        %v1308 = vunpack.c.l.b16 %v1276
        %v1309 = vunpack.c.l.b16 %v1277
        %v1310 = vunpack.c.l.b16 %v1278
        %v1311 = vunpack.c.l.b16 %v1279
        %v1312 = vunpack.c.l.b16 %v1280
        %v1313 = vunpack.c.l.b16 %v1281
        %v1314 = vunpack.c.l.b16 %v1282
        %v1315 = vunpack.c.l.b16 %v1283
        %v1316 = vunpack.c.l.b16 %v1284
        %v1317 = vunpack.c.l.b16 %v1285
        %v1318 = vunpack.c.l.b16 %v1286
        %v1319 = vunpack.c.l.b16 %v1287
        %v1320 = vunpack.c.l.b16 %v1288
        %v1321 = vunpack.c.l.b16 %v1289
        %v1322 = vunpack.c.l.b16 %v1290
        %v1323 = vunpack.c.l.b16 %v1291
        %v1324 = vunpack.c.l.b16 %v1292
        %v1325 = vunpack.c.l.b16 %v1293
        %v1326 = vunpack.c.l.b16 %v1294
        %v1327 = vunpack.c.l.b16 %v1295
        %v1328 = vunpack.c.l.b16 %v1296
        %v1329 = vunpack.c.l.b16 %v1297
        %v1330 = vunpack.c.l.b16 %v1298
        %v1331 = vunpack.c.l.b16 %v1299
        %v1332 = vunpack.c.l.b16 %v1300
        %v1333 = vunpack.c.l.b16 %v1301
        %v1334 = vpack.c.b16 %v1303, %v1302
        %v1335 = vpack.c.b16 %v1305, %v1304
        %v1336 = vpack.c.b16 %v1307, %v1306
        %v1337 = vpack.c.b16 %v1309, %v1308
        %v1338 = vpack.c.b16 %v1311, %v1310
        %v1339 = vpack.c.b16 %v1313, %v1312
        %v1340 = vpack.c.b16 %v1315, %v1314
        %v1341 = vpack.c.b16 %v1317, %v1316
        %v1342 = vpack.c.b16 %v1319, %v1318
        %v1343 = vpack.c.b16 %v1321, %v1320
        %v1344 = vpack.c.b16 %v1323, %v1322
        %v1345 = vpack.c.b16 %v1325, %v1324
        %v1346 = vpack.c.b16 %v1327, %v1326
        %v1347 = vpack.c.b16 %v1329, %v1328
        %v1348 = vpack.c.b16 %v1331, %v1330
        %v1349 = vpack.c.b16 %v1333, %v1332
        %vm1350 = vcmp.ne.s16.totalorder %v1334, 0
        %vm1351 = vcmp.ne.s16.totalorder %v1335, 0
        %vm1352 = vcmp.ne.s16.totalorder %v1336, 0
        %vm1353 = vcmp.ne.s16.totalorder %v1337, 0
        %vm1354 = vcmp.ne.s16.totalorder %v1338, 0
        %vm1355 = vcmp.ne.s16.totalorder %v1339, 0
        %vm1356 = vcmp.ne.s16.totalorder %v1340, 0
        %vm1357 = vcmp.ne.s16.totalorder %v1341, 0
        %vm1358 = vcmp.ne.s16.totalorder %v1342, 0
        %vm1359 = vcmp.ne.s16.totalorder %v1343, 0
        %vm1360 = vcmp.ne.s16.totalorder %v1344, 0
        %vm1361 = vcmp.ne.s16.totalorder %v1345, 0
        %vm1362 = vcmp.ne.s16.totalorder %v1346, 0
        %vm1363 = vcmp.ne.s16.totalorder %v1347, 0
        %vm1364 = vcmp.ne.s16.totalorder %v1348, 0
        %vm1365 = vcmp.ne.s16.totalorder %v1349, 0
        %v1366 = vsel %vm1350, %v1158, 0
        %v1367 = vsel %vm1351, %v1159, 0
        %v1368 = vsel %vm1352, %v1160, 0
        %v1369 = vsel %vm1353, %v1161, 0
        %v1370 = vsel %vm1354, %v1162, 0
        %v1371 = vsel %vm1355, %v1163, 0
        %v1372 = vsel %vm1356, %v1164, 0
        %v1373 = vsel %vm1357, %v1165, 0
        %v1374 = vsel %vm1358, %v1166, 0
        %v1375 = vsel %vm1359, %v1167, 0
        %v1376 = vsel %vm1360, %v1168, 0
        %v1377 = vsel %vm1361, %v1169, 0
        %v1378 = vsel %vm1362, %v1170, 0
        %v1379 = vsel %vm1363, %v1171, 0
        %v1380 = vsel %vm1364, %v1172, 0
        %v1381 = vsel %vm1365, %v1173, 0
        %v1382 = vld [vmem:[#allocation7] sm:$0xf]
        %v1383 = vld [vmem:[#allocation7 + $0x4] sm:$0xf]
        %v1384 = vld [vmem:[#allocation7 + $0x8] sm:$0xf]
        %v1385 = vld [vmem:[#allocation7 + $0xc] sm:$0xf]
        %v1386 = vld [vmem:[#allocation7 + $0x10] sm:$0xf]
        %v1387 = vld [vmem:[#allocation7 + $0x14] sm:$0xf]
        %v1388 = vld [vmem:[#allocation7 + $0x18] sm:$0xf]
        %v1389 = vld [vmem:[#allocation7 + $0x1c] sm:$0xf]
        %v1390 = vld [vmem:[#allocation7 + $0x20] sm:$0xf]
        %v1391 = vld [vmem:[#allocation7 + $0x24] sm:$0xf]
        %v1392 = vld [vmem:[#allocation7 + $0x28] sm:$0xf]
        %v1393 = vld [vmem:[#allocation7 + $0x2c] sm:$0xf]
        %v1394 = vld [vmem:[#allocation7 + $0x30] sm:$0xf]
        %v1395 = vld [vmem:[#allocation7 + $0x34] sm:$0xf]
        %v1396 = vld [vmem:[#allocation7 + $0x38] sm:$0xf]
        %v1397 = vld [vmem:[#allocation7 + $0x3c] sm:$0xf]
        %v1398 = vld [vmem:[#allocation7 + $0x40] sm:$0xf]
        %v1399 = vld [vmem:[#allocation7 + $0x44] sm:$0xf]
        %v1400 = vld [vmem:[#allocation7 + $0x48] sm:$0xf]
        %v1401 = vld [vmem:[#allocation7 + $0x4c] sm:$0xf]
        %v1402 = vld [vmem:[#allocation7 + $0x50] sm:$0xf]
        %v1403 = vld [vmem:[#allocation7 + $0x54] sm:$0xf]
        %v1404 = vld [vmem:[#allocation7 + $0x58] sm:$0xf]
        %v1405 = vld [vmem:[#allocation7 + $0x5c] sm:$0xf]
        %v1406 = vld [vmem:[#allocation7 + $0x60] sm:$0xf]
        %v1407 = vld [vmem:[#allocation7 + $0x64] sm:$0xf]
        %v1408 = vld [vmem:[#allocation7 + $0x68] sm:$0xf]
        %v1409 = vld [vmem:[#allocation7 + $0x6c] sm:$0xf]
        %v1410 = vld [vmem:[#allocation7 + $0x70] sm:$0xf]
        %v1411 = vld [vmem:[#allocation7 + $0x74] sm:$0xf]
        %v1412 = vld [vmem:[#allocation7 + $0x78] sm:$0xf]
        %v1413 = vld [vmem:[#allocation7 + $0x7c] sm:$0xf]
        %v1414 = vrot.slane %v704, 1
        %v1415 = vrot.slane %v705, 1
        %v1416 = vrot.slane %v706, 1
        %v1417 = vrot.slane %v707, 1
        %v1418 = vrot.slane %v708, 1
        %v1419 = vrot.slane %v709, 1
        %v1420 = vrot.slane %v710, 1
        %v1421 = vrot.slane %v711, 1
        %v1422 = vrot.slane %v712, 1
        %v1423 = vrot.slane %v713, 1
        %v1424 = vrot.slane %v714, 1
        %v1425 = vrot.slane %v715, 1
        %v1426 = vrot.slane %v716, 1
        %v1427 = vrot.slane %v717, 1
        %v1428 = vrot.slane %v718, 1
        %v1429 = vrot.slane %v719, 1
        %v1430 = vrot.slane %v720, 1
        %v1431 = vrot.slane %v721, 1
        %v1432 = vrot.slane %v722, 1
        %v1433 = vrot.slane %v723, 1
        %v1434 = vrot.slane %v724, 1
        %v1435 = vrot.slane %v725, 1
        %v1436 = vrot.slane %v726, 1
        %v1437 = vrot.slane %v727, 1
        %v1438 = vrot.slane %v728, 1
        %v1439 = vrot.slane %v729, 1
        %v1440 = vrot.slane %v730, 1
        %v1441 = vrot.slane %v731, 1
        %v1442 = vrot.slane %v732, 1
        %v1443 = vrot.slane %v733, 1
        %v1444 = vrot.slane %v734, 1
        %v1445 = vrot.slane %v735, 1
        %vm1446 = vcmp.lt.s32.totalorder %v737, 7
        %v1447 = vsel %vm1446, %v1444, %v1445
        %v1448 = vsel %vm1446, %v1443, %v1444
        %v1449 = vsel %vm1446, %v1442, %v1443
        %v1450 = vsel %vm1446, %v1441, %v1442
        %v1451 = vsel %vm1446, %v1440, %v1441
        %v1452 = vsel %vm1446, %v1439, %v1440
        %v1453 = vsel %vm1446, %v1438, %v1439
        %v1454 = vsel %vm1446, %v1437, %v1438
        %v1455 = vsel %vm1446, %v1436, %v1437
        %v1456 = vsel %vm1446, %v1435, %v1436
        %v1457 = vsel %vm1446, %v1434, %v1435
        %v1458 = vsel %vm1446, %v1433, %v1434
        %v1459 = vsel %vm1446, %v1432, %v1433
        %v1460 = vsel %vm1446, %v1431, %v1432
        %v1461 = vsel %vm1446, %v1430, %v1431
        %v1462 = vsel %vm1446, %v1429, %v1430
        %v1463 = vsel %vm1446, %v1428, %v1429
        %v1464 = vsel %vm1446, %v1427, %v1428
        %v1465 = vsel %vm1446, %v1426, %v1427
        %v1466 = vsel %vm1446, %v1425, %v1426
        %v1467 = vsel %vm1446, %v1424, %v1425
        %v1468 = vsel %vm1446, %v1423, %v1424
        %v1469 = vsel %vm1446, %v1422, %v1423
        %v1470 = vsel %vm1446, %v1421, %v1422
        %v1471 = vsel %vm1446, %v1420, %v1421
        %v1472 = vsel %vm1446, %v1419, %v1420
        %v1473 = vsel %vm1446, %v1418, %v1419
        %v1474 = vsel %vm1446, %v1417, %v1418
        %v1475 = vsel %vm1446, %v1416, %v1417
        %v1476 = vsel %vm1446, %v1415, %v1416
        %v1477 = vsel %vm1446, %v1414, %v1415
        %v1478 = vsel %vm1446, %v1445, %v1414
        %v1479 = vpack.c.bf16 %v1478, %v1447
        %v1480 = vpack.c.bf16 %v1476, %v1477
        %v1481 = vpack.c.bf16 %v1474, %v1475
        %v1482 = vpack.c.bf16 %v1472, %v1473
        %v1483 = vpack.c.bf16 %v1470, %v1471
        %v1484 = vpack.c.bf16 %v1468, %v1469
        %v1485 = vpack.c.bf16 %v1466, %v1467
        %v1486 = vpack.c.bf16 %v1464, %v1465
        %v1487 = vpack.c.bf16 %v1462, %v1463
        %v1488 = vpack.c.bf16 %v1460, %v1461
        %v1489 = vpack.c.bf16 %v1458, %v1459
        %v1490 = vpack.c.bf16 %v1456, %v1457
        %v1491 = vpack.c.bf16 %v1454, %v1455
        %v1492 = vpack.c.bf16 %v1452, %v1453
        %v1493 = vpack.c.bf16 %v1450, %v1451
        %v1494 = vpack.c.bf16 %v1448, %v1449
        %vm1495 = vmand %vm773, %vm771
        %vm1496 = vmand %vm774, %vm772
        %vm1497 = vmand %vm775, %vm771
        %vm1498 = vmand %vm776, %vm772
        %vm1499 = vmand %vm777, %vm771
        %vm1500 = vmand %vm778, %vm772
        %vm1501 = vmand %vm779, %vm771
        %vm1502 = vmand %vm780, %vm772
        %vm1503 = vmand %vm781, %vm771
        %vm1504 = vmand %vm782, %vm772
        %vm1505 = vmand %vm783, %vm771
        %vm1506 = vmand %vm784, %vm772
        %vm1507 = vmand %vm785, %vm771
        %vm1508 = vmand %vm786, %vm772
        %vm1509 = vmand %vm787, %vm771
        %vm1510 = vmand %vm788, %vm772
        %vm1511 = vmand %vm789, %vm771
        %vm1512 = vmand %vm790, %vm772
        %vm1513 = vmand %vm791, %vm771
        %vm1514 = vmand %vm792, %vm772
        %vm1515 = vmand %vm793, %vm771
        %vm1516 = vmand %vm794, %vm772
        %vm1517 = vmand %vm795, %vm771
        %vm1518 = vmand %vm796, %vm772
        %vm1519 = vmand %vm797, %vm771
        %vm1520 = vmand %vm798, %vm772
        %vm1521 = vmand %vm799, %vm771
        %vm1522 = vmand %vm800, %vm772
        %vm1523 = vmand %vm801, %vm771
        %vm1524 = vmand %vm802, %vm772
        %vm1525 = vmand %vm803, %vm771
        %vm1526 = vmand %vm804, %vm772
        %v1527 = vsel %vm1495, 1, 0
        %v1528 = vsel %vm1496, 1, 0
        %v1529 = vsel %vm1497, 1, 0
        %v1530 = vsel %vm1498, 1, 0
        %v1531 = vsel %vm1499, 1, 0
        %v1532 = vsel %vm1500, 1, 0
        %v1533 = vsel %vm1501, 1, 0
        %v1534 = vsel %vm1502, 1, 0
        %v1535 = vsel %vm1503, 1, 0
        %v1536 = vsel %vm1504, 1, 0
        %v1537 = vsel %vm1505, 1, 0
        %v1538 = vsel %vm1506, 1, 0
        %v1539 = vsel %vm1507, 1, 0
        %v1540 = vsel %vm1508, 1, 0
        %v1541 = vsel %vm1509, 1, 0
        %v1542 = vsel %vm1510, 1, 0
        %v1543 = vsel %vm1511, 1, 0
        %v1544 = vsel %vm1512, 1, 0
        %v1545 = vsel %vm1513, 1, 0
        %v1546 = vsel %vm1514, 1, 0
        %v1547 = vsel %vm1515, 1, 0
        %v1548 = vsel %vm1516, 1, 0
        %v1549 = vsel %vm1517, 1, 0
        %v1550 = vsel %vm1518, 1, 0
        %v1551 = vsel %vm1519, 1, 0
        %v1552 = vsel %vm1520, 1, 0
        %v1553 = vsel %vm1521, 1, 0
        %v1554 = vsel %vm1522, 1, 0
        %v1555 = vsel %vm1523, 1, 0
        %v1556 = vsel %vm1524, 1, 0
        %v1557 = vsel %vm1525, 1, 0
        %v1558 = vsel %vm1526, 1, 0
        %vm1559 = vcmp.eq.s32.totalorder %v1527, 1
        %vm1560 = vcmp.eq.s32.totalorder %v1528, 1
        %vm1561 = vcmp.eq.s32.totalorder %v1529, 1
        %vm1562 = vcmp.eq.s32.totalorder %v1530, 1
        %vm1563 = vcmp.eq.s32.totalorder %v1531, 1
        %vm1564 = vcmp.eq.s32.totalorder %v1532, 1
        %vm1565 = vcmp.eq.s32.totalorder %v1533, 1
        %vm1566 = vcmp.eq.s32.totalorder %v1534, 1
        %vm1567 = vcmp.eq.s32.totalorder %v1535, 1
        %vm1568 = vcmp.eq.s32.totalorder %v1536, 1
        %vm1569 = vcmp.eq.s32.totalorder %v1537, 1
        %vm1570 = vcmp.eq.s32.totalorder %v1538, 1
        %vm1571 = vcmp.eq.s32.totalorder %v1539, 1
        %vm1572 = vcmp.eq.s32.totalorder %v1540, 1
        %vm1573 = vcmp.eq.s32.totalorder %v1541, 1
        %vm1574 = vcmp.eq.s32.totalorder %v1542, 1
        %vm1575 = vcmp.eq.s32.totalorder %v1543, 1
        %vm1576 = vcmp.eq.s32.totalorder %v1544, 1
        %vm1577 = vcmp.eq.s32.totalorder %v1545, 1
        %vm1578 = vcmp.eq.s32.totalorder %v1546, 1
        %vm1579 = vcmp.eq.s32.totalorder %v1547, 1
        %vm1580 = vcmp.eq.s32.totalorder %v1548, 1
        %vm1581 = vcmp.eq.s32.totalorder %v1549, 1
        %vm1582 = vcmp.eq.s32.totalorder %v1550, 1
        %vm1583 = vcmp.eq.s32.totalorder %v1551, 1
        %vm1584 = vcmp.eq.s32.totalorder %v1552, 1
        %vm1585 = vcmp.eq.s32.totalorder %v1553, 1
        %vm1586 = vcmp.eq.s32.totalorder %v1554, 1
        %vm1587 = vcmp.eq.s32.totalorder %v1555, 1
        %vm1588 = vcmp.eq.s32.totalorder %v1556, 1
        %vm1589 = vcmp.eq.s32.totalorder %v1557, 1
        %vm1590 = vcmp.eq.s32.totalorder %v1558, 1
        %vm1591 = vmpackc.low %vm1559, %vm1559
        %vm1592 = vmpackc.low %vm1560, %vm1560
        %vm1593 = vmpackc.low %vm1561, %vm1561
        %vm1594 = vmpackc.low %vm1562, %vm1562
        %vm1595 = vmpackc.low %vm1563, %vm1563
        %vm1596 = vmpackc.low %vm1564, %vm1564
        %vm1597 = vmpackc.low %vm1565, %vm1565
        %vm1598 = vmpackc.low %vm1566, %vm1566
        %vm1599 = vmpackc.low %vm1567, %vm1567
        %vm1600 = vmpackc.low %vm1568, %vm1568
        %vm1601 = vmpackc.low %vm1569, %vm1569
        %vm1602 = vmpackc.low %vm1570, %vm1570
        %vm1603 = vmpackc.low %vm1571, %vm1571
        %vm1604 = vmpackc.low %vm1572, %vm1572
        %vm1605 = vmpackc.low %vm1573, %vm1573
        %vm1606 = vmpackc.low %vm1574, %vm1574
        %vm1607 = vmpackc.low %vm1575, %vm1575
        %vm1608 = vmpackc.low %vm1576, %vm1576
        %vm1609 = vmpackc.low %vm1577, %vm1577
        %vm1610 = vmpackc.low %vm1578, %vm1578
        %vm1611 = vmpackc.low %vm1579, %vm1579
        %vm1612 = vmpackc.low %vm1580, %vm1580
        %vm1613 = vmpackc.low %vm1581, %vm1581
        %vm1614 = vmpackc.low %vm1582, %vm1582
        %vm1615 = vmpackc.low %vm1583, %vm1583
        %vm1616 = vmpackc.low %vm1584, %vm1584
        %vm1617 = vmpackc.low %vm1585, %vm1585
        %vm1618 = vmpackc.low %vm1586, %vm1586
        %vm1619 = vmpackc.low %vm1587, %vm1587
        %vm1620 = vmpackc.low %vm1588, %vm1588
        %vm1621 = vmpackc.low %vm1589, %vm1589
        %vm1622 = vmpackc.low %vm1590, %vm1590
        %v1623 = vsel %vm1591, 65537, 0
        %v1624 = vsel %vm1592, 65537, 0
        %v1625 = vsel %vm1593, 65537, 0
        %v1626 = vsel %vm1594, 65537, 0
        %v1627 = vsel %vm1595, 65537, 0
        %v1628 = vsel %vm1596, 65537, 0
        %v1629 = vsel %vm1597, 65537, 0
        %v1630 = vsel %vm1598, 65537, 0
        %v1631 = vsel %vm1599, 65537, 0
        %v1632 = vsel %vm1600, 65537, 0
        %v1633 = vsel %vm1601, 65537, 0
        %v1634 = vsel %vm1602, 65537, 0
        %v1635 = vsel %vm1603, 65537, 0
        %v1636 = vsel %vm1604, 65537, 0
        %v1637 = vsel %vm1605, 65537, 0
        %v1638 = vsel %vm1606, 65537, 0
        %v1639 = vsel %vm1607, 65537, 0
        %v1640 = vsel %vm1608, 65537, 0
        %v1641 = vsel %vm1609, 65537, 0
        %v1642 = vsel %vm1610, 65537, 0
        %v1643 = vsel %vm1611, 65537, 0
        %v1644 = vsel %vm1612, 65537, 0
        %v1645 = vsel %vm1613, 65537, 0
        %v1646 = vsel %vm1614, 65537, 0
        %v1647 = vsel %vm1615, 65537, 0
        %v1648 = vsel %vm1616, 65537, 0
        %v1649 = vsel %vm1617, 65537, 0
        %v1650 = vsel %vm1618, 65537, 0
        %v1651 = vsel %vm1619, 65537, 0
        %v1652 = vsel %vm1620, 65537, 0
        %v1653 = vsel %vm1621, 65537, 0
        %v1654 = vsel %vm1622, 65537, 0
        %v1655 = vunpack.c.l.b16 %v1623
        %v1656 = vunpack.c.l.b16 %v1624
        %v1657 = vunpack.c.l.b16 %v1625
        %v1658 = vunpack.c.l.b16 %v1626
        %v1659 = vunpack.c.l.b16 %v1627
        %v1660 = vunpack.c.l.b16 %v1628
        %v1661 = vunpack.c.l.b16 %v1629
        %v1662 = vunpack.c.l.b16 %v1630
        %v1663 = vunpack.c.l.b16 %v1631
        %v1664 = vunpack.c.l.b16 %v1632
        %v1665 = vunpack.c.l.b16 %v1633
        %v1666 = vunpack.c.l.b16 %v1634
        %v1667 = vunpack.c.l.b16 %v1635
        %v1668 = vunpack.c.l.b16 %v1636
        %v1669 = vunpack.c.l.b16 %v1637
        %v1670 = vunpack.c.l.b16 %v1638
        %v1671 = vunpack.c.l.b16 %v1639
        %v1672 = vunpack.c.l.b16 %v1640
        %v1673 = vunpack.c.l.b16 %v1641
        %v1674 = vunpack.c.l.b16 %v1642
        %v1675 = vunpack.c.l.b16 %v1643
        %v1676 = vunpack.c.l.b16 %v1644
        %v1677 = vunpack.c.l.b16 %v1645
        %v1678 = vunpack.c.l.b16 %v1646
        %v1679 = vunpack.c.l.b16 %v1647
        %v1680 = vunpack.c.l.b16 %v1648
        %v1681 = vunpack.c.l.b16 %v1649
        %v1682 = vunpack.c.l.b16 %v1650
        %v1683 = vunpack.c.l.b16 %v1651
        %v1684 = vunpack.c.l.b16 %v1652
        %v1685 = vunpack.c.l.b16 %v1653
        %v1686 = vunpack.c.l.b16 %v1654
        %v1687 = vpack.c.b16 %v1656, %v1655
        %v1688 = vpack.c.b16 %v1658, %v1657
        %v1689 = vpack.c.b16 %v1660, %v1659
        %v1690 = vpack.c.b16 %v1662, %v1661
        %v1691 = vpack.c.b16 %v1664, %v1663
        %v1692 = vpack.c.b16 %v1666, %v1665
        %v1693 = vpack.c.b16 %v1668, %v1667
        %v1694 = vpack.c.b16 %v1670, %v1669
        %v1695 = vpack.c.b16 %v1672, %v1671
        %v1696 = vpack.c.b16 %v1674, %v1673
        %v1697 = vpack.c.b16 %v1676, %v1675
        %v1698 = vpack.c.b16 %v1678, %v1677
        %v1699 = vpack.c.b16 %v1680, %v1679
        %v1700 = vpack.c.b16 %v1682, %v1681
        %v1701 = vpack.c.b16 %v1684, %v1683
        %v1702 = vpack.c.b16 %v1686, %v1685
        %vm1703 = vcmp.ne.s16.totalorder %v1687, 0
        %vm1704 = vcmp.ne.s16.totalorder %v1688, 0
        %vm1705 = vcmp.ne.s16.totalorder %v1689, 0
        %vm1706 = vcmp.ne.s16.totalorder %v1690, 0
        %vm1707 = vcmp.ne.s16.totalorder %v1691, 0
        %vm1708 = vcmp.ne.s16.totalorder %v1692, 0
        %vm1709 = vcmp.ne.s16.totalorder %v1693, 0
        %vm1710 = vcmp.ne.s16.totalorder %v1694, 0
        %vm1711 = vcmp.ne.s16.totalorder %v1695, 0
        %vm1712 = vcmp.ne.s16.totalorder %v1696, 0
        %vm1713 = vcmp.ne.s16.totalorder %v1697, 0
        %vm1714 = vcmp.ne.s16.totalorder %v1698, 0
        %vm1715 = vcmp.ne.s16.totalorder %v1699, 0
        %vm1716 = vcmp.ne.s16.totalorder %v1700, 0
        %vm1717 = vcmp.ne.s16.totalorder %v1701, 0
        %vm1718 = vcmp.ne.s16.totalorder %v1702, 0
        %v1719 = vsel %vm1703, %v1479, 0
        %v1720 = vsel %vm1704, %v1480, 0
        %v1721 = vsel %vm1705, %v1481, 0
        %v1722 = vsel %vm1706, %v1482, 0
        %v1723 = vsel %vm1707, %v1483, 0
        %v1724 = vsel %vm1708, %v1484, 0
        %v1725 = vsel %vm1709, %v1485, 0
        %v1726 = vsel %vm1710, %v1486, 0
        %v1727 = vsel %vm1711, %v1487, 0
        %v1728 = vsel %vm1712, %v1488, 0
        %v1729 = vsel %vm1713, %v1489, 0
        %v1730 = vsel %vm1714, %v1490, 0
        %v1731 = vsel %vm1715, %v1491, 0
        %v1732 = vsel %vm1716, %v1492, 0
        %v1733 = vsel %vm1717, %v1493, 0
        %v1734 = vsel %vm1718, %v1494, 0
        %v1735 = vsel %vm769, 1, 0
        %v1736 = vsel %vm770, 1, 0
        %vm1737 = vcmp.eq.s32.totalorder %v1735, 1
        %vm1738 = vcmp.eq.s32.totalorder %v1736, 1
        %vm1739 = vmpackc.low %vm1737, %vm1737
        %vm1740 = vmpackc.low %vm1738, %vm1738
        %v1741 = vsel %vm1739, 65537, 0
        %v1742 = vsel %vm1740, 65537, 0
        %v1743 = vunpack.c.l.b16 %v1741
        %v1744 = vunpack.c.l.b16 %v1742
        %v1745 = vpack.c.b16 %v1744, %v1743
        %vm1746 = vcmp.ne.s16.totalorder %v1745, 0
        %v1747 = vsel %vm1746, %v903, 0
        %v1748 = vsel %vm1746, %v904, 0
        %v1749 = vsel %vm1746, %v905, 0
        %v1750 = vsel %vm1746, %v906, 0
        %v1751 = vsel %vm1746, %v907, 0
        %v1752 = vsel %vm1746, %v908, 0
        %v1753 = vsel %vm1746, %v909, 0
        %v1754 = vsel %vm1746, %v910, 0
        %v1755 = vsel %vm1746, %v911, 0
        %v1756 = vsel %vm1746, %v912, 0
        %v1757 = vsel %vm1746, %v913, 0
        %v1758 = vsel %vm1746, %v914, 0
        %v1759 = vsel %vm1746, %v915, 0
        %v1760 = vsel %vm1746, %v916, 0
        %v1761 = vsel %vm1746, %v917, 0
        %v1762 = vsel %vm1746, %v902, 0
        %v1763 = vld [vmem:[#allocation7 + $0x80] sm:$0xf]
        %v1764 = vld [vmem:[#allocation7 + $0x84] sm:$0xf]
        %v1765 = vld [vmem:[#allocation7 + $0x88] sm:$0xf]
        %v1766 = vld [vmem:[#allocation7 + $0x8c] sm:$0xf]
        %v1767 = vld [vmem:[#allocation7 + $0x90] sm:$0xf]
        %v1768 = vld [vmem:[#allocation7 + $0x94] sm:$0xf]
        %v1769 = vld [vmem:[#allocation7 + $0x98] sm:$0xf]
        %v1770 = vld [vmem:[#allocation7 + $0x9c] sm:$0xf]
        %v1771 = vld [vmem:[#allocation7 + $0xa0] sm:$0xf]
        %v1772 = vld [vmem:[#allocation7 + $0xa4] sm:$0xf]
        %v1773 = vld [vmem:[#allocation7 + $0xa8] sm:$0xf]
        %v1774 = vld [vmem:[#allocation7 + $0xac] sm:$0xf]
        %v1775 = vld [vmem:[#allocation7 + $0xb0] sm:$0xf]
        %v1776 = vld [vmem:[#allocation7 + $0xb4] sm:$0xf]
        %v1777 = vld [vmem:[#allocation7 + $0xb8] sm:$0xf]
        %v1778 = vld [vmem:[#allocation7 + $0xbc] sm:$0xf]
        %v1779 = vld [vmem:[#allocation7 + $0xc0] sm:$0xf]
        %v1780 = vld [vmem:[#allocation7 + $0xc4] sm:$0xf]
        %v1781 = vld [vmem:[#allocation7 + $0xc8] sm:$0xf]
        %v1782 = vld [vmem:[#allocation7 + $0xcc] sm:$0xf]
        %v1783 = vld [vmem:[#allocation7 + $0xd0] sm:$0xf]
        %v1784 = vld [vmem:[#allocation7 + $0xd4] sm:$0xf]
        %v1785 = vld [vmem:[#allocation7 + $0xd8] sm:$0xf]
        %v1786 = vld [vmem:[#allocation7 + $0xdc] sm:$0xf]
        %v1787 = vld [vmem:[#allocation7 + $0xe0] sm:$0xf]
        %v1788 = vld [vmem:[#allocation7 + $0xe4] sm:$0xf]
        %v1789 = vld [vmem:[#allocation7 + $0xe8] sm:$0xf]
        %v1790 = vld [vmem:[#allocation7 + $0xec] sm:$0xf]
        %v1791 = vld [vmem:[#allocation7 + $0xf0] sm:$0xf]
        %v1792 = vld [vmem:[#allocation7 + $0xf4] sm:$0xf]
        %v1793 = vld [vmem:[#allocation7 + $0xf8] sm:$0xf]
        %v1794 = vld [vmem:[#allocation7 + $0xfc] sm:$0xf]
        %v1827 = vunpack.c.l.b16 %v1763
        %v1828 = vunpack.c.l.b16 %v1764
        %v1829 = vunpack.c.l.b16 %v1765
        %v1830 = vunpack.c.l.b16 %v1766
        %v1831 = vunpack.c.l.b16 %v1767
        %v1832 = vunpack.c.l.b16 %v1768
        %v1833 = vunpack.c.l.b16 %v1769
        %v1834 = vunpack.c.l.b16 %v1770
        %v1835 = vunpack.c.l.b16 %v1771
        %v1836 = vunpack.c.l.b16 %v1772
        %v1837 = vunpack.c.l.b16 %v1773
        %v1838 = vunpack.c.l.b16 %v1774
        %v1839 = vunpack.c.l.b16 %v1775
        %v1840 = vunpack.c.l.b16 %v1776
        %v1841 = vunpack.c.l.b16 %v1777
        %v1842 = vunpack.c.l.b16 %v1778
        %v1843 = vunpack.c.l.b16 %v1779
        %v1844 = vunpack.c.l.b16 %v1780
        %v1845 = vunpack.c.l.b16 %v1781
        %v1846 = vunpack.c.l.b16 %v1782
        %v1847 = vunpack.c.l.b16 %v1783
        %v1848 = vunpack.c.l.b16 %v1784
        %v1849 = vunpack.c.l.b16 %v1785
        %v1850 = vunpack.c.l.b16 %v1786
        %v1851 = vunpack.c.l.b16 %v1787
        %v1852 = vunpack.c.l.b16 %v1788
        %v1853 = vunpack.c.l.b16 %v1789
        %v1854 = vunpack.c.l.b16 %v1790
        %v1855 = vunpack.c.l.b16 %v1791
        %v1856 = vunpack.c.l.b16 %v1792
        %v1857 = vunpack.c.l.b16 %v1793
        %v1858 = vunpack.c.l.b16 %v1794
        %v1859 = vpack.c.b16 %v1828, %v1827
        %v1860 = vpack.c.b16 %v1830, %v1829
        %v1861 = vpack.c.b16 %v1832, %v1831
        %v1862 = vpack.c.b16 %v1834, %v1833
        %v1863 = vpack.c.b16 %v1836, %v1835
        %v1864 = vpack.c.b16 %v1838, %v1837
        %v1865 = vpack.c.b16 %v1840, %v1839
        %v1866 = vpack.c.b16 %v1842, %v1841
        %v1867 = vpack.c.b16 %v1844, %v1843
        %v1868 = vpack.c.b16 %v1846, %v1845
        %v1869 = vpack.c.b16 %v1848, %v1847
        %v1870 = vpack.c.b16 %v1850, %v1849
        %v1871 = vpack.c.b16 %v1852, %v1851
        %v1872 = vpack.c.b16 %v1854, %v1853
        %v1873 = vpack.c.b16 %v1856, %v1855
        %v1874 = vpack.c.b16 %v1858, %v1857
        %1891 = vmatprep.subr.bf16.mxu0 0
        %1892 = vmatpush1.bf16.msra.mxu0 %v1859
        %1893 = vmatprep.subr.bf16.mxu0 0
        %1894 = vmatpush1.bf16.msra.mxu0 %v1860
        %1895 = vmatprep.subr.bf16.mxu0 0
        %1896 = vmatpush1.bf16.msra.mxu0 %v1861
        %1897 = vmatprep.subr.bf16.mxu0 0
        %1898 = vmatpush1.bf16.msra.mxu0 %v1862
        %1899 = vmatprep.subr.bf16.mxu0 0
        %1900 = vmatpush1.bf16.msra.mxu0 %v1863
        %1901 = vmatprep.subr.bf16.mxu0 0
        %1902 = vmatpush1.bf16.msra.mxu0 %v1864
        %1903 = vmatprep.subr.bf16.mxu0 0
        %1904 = vmatpush1.bf16.msra.mxu0 %v1865
        %1905 = vmatprep.subr.bf16.mxu0 0
        %1906 = vmatpush1.bf16.msra.mxu0 %v1866
        %1907 = vmatprep.subr.bf16.mxu0 0
        %1908 = vmatpush1.bf16.msra.mxu0 %v1867
        %1909 = vmatprep.subr.bf16.mxu0 0
        %1910 = vmatpush1.bf16.msra.mxu0 %v1868
        %1911 = vmatprep.subr.bf16.mxu0 0
        %1912 = vmatpush1.bf16.msra.mxu0 %v1869
        %1913 = vmatprep.subr.bf16.mxu0 0
        %1914 = vmatpush1.bf16.msra.mxu0 %v1870
        %1915 = vmatprep.subr.bf16.mxu0 0
        %1916 = vmatpush1.bf16.msra.mxu0 %v1871
        %1917 = vmatprep.subr.bf16.mxu0 0
        %1918 = vmatpush1.bf16.msra.mxu0 %v1872
        %1919 = vmatprep.subr.bf16.mxu0 0
        %1920 = vmatpush1.bf16.msra.mxu0 %v1873
        %1921 = vmatprep.subr.bf16.mxu0 0
        %1922 = vmatpush1.bf16.msra.mxu0 %v1874
        %1923 = vmatprep.mubr.bf16.mxu0 %v1747
        %1924 = vmatmul.mubr.bf16.gmra.mrb[0].mxu0 %v1719
        %v1925 = vpop.f32.mrb[0].mxu0
        %v1926 = vadd.f32 0.0, %v1925
        %v1927 = vpop.f32.mrb[0].mxu0
        %v1928 = vpop.f32.mrb[0].mxu0
        %v1929 = vadd.f32 0.0, %v1928
        %v1930 = vpop.f32.mrb[0].mxu0
        %1931 = vmatprep.mubr.bf16.mxu0 %v1748
        %1932 = vmatmul.mubr.bf16.gmra.mrb[0].mxu0 %v1720
        %v1933 = vpop.f32.mrb[0].mxu0
        %v1934 = vadd.f32 0.0, %v1933
        %v1935 = vpop.f32.mrb[0].mxu0
        %v1936 = vpop.f32.mrb[0].mxu0
        %v1937 = vadd.f32 0.0, %v1936
        %v1938 = vpop.f32.mrb[0].mxu0
        %1939 = vmatprep.mubr.bf16.mxu0 %v1749
        %1940 = vmatmul.mubr.bf16.gmra.mrb[0].mxu0 %v1721
        %v1941 = vpop.f32.mrb[0].mxu0
        %v1942 = vadd.f32 0.0, %v1941
        %v1943 = vpop.f32.mrb[0].mxu0
        %v1944 = vpop.f32.mrb[0].mxu0
        %v1945 = vadd.f32 0.0, %v1944
        %v1946 = vpop.f32.mrb[0].mxu0
        %1947 = vmatprep.mubr.bf16.mxu0 %v1750
        %1948 = vmatmul.mubr.bf16.gmra.mrb[0].mxu0 %v1722
        %v1949 = vpop.f32.mrb[0].mxu0
        %v1950 = vadd.f32 0.0, %v1949
        %v1951 = vpop.f32.mrb[0].mxu0
        %v1952 = vpop.f32.mrb[0].mxu0
        %v1953 = vadd.f32 0.0, %v1952
        %v1954 = vpop.f32.mrb[0].mxu0
        %1955 = vmatprep.mubr.bf16.mxu0 %v1751
        %1956 = vmatmul.mubr.bf16.gmra.mrb[0].mxu0 %v1723
        %v1957 = vpop.f32.mrb[0].mxu0
        %v1958 = vadd.f32 0.0, %v1957
        %v1959 = vpop.f32.mrb[0].mxu0
        %v1960 = vpop.f32.mrb[0].mxu0
        %v1961 = vadd.f32 0.0, %v1960
        %v1962 = vpop.f32.mrb[0].mxu0
        %1963 = vmatprep.mubr.bf16.mxu0 %v1752
        %1964 = vmatmul.mubr.bf16.gmra.mrb[0].mxu0 %v1724
        %v1965 = vpop.f32.mrb[0].mxu0
        %v1966 = vadd.f32 0.0, %v1965
        %v1967 = vpop.f32.mrb[0].mxu0
        %v1968 = vpop.f32.mrb[0].mxu0
        %v1969 = vadd.f32 0.0, %v1968
        %v1970 = vpop.f32.mrb[0].mxu0
        %1971 = vmatprep.mubr.bf16.mxu0 %v1753
        %1972 = vmatmul.mubr.bf16.gmra.mrb[0].mxu0 %v1725
        %v1973 = vpop.f32.mrb[0].mxu0
        %v1974 = vadd.f32 0.0, %v1973
        %v1975 = vpop.f32.mrb[0].mxu0
        %v1976 = vpop.f32.mrb[0].mxu0
        %v1977 = vadd.f32 0.0, %v1976
        %v1978 = vpop.f32.mrb[0].mxu0
        %1979 = vmatprep.mubr.bf16.mxu0 %v1754
        %1980 = vmatmul.mubr.bf16.gmra.mrb[0].mxu0 %v1726
        %v1981 = vpop.f32.mrb[0].mxu0
        %v1982 = vadd.f32 0.0, %v1981
        %v1983 = vpop.f32.mrb[0].mxu0
        %v1984 = vpop.f32.mrb[0].mxu0
        %v1985 = vadd.f32 0.0, %v1984
        %v1986 = vpop.f32.mrb[0].mxu0
        %1987 = vmatprep.mubr.bf16.mxu0 %v1755
        %1988 = vmatmul.mubr.bf16.gmra.mrb[0].mxu0 %v1727
        %v1989 = vpop.f32.mrb[0].mxu0
        %v1990 = vadd.f32 0.0, %v1989
        %v1991 = vpop.f32.mrb[0].mxu0
        %v1992 = vpop.f32.mrb[0].mxu0
        %v1993 = vadd.f32 0.0, %v1992
        %v1994 = vpop.f32.mrb[0].mxu0
        %1995 = vmatprep.mubr.bf16.mxu0 %v1756
        %1996 = vmatmul.mubr.bf16.gmra.mrb[0].mxu0 %v1728
        %v1997 = vpop.f32.mrb[0].mxu0
        %v1998 = vadd.f32 0.0, %v1997
        %v1999 = vpop.f32.mrb[0].mxu0
        %v2000 = vpop.f32.mrb[0].mxu0
        %v2001 = vadd.f32 0.0, %v2000
        %v2002 = vpop.f32.mrb[0].mxu0
        %2003 = vmatprep.mubr.bf16.mxu0 %v1757
        %2004 = vmatmul.mubr.bf16.gmra.mrb[0].mxu0 %v1729
        %v2005 = vpop.f32.mrb[0].mxu0
        %v2006 = vadd.f32 0.0, %v2005
        %v2007 = vpop.f32.mrb[0].mxu0
        %v2008 = vpop.f32.mrb[0].mxu0
        %v2009 = vadd.f32 0.0, %v2008
        %v2010 = vpop.f32.mrb[0].mxu0
        %2011 = vmatprep.mubr.bf16.mxu0 %v1758
        %2012 = vmatmul.mubr.bf16.gmra.mrb[0].mxu0 %v1730
        %v2013 = vpop.f32.mrb[0].mxu0
        %v2014 = vadd.f32 0.0, %v2013
        %v2015 = vpop.f32.mrb[0].mxu0
        %v2016 = vpop.f32.mrb[0].mxu0
        %v2017 = vadd.f32 0.0, %v2016
        %v2018 = vpop.f32.mrb[0].mxu0
        %2019 = vmatprep.mubr.bf16.mxu0 %v1759
        %2020 = vmatmul.mubr.bf16.gmra.mrb[0].mxu0 %v1731
        %v2021 = vpop.f32.mrb[0].mxu0
        %v2022 = vadd.f32 0.0, %v2021
        %v2023 = vpop.f32.mrb[0].mxu0
        %v2024 = vpop.f32.mrb[0].mxu0
        %v2025 = vadd.f32 0.0, %v2024
        %v2026 = vpop.f32.mrb[0].mxu0
        %2027 = vmatprep.mubr.bf16.mxu0 %v1760
        %2028 = vmatmul.mubr.bf16.gmra.mrb[0].mxu0 %v1732
        %v2029 = vpop.f32.mrb[0].mxu0
        %v2030 = vadd.f32 0.0, %v2029
        %v2031 = vpop.f32.mrb[0].mxu0
        %v2032 = vpop.f32.mrb[0].mxu0
        %v2033 = vadd.f32 0.0, %v2032
        %v2034 = vpop.f32.mrb[0].mxu0
        %2035 = vmatprep.mubr.bf16.mxu0 %v1761
        %2036 = vmatmul.mubr.bf16.gmra.mrb[0].mxu0 %v1733
        %v2037 = vpop.f32.mrb[0].mxu0
        %v2038 = vadd.f32 0.0, %v2037
        %v2039 = vpop.f32.mrb[0].mxu0
        %v2040 = vpop.f32.mrb[0].mxu0
        %v2041 = vadd.f32 0.0, %v2040
        %v2042 = vpop.f32.mrb[0].mxu0
        %2043 = vmatprep.mubr.bf16.mxu0 %v1762
        %2044 = vmatmul.mubr.bf16.gmra.mrb[0].mxu0 %v1734
        %v2045 = vpop.f32.mrb[0].mxu0
        %v2046 = vadd.f32 0.0, %v2045
        %v2047 = vpop.f32.mrb[0].mxu0
        %v2048 = vpop.f32.mrb[0].mxu0
        %v2049 = vadd.f32 0.0, %v2048
        %v2050 = vpop.f32.mrb[0].mxu0
        %2051 = vdwg.mxu0
        %v2084 = vunpack.c.l.b16 %v1382
        %v2085 = vunpack.c.l.b16 %v1383
        %v2086 = vunpack.c.l.b16 %v1384
        %v2087 = vunpack.c.l.b16 %v1385
        %v2088 = vunpack.c.l.b16 %v1386
        %v2089 = vunpack.c.l.b16 %v1387
        %v2090 = vunpack.c.l.b16 %v1388
        %v2091 = vunpack.c.l.b16 %v1389
        %v2092 = vunpack.c.l.b16 %v1390
        %v2093 = vunpack.c.l.b16 %v1391
        %v2094 = vunpack.c.l.b16 %v1392
        %v2095 = vunpack.c.l.b16 %v1393
        %v2096 = vunpack.c.l.b16 %v1394
        %v2097 = vunpack.c.l.b16 %v1395
        %v2098 = vunpack.c.l.b16 %v1396
        %v2099 = vunpack.c.l.b16 %v1397
        %v2100 = vunpack.c.l.b16 %v1398
        %v2101 = vunpack.c.l.b16 %v1399
        %v2102 = vunpack.c.l.b16 %v1400
        %v2103 = vunpack.c.l.b16 %v1401
        %v2104 = vunpack.c.l.b16 %v1402
        %v2105 = vunpack.c.l.b16 %v1403
        %v2106 = vunpack.c.l.b16 %v1404
        %v2107 = vunpack.c.l.b16 %v1405
        %v2108 = vunpack.c.l.b16 %v1406
        %v2109 = vunpack.c.l.b16 %v1407
        %v2110 = vunpack.c.l.b16 %v1408
        %v2111 = vunpack.c.l.b16 %v1409
        %v2112 = vunpack.c.l.b16 %v1410
        %v2113 = vunpack.c.l.b16 %v1411
        %v2114 = vunpack.c.l.b16 %v1412
        %v2115 = vunpack.c.l.b16 %v1413
        %v2116 = vpack.c.b16 %v2085, %v2084
        %v2117 = vpack.c.b16 %v2087, %v2086
        %v2118 = vpack.c.b16 %v2089, %v2088
        %v2119 = vpack.c.b16 %v2091, %v2090
        %v2120 = vpack.c.b16 %v2093, %v2092
        %v2121 = vpack.c.b16 %v2095, %v2094
        %v2122 = vpack.c.b16 %v2097, %v2096
        %v2123 = vpack.c.b16 %v2099, %v2098
        %v2124 = vpack.c.b16 %v2101, %v2100
        %v2125 = vpack.c.b16 %v2103, %v2102
        %v2126 = vpack.c.b16 %v2105, %v2104
        %v2127 = vpack.c.b16 %v2107, %v2106
        %v2128 = vpack.c.b16 %v2109, %v2108
        %v2129 = vpack.c.b16 %v2111, %v2110
        %v2130 = vpack.c.b16 %v2113, %v2112
        %v2131 = vpack.c.b16 %v2115, %v2114
        %2148 = vmatprep.subr.bf16.mxu0 0
        %2149 = vmatpush1.bf16.msra.mxu0 %v2116
        %2150 = vmatprep.subr.bf16.mxu0 0
        %2151 = vmatpush1.bf16.msra.mxu0 %v2117
        %2152 = vmatprep.subr.bf16.mxu0 0
        %2153 = vmatpush1.bf16.msra.mxu0 %v2118
        %2154 = vmatprep.subr.bf16.mxu0 0
        %2155 = vmatpush1.bf16.msra.mxu0 %v2119
        %2156 = vmatprep.subr.bf16.mxu0 0
        %2157 = vmatpush1.bf16.msra.mxu0 %v2120
        %2158 = vmatprep.subr.bf16.mxu0 0
        %2159 = vmatpush1.bf16.msra.mxu0 %v2121
        %2160 = vmatprep.subr.bf16.mxu0 0
        %2161 = vmatpush1.bf16.msra.mxu0 %v2122
        %2162 = vmatprep.subr.bf16.mxu0 0
        %2163 = vmatpush1.bf16.msra.mxu0 %v2123
        %2164 = vmatprep.subr.bf16.mxu0 0
        %2165 = vmatpush1.bf16.msra.mxu0 %v2124
        %2166 = vmatprep.subr.bf16.mxu0 0
        %2167 = vmatpush1.bf16.msra.mxu0 %v2125
        %2168 = vmatprep.subr.bf16.mxu0 0
        %2169 = vmatpush1.bf16.msra.mxu0 %v2126
        %2170 = vmatprep.subr.bf16.mxu0 0
        %2171 = vmatpush1.bf16.msra.mxu0 %v2127
        %2172 = vmatprep.subr.bf16.mxu0 0
        %2173 = vmatpush1.bf16.msra.mxu0 %v2128
        %2174 = vmatprep.subr.bf16.mxu0 0
        %2175 = vmatpush1.bf16.msra.mxu0 %v2129
        %2176 = vmatprep.subr.bf16.mxu0 0
        %2177 = vmatpush1.bf16.msra.mxu0 %v2130
        %2178 = vmatprep.subr.bf16.mxu0 0
        %2179 = vmatpush1.bf16.msra.mxu0 %v2131
        %2180 = vmatprep.mubr.bf16.mxu0 %v1366
        %2181 = vmatmul.mubr.bf16.gmra.mrb[0].mxu0 %v1142
        %v2182 = vpop.f32.mrb[0].mxu0
        %v2183 = vadd.f32 %v1926, %v2182
        %v2184 = vpop.f32.mrb[0].mxu0
        %v2185 = vpop.f32.mrb[0].mxu0
        %v2186 = vadd.f32 %v1929, %v2185
        %v2187 = vpop.f32.mrb[0].mxu0
        %2188 = vmatprep.mubr.bf16.mxu0 %v1367
        %2189 = vmatmul.mubr.bf16.gmra.mrb[0].mxu0 %v1143
        %v2190 = vpop.f32.mrb[0].mxu0
        %v2191 = vadd.f32 %v1934, %v2190
        %v2192 = vpop.f32.mrb[0].mxu0
        %v2193 = vpop.f32.mrb[0].mxu0
        %v2194 = vadd.f32 %v1937, %v2193
        %v2195 = vpop.f32.mrb[0].mxu0
        %2196 = vmatprep.mubr.bf16.mxu0 %v1368
        %2197 = vmatmul.mubr.bf16.gmra.mrb[0].mxu0 %v1144
        %v2198 = vpop.f32.mrb[0].mxu0
        %v2199 = vadd.f32 %v1942, %v2198
        %v2200 = vpop.f32.mrb[0].mxu0
        %v2201 = vpop.f32.mrb[0].mxu0
        %v2202 = vadd.f32 %v1945, %v2201
        %v2203 = vpop.f32.mrb[0].mxu0
        %2204 = vmatprep.mubr.bf16.mxu0 %v1369
        %2205 = vmatmul.mubr.bf16.gmra.mrb[0].mxu0 %v1145
        %v2206 = vpop.f32.mrb[0].mxu0
        %v2207 = vadd.f32 %v1950, %v2206
        %v2208 = vpop.f32.mrb[0].mxu0
        %v2209 = vpop.f32.mrb[0].mxu0
        %v2210 = vadd.f32 %v1953, %v2209
        %v2211 = vpop.f32.mrb[0].mxu0
        %2212 = vmatprep.mubr.bf16.mxu0 %v1370
        %2213 = vmatmul.mubr.bf16.gmra.mrb[0].mxu0 %v1146
        %v2214 = vpop.f32.mrb[0].mxu0
        %v2215 = vadd.f32 %v1958, %v2214
        %v2216 = vpop.f32.mrb[0].mxu0
        %v2217 = vpop.f32.mrb[0].mxu0
        %v2218 = vadd.f32 %v1961, %v2217
        %v2219 = vpop.f32.mrb[0].mxu0
        %2220 = vmatprep.mubr.bf16.mxu0 %v1371
        %2221 = vmatmul.mubr.bf16.gmra.mrb[0].mxu0 %v1147
        %v2222 = vpop.f32.mrb[0].mxu0
        %v2223 = vadd.f32 %v1966, %v2222
        %v2224 = vpop.f32.mrb[0].mxu0
        %v2225 = vpop.f32.mrb[0].mxu0
        %v2226 = vadd.f32 %v1969, %v2225
        %v2227 = vpop.f32.mrb[0].mxu0
        %2228 = vmatprep.mubr.bf16.mxu0 %v1372
        %2229 = vmatmul.mubr.bf16.gmra.mrb[0].mxu0 %v1148
        %v2230 = vpop.f32.mrb[0].mxu0
        %v2231 = vadd.f32 %v1974, %v2230
        %v2232 = vpop.f32.mrb[0].mxu0
        %v2233 = vpop.f32.mrb[0].mxu0
        %v2234 = vadd.f32 %v1977, %v2233
        %v2235 = vpop.f32.mrb[0].mxu0
        %2236 = vmatprep.mubr.bf16.mxu0 %v1373
        %2237 = vmatmul.mubr.bf16.gmra.mrb[0].mxu0 %v1149
        %v2238 = vpop.f32.mrb[0].mxu0
        %v2239 = vadd.f32 %v1982, %v2238
        %v2240 = vpop.f32.mrb[0].mxu0
        %v2241 = vpop.f32.mrb[0].mxu0
        %v2242 = vadd.f32 %v1985, %v2241
        %v2243 = vpop.f32.mrb[0].mxu0
        %2244 = vmatprep.mubr.bf16.mxu0 %v1374
        %2245 = vmatmul.mubr.bf16.gmra.mrb[0].mxu0 %v1150
        %v2246 = vpop.f32.mrb[0].mxu0
        %v2247 = vadd.f32 %v1990, %v2246
        %v2248 = vpop.f32.mrb[0].mxu0
        %v2249 = vpop.f32.mrb[0].mxu0
        %v2250 = vadd.f32 %v1993, %v2249
        %v2251 = vpop.f32.mrb[0].mxu0
        %2252 = vmatprep.mubr.bf16.mxu0 %v1375
        %2253 = vmatmul.mubr.bf16.gmra.mrb[0].mxu0 %v1151
        %v2254 = vpop.f32.mrb[0].mxu0
        %v2255 = vadd.f32 %v1998, %v2254
        %v2256 = vpop.f32.mrb[0].mxu0
        %v2257 = vpop.f32.mrb[0].mxu0
        %v2258 = vadd.f32 %v2001, %v2257
        %v2259 = vpop.f32.mrb[0].mxu0
        %2260 = vmatprep.mubr.bf16.mxu0 %v1376
        %2261 = vmatmul.mubr.bf16.gmra.mrb[0].mxu0 %v1152
        %v2262 = vpop.f32.mrb[0].mxu0
        %v2263 = vadd.f32 %v2006, %v2262
        %v2264 = vpop.f32.mrb[0].mxu0
        %v2265 = vpop.f32.mrb[0].mxu0
        %v2266 = vadd.f32 %v2009, %v2265
        %v2267 = vpop.f32.mrb[0].mxu0
        %2268 = vmatprep.mubr.bf16.mxu0 %v1377
        %2269 = vmatmul.mubr.bf16.gmra.mrb[0].mxu0 %v1153
        %v2270 = vpop.f32.mrb[0].mxu0
        %v2271 = vadd.f32 %v2014, %v2270
        %v2272 = vpop.f32.mrb[0].mxu0
        %v2273 = vpop.f32.mrb[0].mxu0
        %v2274 = vadd.f32 %v2017, %v2273
        %v2275 = vpop.f32.mrb[0].mxu0
        %2276 = vmatprep.mubr.bf16.mxu0 %v1378
        %2277 = vmatmul.mubr.bf16.gmra.mrb[0].mxu0 %v1154
        %v2278 = vpop.f32.mrb[0].mxu0
        %v2279 = vadd.f32 %v2022, %v2278
        %v2280 = vpop.f32.mrb[0].mxu0
        %v2281 = vpop.f32.mrb[0].mxu0
        %v2282 = vadd.f32 %v2025, %v2281
        %v2283 = vpop.f32.mrb[0].mxu0
        %2284 = vmatprep.mubr.bf16.mxu0 %v1379
        %2285 = vmatmul.mubr.bf16.gmra.mrb[0].mxu0 %v1155
        %v2286 = vpop.f32.mrb[0].mxu0
        %v2287 = vadd.f32 %v2030, %v2286
        %v2288 = vpop.f32.mrb[0].mxu0
        %v2289 = vpop.f32.mrb[0].mxu0
        %v2290 = vadd.f32 %v2033, %v2289
        %v2291 = vpop.f32.mrb[0].mxu0
        %2292 = vmatprep.mubr.bf16.mxu0 %v1380
        %2293 = vmatmul.mubr.bf16.gmra.mrb[0].mxu0 %v1156
        %v2294 = vpop.f32.mrb[0].mxu0
        %v2295 = vadd.f32 %v2038, %v2294
        %v2296 = vpop.f32.mrb[0].mxu0
        %v2297 = vpop.f32.mrb[0].mxu0
        %v2298 = vadd.f32 %v2041, %v2297
        %v2299 = vpop.f32.mrb[0].mxu0
        %2300 = vmatprep.mubr.bf16.mxu0 %v1381
        %2301 = vmatmul.mubr.bf16.gmra.mrb[0].mxu0 %v1157
        %v2302 = vpop.f32.mrb[0].mxu0
        %v2303 = vadd.f32 %v2046, %v2302
        %v2304 = vpop.f32.mrb[0].mxu0
        %v2305 = vpop.f32.mrb[0].mxu0
        %v2306 = vadd.f32 %v2049, %v2305
        %v2307 = vpop.f32.mrb[0].mxu0
        %2308 = vdwg.mxu0
        %v2309 = vsel %vm771, 1, 0
        %v2310 = vsel %vm772, 1, 0
        %vm2311 = vcmp.eq.s32.totalorder %v2309, 1
        %vm2312 = vcmp.eq.s32.totalorder %v2310, 1
        %vm2313 = vmpackc.low %vm2311, %vm2311
        %vm2314 = vmpackc.low %vm2312, %vm2312
        %v2315 = vsel %vm2313, 65537, 0
        %v2316 = vsel %vm2314, 65537, 0
        %v2317 = vunpack.c.l.b16 %v2315
        %v2318 = vunpack.c.l.b16 %v2316
        %v2319 = vpack.c.b16 %v2318, %v2317
        %vm2320 = vcmp.ne.s16.totalorder %v2319, 0
        %v2321 = vsel %vm2320, %v1480, 0
        %v2322 = vsel %vm2320, %v1481, 0
        %v2323 = vsel %vm2320, %v1482, 0
        %v2324 = vsel %vm2320, %v1483, 0
        %v2325 = vsel %vm2320, %v1484, 0
        %v2326 = vsel %vm2320, %v1485, 0
        %v2327 = vsel %vm2320, %v1486, 0
        %v2328 = vsel %vm2320, %v1487, 0
        %v2329 = vsel %vm2320, %v1488, 0
        %v2330 = vsel %vm2320, %v1489, 0
        %v2331 = vsel %vm2320, %v1490, 0
        %v2332 = vsel %vm2320, %v1491, 0
        %v2333 = vsel %vm2320, %v1492, 0
        %v2334 = vsel %vm2320, %v1493, 0
        %v2335 = vsel %vm2320, %v1494, 0
        %v2336 = vsel %vm2320, %v1479, 0
        %v2337 = vld [vmem:[#allocation7 + $0x100] sm:$0xf]
        %v2338 = vld [vmem:[#allocation7 + $0x104] sm:$0xf]
        %v2339 = vld [vmem:[#allocation7 + $0x108] sm:$0xf]
        %v2340 = vld [vmem:[#allocation7 + $0x10c] sm:$0xf]
        %v2341 = vld [vmem:[#allocation7 + $0x110] sm:$0xf]
        %v2342 = vld [vmem:[#allocation7 + $0x114] sm:$0xf]
        %v2343 = vld [vmem:[#allocation7 + $0x118] sm:$0xf]
        %v2344 = vld [vmem:[#allocation7 + $0x11c] sm:$0xf]
        %v2345 = vld [vmem:[#allocation7 + $0x120] sm:$0xf]
        %v2346 = vld [vmem:[#allocation7 + $0x124] sm:$0xf]
        %v2347 = vld [vmem:[#allocation7 + $0x128] sm:$0xf]
        %v2348 = vld [vmem:[#allocation7 + $0x12c] sm:$0xf]
        %v2349 = vld [vmem:[#allocation7 + $0x130] sm:$0xf]
        %v2350 = vld [vmem:[#allocation7 + $0x134] sm:$0xf]
        %v2351 = vld [vmem:[#allocation7 + $0x138] sm:$0xf]
        %v2352 = vld [vmem:[#allocation7 + $0x13c] sm:$0xf]
        %v2353 = vld [vmem:[#allocation7 + $0x140] sm:$0xf]
        %v2354 = vld [vmem:[#allocation7 + $0x144] sm:$0xf]
        %v2355 = vld [vmem:[#allocation7 + $0x148] sm:$0xf]
        %v2356 = vld [vmem:[#allocation7 + $0x14c] sm:$0xf]
        %v2357 = vld [vmem:[#allocation7 + $0x150] sm:$0xf]
        %v2358 = vld [vmem:[#allocation7 + $0x154] sm:$0xf]
        %v2359 = vld [vmem:[#allocation7 + $0x158] sm:$0xf]
        %v2360 = vld [vmem:[#allocation7 + $0x15c] sm:$0xf]
        %v2361 = vld [vmem:[#allocation7 + $0x160] sm:$0xf]
        %v2362 = vld [vmem:[#allocation7 + $0x164] sm:$0xf]
        %v2363 = vld [vmem:[#allocation7 + $0x168] sm:$0xf]
        %v2364 = vld [vmem:[#allocation7 + $0x16c] sm:$0xf]
        %v2365 = vld [vmem:[#allocation7 + $0x170] sm:$0xf]
        %v2366 = vld [vmem:[#allocation7 + $0x174] sm:$0xf]
        %v2367 = vld [vmem:[#allocation7 + $0x178] sm:$0xf]
        %v2368 = vld [vmem:[#allocation7 + $0x17c] sm:$0xf]
        %v2401 = vunpack.c.l.b16 %v2337
        %v2402 = vunpack.c.l.b16 %v2338
        %v2403 = vunpack.c.l.b16 %v2339
        %v2404 = vunpack.c.l.b16 %v2340
        %v2405 = vunpack.c.l.b16 %v2341
        %v2406 = vunpack.c.l.b16 %v2342
        %v2407 = vunpack.c.l.b16 %v2343
        %v2408 = vunpack.c.l.b16 %v2344
        %v2409 = vunpack.c.l.b16 %v2345
        %v2410 = vunpack.c.l.b16 %v2346
        %v2411 = vunpack.c.l.b16 %v2347
        %v2412 = vunpack.c.l.b16 %v2348
        %v2413 = vunpack.c.l.b16 %v2349
        %v2414 = vunpack.c.l.b16 %v2350
        %v2415 = vunpack.c.l.b16 %v2351
        %v2416 = vunpack.c.l.b16 %v2352
        %v2417 = vunpack.c.l.b16 %v2353
        %v2418 = vunpack.c.l.b16 %v2354
        %v2419 = vunpack.c.l.b16 %v2355
        %v2420 = vunpack.c.l.b16 %v2356
        %v2421 = vunpack.c.l.b16 %v2357
        %v2422 = vunpack.c.l.b16 %v2358
        %v2423 = vunpack.c.l.b16 %v2359
        %v2424 = vunpack.c.l.b16 %v2360
        %v2425 = vunpack.c.l.b16 %v2361
        %v2426 = vunpack.c.l.b16 %v2362
        %v2427 = vunpack.c.l.b16 %v2363
        %v2428 = vunpack.c.l.b16 %v2364
        %v2429 = vunpack.c.l.b16 %v2365
        %v2430 = vunpack.c.l.b16 %v2366
        %v2431 = vunpack.c.l.b16 %v2367
        %v2432 = vunpack.c.l.b16 %v2368
        %v2433 = vpack.c.b16 %v2402, %v2401
        %v2434 = vpack.c.b16 %v2404, %v2403
        %v2435 = vpack.c.b16 %v2406, %v2405
        %v2436 = vpack.c.b16 %v2408, %v2407
        %v2437 = vpack.c.b16 %v2410, %v2409
        %v2438 = vpack.c.b16 %v2412, %v2411
        %v2439 = vpack.c.b16 %v2414, %v2413
        %v2440 = vpack.c.b16 %v2416, %v2415
        %v2441 = vpack.c.b16 %v2418, %v2417
        %v2442 = vpack.c.b16 %v2420, %v2419
        %v2443 = vpack.c.b16 %v2422, %v2421
        %v2444 = vpack.c.b16 %v2424, %v2423
        %v2445 = vpack.c.b16 %v2426, %v2425
        %v2446 = vpack.c.b16 %v2428, %v2427
        %v2447 = vpack.c.b16 %v2430, %v2429
        %v2448 = vpack.c.b16 %v2432, %v2431
        %2465 = vmatprep.subr.bf16.mxu0 0
        %2466 = vmatpush1.bf16.msra.mxu0 %v2433
        %2467 = vmatprep.subr.bf16.mxu0 0
        %2468 = vmatpush1.bf16.msra.mxu0 %v2434
        %2469 = vmatprep.subr.bf16.mxu0 0
        %2470 = vmatpush1.bf16.msra.mxu0 %v2435
        %2471 = vmatprep.subr.bf16.mxu0 0
        %2472 = vmatpush1.bf16.msra.mxu0 %v2436
        %2473 = vmatprep.subr.bf16.mxu0 0
        %2474 = vmatpush1.bf16.msra.mxu0 %v2437
        %2475 = vmatprep.subr.bf16.mxu0 0
        %2476 = vmatpush1.bf16.msra.mxu0 %v2438
        %2477 = vmatprep.subr.bf16.mxu0 0
        %2478 = vmatpush1.bf16.msra.mxu0 %v2439
        %2479 = vmatprep.subr.bf16.mxu0 0
        %2480 = vmatpush1.bf16.msra.mxu0 %v2440
        %2481 = vmatprep.subr.bf16.mxu0 0
        %2482 = vmatpush1.bf16.msra.mxu0 %v2441
        %2483 = vmatprep.subr.bf16.mxu0 0
        %2484 = vmatpush1.bf16.msra.mxu0 %v2442
        %2485 = vmatprep.subr.bf16.mxu0 0
        %2486 = vmatpush1.bf16.msra.mxu0 %v2443
        %2487 = vmatprep.subr.bf16.mxu0 0
        %2488 = vmatpush1.bf16.msra.mxu0 %v2444
        %2489 = vmatprep.subr.bf16.mxu0 0
        %2490 = vmatpush1.bf16.msra.mxu0 %v2445
        %2491 = vmatprep.subr.bf16.mxu0 0
        %2492 = vmatpush1.bf16.msra.mxu0 %v2446
        %2493 = vmatprep.subr.bf16.mxu0 0
        %2494 = vmatpush1.bf16.msra.mxu0 %v2447
        %2495 = vmatprep.subr.bf16.mxu0 0
        %2496 = vmatpush1.bf16.msra.mxu0 %v2448
        %2497 = vmatprep.mubr.bf16.mxu0 %v2321
        %2498 = vmatmul.mubr.bf16.gmra.mrb[0].mxu0 %v1159
        %v2499 = vpop.f32.mrb[0].mxu0
        %v2500 = vadd.f32 0.0, %v2499
        %v2501 = vpop.f32.mrb[0].mxu0
        %v2502 = vpop.f32.mrb[0].mxu0
        %v2503 = vadd.f32 0.0, %v2502
        %v2504 = vpop.f32.mrb[0].mxu0
        %2505 = vmatprep.mubr.bf16.mxu0 %v2322
        %2506 = vmatmul.mubr.bf16.gmra.mrb[0].mxu0 %v1160
        %v2507 = vpop.f32.mrb[0].mxu0
        %v2508 = vadd.f32 0.0, %v2507
        %v2509 = vpop.f32.mrb[0].mxu0
        %v2510 = vpop.f32.mrb[0].mxu0
        %v2511 = vadd.f32 0.0, %v2510
        %v2512 = vpop.f32.mrb[0].mxu0
        %2513 = vmatprep.mubr.bf16.mxu0 %v2323
        %2514 = vmatmul.mubr.bf16.gmra.mrb[0].mxu0 %v1161
        %v2515 = vpop.f32.mrb[0].mxu0
        %v2516 = vadd.f32 0.0, %v2515
        %v2517 = vpop.f32.mrb[0].mxu0
        %v2518 = vpop.f32.mrb[0].mxu0
        %v2519 = vadd.f32 0.0, %v2518
        %v2520 = vpop.f32.mrb[0].mxu0
        %2521 = vmatprep.mubr.bf16.mxu0 %v2324
        %2522 = vmatmul.mubr.bf16.gmra.mrb[0].mxu0 %v1162
        %v2523 = vpop.f32.mrb[0].mxu0
        %v2524 = vadd.f32 0.0, %v2523
        %v2525 = vpop.f32.mrb[0].mxu0
        %v2526 = vpop.f32.mrb[0].mxu0
        %v2527 = vadd.f32 0.0, %v2526
        %v2528 = vpop.f32.mrb[0].mxu0
        %2529 = vmatprep.mubr.bf16.mxu0 %v2325
        %2530 = vmatmul.mubr.bf16.gmra.mrb[0].mxu0 %v1163
        %v2531 = vpop.f32.mrb[0].mxu0
        %v2532 = vadd.f32 0.0, %v2531
        %v2533 = vpop.f32.mrb[0].mxu0
        %v2534 = vpop.f32.mrb[0].mxu0
        %v2535 = vadd.f32 0.0, %v2534
        %v2536 = vpop.f32.mrb[0].mxu0
        %2537 = vmatprep.mubr.bf16.mxu0 %v2326
        %2538 = vmatmul.mubr.bf16.gmra.mrb[0].mxu0 %v1164
        %v2539 = vpop.f32.mrb[0].mxu0
        %v2540 = vadd.f32 0.0, %v2539
        %v2541 = vpop.f32.mrb[0].mxu0
        %v2542 = vpop.f32.mrb[0].mxu0
        %v2543 = vadd.f32 0.0, %v2542
        %v2544 = vpop.f32.mrb[0].mxu0
        %2545 = vmatprep.mubr.bf16.mxu0 %v2327
        %2546 = vmatmul.mubr.bf16.gmra.mrb[0].mxu0 %v1165
        %v2547 = vpop.f32.mrb[0].mxu0
        %v2548 = vadd.f32 0.0, %v2547
        %v2549 = vpop.f32.mrb[0].mxu0
        %v2550 = vpop.f32.mrb[0].mxu0
        %v2551 = vadd.f32 0.0, %v2550
        %v2552 = vpop.f32.mrb[0].mxu0
        %2553 = vmatprep.mubr.bf16.mxu0 %v2328
        %2554 = vmatmul.mubr.bf16.gmra.mrb[0].mxu0 %v1166
        %v2555 = vpop.f32.mrb[0].mxu0
        %v2556 = vadd.f32 0.0, %v2555
        %v2557 = vpop.f32.mrb[0].mxu0
        %v2558 = vpop.f32.mrb[0].mxu0
        %v2559 = vadd.f32 0.0, %v2558
        %v2560 = vpop.f32.mrb[0].mxu0
        %2561 = vmatprep.mubr.bf16.mxu0 %v2329
        %2562 = vmatmul.mubr.bf16.gmra.mrb[0].mxu0 %v1167
        %v2563 = vpop.f32.mrb[0].mxu0
        %v2564 = vadd.f32 0.0, %v2563
        %v2565 = vpop.f32.mrb[0].mxu0
        %v2566 = vpop.f32.mrb[0].mxu0
        %v2567 = vadd.f32 0.0, %v2566
        %v2568 = vpop.f32.mrb[0].mxu0
        %2569 = vmatprep.mubr.bf16.mxu0 %v2330
        %2570 = vmatmul.mubr.bf16.gmra.mrb[0].mxu0 %v1168
        %v2571 = vpop.f32.mrb[0].mxu0
        %v2572 = vadd.f32 0.0, %v2571
        %v2573 = vpop.f32.mrb[0].mxu0
        %v2574 = vpop.f32.mrb[0].mxu0
        %v2575 = vadd.f32 0.0, %v2574
        %v2576 = vpop.f32.mrb[0].mxu0
        %2577 = vmatprep.mubr.bf16.mxu0 %v2331
        %2578 = vmatmul.mubr.bf16.gmra.mrb[0].mxu0 %v1169
        %v2579 = vpop.f32.mrb[0].mxu0
        %v2580 = vadd.f32 0.0, %v2579
        %v2581 = vpop.f32.mrb[0].mxu0
        %v2582 = vpop.f32.mrb[0].mxu0
        %v2583 = vadd.f32 0.0, %v2582
        %v2584 = vpop.f32.mrb[0].mxu0
        %2585 = vmatprep.mubr.bf16.mxu0 %v2332
        %2586 = vmatmul.mubr.bf16.gmra.mrb[0].mxu0 %v1170
        %v2587 = vpop.f32.mrb[0].mxu0
        %v2588 = vadd.f32 0.0, %v2587
        %v2589 = vpop.f32.mrb[0].mxu0
        %v2590 = vpop.f32.mrb[0].mxu0
        %v2591 = vadd.f32 0.0, %v2590
        %v2592 = vpop.f32.mrb[0].mxu0
        %2593 = vmatprep.mubr.bf16.mxu0 %v2333
        %2594 = vmatmul.mubr.bf16.gmra.mrb[0].mxu0 %v1171
        %v2595 = vpop.f32.mrb[0].mxu0
        %v2596 = vadd.f32 0.0, %v2595
        %v2597 = vpop.f32.mrb[0].mxu0
        %v2598 = vpop.f32.mrb[0].mxu0
        %v2599 = vadd.f32 0.0, %v2598
        %v2600 = vpop.f32.mrb[0].mxu0
        %2601 = vmatprep.mubr.bf16.mxu0 %v2334
        %2602 = vmatmul.mubr.bf16.gmra.mrb[0].mxu0 %v1172
        %v2603 = vpop.f32.mrb[0].mxu0
        %v2604 = vadd.f32 0.0, %v2603
        %v2605 = vpop.f32.mrb[0].mxu0
        %v2606 = vpop.f32.mrb[0].mxu0
        %v2607 = vadd.f32 0.0, %v2606
        %v2608 = vpop.f32.mrb[0].mxu0
        %2609 = vmatprep.mubr.bf16.mxu0 %v2335
        %2610 = vmatmul.mubr.bf16.gmra.mrb[0].mxu0 %v1173
        %v2611 = vpop.f32.mrb[0].mxu0
        %v2612 = vadd.f32 0.0, %v2611
        %v2613 = vpop.f32.mrb[0].mxu0
        %v2614 = vpop.f32.mrb[0].mxu0
        %v2615 = vadd.f32 0.0, %v2614
        %v2616 = vpop.f32.mrb[0].mxu0
        %2617 = vmatprep.mubr.bf16.mxu0 %v2336
        %2618 = vmatmul.mubr.bf16.gmra.mrb[0].mxu0 %v1158
        %v2619 = vpop.f32.mrb[0].mxu0
        %v2620 = vadd.f32 0.0, %v2619
        %v2621 = vpop.f32.mrb[0].mxu0
        %v2622 = vpop.f32.mrb[0].mxu0
        %v2623 = vadd.f32 0.0, %v2622
        %v2624 = vpop.f32.mrb[0].mxu0
        %2625 = vdwg.mxu0
        %v2626 = vadd.f32 %v2183, %v2500
        %v2627 = vadd.f32 %v2186, %v2503
        %v2628 = vadd.f32 %v2191, %v2508
        %v2629 = vadd.f32 %v2194, %v2511
        %v2630 = vadd.f32 %v2199, %v2516
        %v2631 = vadd.f32 %v2202, %v2519
        %v2632 = vadd.f32 %v2207, %v2524
        %v2633 = vadd.f32 %v2210, %v2527
        %v2634 = vadd.f32 %v2215, %v2532
        %v2635 = vadd.f32 %v2218, %v2535
        %v2636 = vadd.f32 %v2223, %v2540
        %v2637 = vadd.f32 %v2226, %v2543
        %v2638 = vadd.f32 %v2231, %v2548
        %v2639 = vadd.f32 %v2234, %v2551
        %v2640 = vadd.f32 %v2239, %v2556
        %v2641 = vadd.f32 %v2242, %v2559
        %v2642 = vadd.f32 %v2247, %v2564
        %v2643 = vadd.f32 %v2250, %v2567
        %v2644 = vadd.f32 %v2255, %v2572
        %v2645 = vadd.f32 %v2258, %v2575
        %v2646 = vadd.f32 %v2263, %v2580
        %v2647 = vadd.f32 %v2266, %v2583
        %v2648 = vadd.f32 %v2271, %v2588
        %v2649 = vadd.f32 %v2274, %v2591
        %v2650 = vadd.f32 %v2279, %v2596
        %v2651 = vadd.f32 %v2282, %v2599
        %v2652 = vadd.f32 %v2287, %v2604
        %v2653 = vadd.f32 %v2290, %v2607
        %v2654 = vadd.f32 %v2295, %v2612
        %v2655 = vadd.f32 %v2298, %v2615
        %v2656 = vadd.f32 %v2303, %v2620
        %v2657 = vadd.f32 %v2306, %v2623
        %vm2658 = vmand %vm805, %vm769
        %vm2659 = vmand %vm806, %vm770
        %vm2660 = vmand %vm807, %vm769
        %vm2661 = vmand %vm808, %vm770
        %vm2662 = vmand %vm809, %vm769
        %vm2663 = vmand %vm810, %vm770
        %vm2664 = vmand %vm811, %vm769
        %vm2665 = vmand %vm812, %vm770
        %vm2666 = vmand %vm813, %vm769
        %vm2667 = vmand %vm814, %vm770
        %vm2668 = vmand %vm815, %vm769
        %vm2669 = vmand %vm816, %vm770
        %vm2670 = vmand %vm817, %vm769
        %vm2671 = vmand %vm818, %vm770
        %vm2672 = vmand %vm819, %vm769
        %vm2673 = vmand %vm820, %vm770
        %vm2674 = vmand %vm821, %vm769
        %vm2675 = vmand %vm822, %vm770
        %vm2676 = vmand %vm823, %vm769
        %vm2677 = vmand %vm824, %vm770
        %vm2678 = vmand %vm825, %vm769
        %vm2679 = vmand %vm826, %vm770
        %vm2680 = vmand %vm827, %vm769
        %vm2681 = vmand %vm828, %vm770
        %vm2682 = vmand %vm829, %vm769
        %vm2683 = vmand %vm830, %vm770
        %vm2684 = vmand %vm831, %vm769
        %vm2685 = vmand %vm832, %vm770
        %vm2686 = vmand %vm833, %vm769
        %vm2687 = vmand %vm834, %vm770
        %vm2688 = vmand %vm835, %vm769
        %vm2689 = vmand %vm836, %vm770
        %v2690 = vsel %vm2658, 1, 0
        %v2691 = vsel %vm2659, 1, 0
        %v2692 = vsel %vm2660, 1, 0
        %v2693 = vsel %vm2661, 1, 0
        %v2694 = vsel %vm2662, 1, 0
        %v2695 = vsel %vm2663, 1, 0
        %v2696 = vsel %vm2664, 1, 0
        %v2697 = vsel %vm2665, 1, 0
        %v2698 = vsel %vm2666, 1, 0
        %v2699 = vsel %vm2667, 1, 0
        %v2700 = vsel %vm2668, 1, 0
        %v2701 = vsel %vm2669, 1, 0
        %v2702 = vsel %vm2670, 1, 0
        %v2703 = vsel %vm2671, 1, 0
        %v2704 = vsel %vm2672, 1, 0
        %v2705 = vsel %vm2673, 1, 0
        %v2706 = vsel %vm2674, 1, 0
        %v2707 = vsel %vm2675, 1, 0
        %v2708 = vsel %vm2676, 1, 0
        %v2709 = vsel %vm2677, 1, 0
        %v2710 = vsel %vm2678, 1, 0
        %v2711 = vsel %vm2679, 1, 0
        %v2712 = vsel %vm2680, 1, 0
        %v2713 = vsel %vm2681, 1, 0
        %v2714 = vsel %vm2682, 1, 0
        %v2715 = vsel %vm2683, 1, 0
        %v2716 = vsel %vm2684, 1, 0
        %v2717 = vsel %vm2685, 1, 0
        %v2718 = vsel %vm2686, 1, 0
        %v2719 = vsel %vm2687, 1, 0
        %v2720 = vsel %vm2688, 1, 0
        %v2721 = vsel %vm2689, 1, 0
        %vm2722 = vcmp.eq.s32.totalorder %v2690, 1
        %vm2723 = vcmp.eq.s32.totalorder %v2691, 1
        %vm2724 = vcmp.eq.s32.totalorder %v2692, 1
        %vm2725 = vcmp.eq.s32.totalorder %v2693, 1
        %vm2726 = vcmp.eq.s32.totalorder %v2694, 1
        %vm2727 = vcmp.eq.s32.totalorder %v2695, 1
        %vm2728 = vcmp.eq.s32.totalorder %v2696, 1
        %vm2729 = vcmp.eq.s32.totalorder %v2697, 1
        %vm2730 = vcmp.eq.s32.totalorder %v2698, 1
        %vm2731 = vcmp.eq.s32.totalorder %v2699, 1
        %vm2732 = vcmp.eq.s32.totalorder %v2700, 1
        %vm2733 = vcmp.eq.s32.totalorder %v2701, 1
        %vm2734 = vcmp.eq.s32.totalorder %v2702, 1
        %vm2735 = vcmp.eq.s32.totalorder %v2703, 1
        %vm2736 = vcmp.eq.s32.totalorder %v2704, 1
        %vm2737 = vcmp.eq.s32.totalorder %v2705, 1
        %vm2738 = vcmp.eq.s32.totalorder %v2706, 1
        %vm2739 = vcmp.eq.s32.totalorder %v2707, 1
        %vm2740 = vcmp.eq.s32.totalorder %v2708, 1
        %vm2741 = vcmp.eq.s32.totalorder %v2709, 1
        %vm2742 = vcmp.eq.s32.totalorder %v2710, 1
        %vm2743 = vcmp.eq.s32.totalorder %v2711, 1
        %vm2744 = vcmp.eq.s32.totalorder %v2712, 1
        %vm2745 = vcmp.eq.s32.totalorder %v2713, 1
        %vm2746 = vcmp.eq.s32.totalorder %v2714, 1
        %vm2747 = vcmp.eq.s32.totalorder %v2715, 1
        %vm2748 = vcmp.eq.s32.totalorder %v2716, 1
        %vm2749 = vcmp.eq.s32.totalorder %v2717, 1
        %vm2750 = vcmp.eq.s32.totalorder %v2718, 1
        %vm2751 = vcmp.eq.s32.totalorder %v2719, 1
        %vm2752 = vcmp.eq.s32.totalorder %v2720, 1
        %vm2753 = vcmp.eq.s32.totalorder %v2721, 1
        %vm2754 = vmpackc.low %vm2722, %vm2722
        %vm2755 = vmpackc.low %vm2723, %vm2723
        %vm2756 = vmpackc.low %vm2724, %vm2724
        %vm2757 = vmpackc.low %vm2725, %vm2725
        %vm2758 = vmpackc.low %vm2726, %vm2726
        %vm2759 = vmpackc.low %vm2727, %vm2727
        %vm2760 = vmpackc.low %vm2728, %vm2728
        %vm2761 = vmpackc.low %vm2729, %vm2729
        %vm2762 = vmpackc.low %vm2730, %vm2730
        %vm2763 = vmpackc.low %vm2731, %vm2731
        %vm2764 = vmpackc.low %vm2732, %vm2732
        %vm2765 = vmpackc.low %vm2733, %vm2733
        %vm2766 = vmpackc.low %vm2734, %vm2734
        %vm2767 = vmpackc.low %vm2735, %vm2735
        %vm2768 = vmpackc.low %vm2736, %vm2736
        %vm2769 = vmpackc.low %vm2737, %vm2737
        %vm2770 = vmpackc.low %vm2738, %vm2738
        %vm2771 = vmpackc.low %vm2739, %vm2739
        %vm2772 = vmpackc.low %vm2740, %vm2740
        %vm2773 = vmpackc.low %vm2741, %vm2741
        %vm2774 = vmpackc.low %vm2742, %vm2742
        %vm2775 = vmpackc.low %vm2743, %vm2743
        %vm2776 = vmpackc.low %vm2744, %vm2744
        %vm2777 = vmpackc.low %vm2745, %vm2745
        %vm2778 = vmpackc.low %vm2746, %vm2746
        %vm2779 = vmpackc.low %vm2747, %vm2747
        %vm2780 = vmpackc.low %vm2748, %vm2748
        %vm2781 = vmpackc.low %vm2749, %vm2749
        %vm2782 = vmpackc.low %vm2750, %vm2750
        %vm2783 = vmpackc.low %vm2751, %vm2751
        %vm2784 = vmpackc.low %vm2752, %vm2752
        %vm2785 = vmpackc.low %vm2753, %vm2753
        %v2786 = vsel %vm2754, 65537, 0
        %v2787 = vsel %vm2755, 65537, 0
        %v2788 = vsel %vm2756, 65537, 0
        %v2789 = vsel %vm2757, 65537, 0
        %v2790 = vsel %vm2758, 65537, 0
        %v2791 = vsel %vm2759, 65537, 0
        %v2792 = vsel %vm2760, 65537, 0
        %v2793 = vsel %vm2761, 65537, 0
        %v2794 = vsel %vm2762, 65537, 0
        %v2795 = vsel %vm2763, 65537, 0
        %v2796 = vsel %vm2764, 65537, 0
        %v2797 = vsel %vm2765, 65537, 0
        %v2798 = vsel %vm2766, 65537, 0
        %v2799 = vsel %vm2767, 65537, 0
        %v2800 = vsel %vm2768, 65537, 0
        %v2801 = vsel %vm2769, 65537, 0
        %v2802 = vsel %vm2770, 65537, 0
        %v2803 = vsel %vm2771, 65537, 0
        %v2804 = vsel %vm2772, 65537, 0
        %v2805 = vsel %vm2773, 65537, 0
        %v2806 = vsel %vm2774, 65537, 0
        %v2807 = vsel %vm2775, 65537, 0
        %v2808 = vsel %vm2776, 65537, 0
        %v2809 = vsel %vm2777, 65537, 0
        %v2810 = vsel %vm2778, 65537, 0
        %v2811 = vsel %vm2779, 65537, 0
        %v2812 = vsel %vm2780, 65537, 0
        %v2813 = vsel %vm2781, 65537, 0
        %v2814 = vsel %vm2782, 65537, 0
        %v2815 = vsel %vm2783, 65537, 0
        %v2816 = vsel %vm2784, 65537, 0
        %v2817 = vsel %vm2785, 65537, 0
        %v2818 = vunpack.c.l.b16 %v2786
        %v2819 = vunpack.c.l.b16 %v2787
        %v2820 = vunpack.c.l.b16 %v2788
        %v2821 = vunpack.c.l.b16 %v2789
        %v2822 = vunpack.c.l.b16 %v2790
        %v2823 = vunpack.c.l.b16 %v2791
        %v2824 = vunpack.c.l.b16 %v2792
        %v2825 = vunpack.c.l.b16 %v2793
        %v2826 = vunpack.c.l.b16 %v2794
        %v2827 = vunpack.c.l.b16 %v2795
        %v2828 = vunpack.c.l.b16 %v2796
        %v2829 = vunpack.c.l.b16 %v2797
        %v2830 = vunpack.c.l.b16 %v2798
        %v2831 = vunpack.c.l.b16 %v2799
        %v2832 = vunpack.c.l.b16 %v2800
        %v2833 = vunpack.c.l.b16 %v2801
        %v2834 = vunpack.c.l.b16 %v2802
        %v2835 = vunpack.c.l.b16 %v2803
        %v2836 = vunpack.c.l.b16 %v2804
        %v2837 = vunpack.c.l.b16 %v2805
        %v2838 = vunpack.c.l.b16 %v2806
        %v2839 = vunpack.c.l.b16 %v2807
        %v2840 = vunpack.c.l.b16 %v2808
        %v2841 = vunpack.c.l.b16 %v2809
        %v2842 = vunpack.c.l.b16 %v2810
        %v2843 = vunpack.c.l.b16 %v2811
        %v2844 = vunpack.c.l.b16 %v2812
        %v2845 = vunpack.c.l.b16 %v2813
        %v2846 = vunpack.c.l.b16 %v2814
        %v2847 = vunpack.c.l.b16 %v2815
        %v2848 = vunpack.c.l.b16 %v2816
        %v2849 = vunpack.c.l.b16 %v2817
        %v2850 = vpack.c.b16 %v2819, %v2818
        %v2851 = vpack.c.b16 %v2821, %v2820
        %v2852 = vpack.c.b16 %v2823, %v2822
        %v2853 = vpack.c.b16 %v2825, %v2824
        %v2854 = vpack.c.b16 %v2827, %v2826
        %v2855 = vpack.c.b16 %v2829, %v2828
        %v2856 = vpack.c.b16 %v2831, %v2830
        %v2857 = vpack.c.b16 %v2833, %v2832
        %v2858 = vpack.c.b16 %v2835, %v2834
        %v2859 = vpack.c.b16 %v2837, %v2836
        %v2860 = vpack.c.b16 %v2839, %v2838
        %v2861 = vpack.c.b16 %v2841, %v2840
        %v2862 = vpack.c.b16 %v2843, %v2842
        %v2863 = vpack.c.b16 %v2845, %v2844
        %v2864 = vpack.c.b16 %v2847, %v2846
        %v2865 = vpack.c.b16 %v2849, %v2848
        %vm2866 = vcmp.ne.s16.totalorder %v2850, 0
        %vm2867 = vcmp.ne.s16.totalorder %v2851, 0
        %vm2868 = vcmp.ne.s16.totalorder %v2852, 0
        %vm2869 = vcmp.ne.s16.totalorder %v2853, 0
        %vm2870 = vcmp.ne.s16.totalorder %v2854, 0
        %vm2871 = vcmp.ne.s16.totalorder %v2855, 0
        %vm2872 = vcmp.ne.s16.totalorder %v2856, 0
        %vm2873 = vcmp.ne.s16.totalorder %v2857, 0
        %vm2874 = vcmp.ne.s16.totalorder %v2858, 0
        %vm2875 = vcmp.ne.s16.totalorder %v2859, 0
        %vm2876 = vcmp.ne.s16.totalorder %v2860, 0
        %vm2877 = vcmp.ne.s16.totalorder %v2861, 0
        %vm2878 = vcmp.ne.s16.totalorder %v2862, 0
        %vm2879 = vcmp.ne.s16.totalorder %v2863, 0
        %vm2880 = vcmp.ne.s16.totalorder %v2864, 0
        %vm2881 = vcmp.ne.s16.totalorder %v2865, 0
        %v2882 = vsel %vm2866, %v904, 0
        %v2883 = vsel %vm2867, %v905, 0
        %v2884 = vsel %vm2868, %v906, 0
        %v2885 = vsel %vm2869, %v907, 0
        %v2886 = vsel %vm2870, %v908, 0
        %v2887 = vsel %vm2871, %v909, 0
        %v2888 = vsel %vm2872, %v910, 0
        %v2889 = vsel %vm2873, %v911, 0
        %v2890 = vsel %vm2874, %v912, 0
        %v2891 = vsel %vm2875, %v913, 0
        %v2892 = vsel %vm2876, %v914, 0
        %v2893 = vsel %vm2877, %v915, 0
        %v2894 = vsel %vm2878, %v916, 0
        %v2895 = vsel %vm2879, %v917, 0
        %v2896 = vsel %vm2880, %v902, 0
        %v2897 = vsel %vm2881, %v903, 0
        %v2898 = vsel %vm805, 1, 0
        %v2899 = vsel %vm806, 1, 0
        %v2900 = vsel %vm807, 1, 0
        %v2901 = vsel %vm808, 1, 0
        %v2902 = vsel %vm809, 1, 0
        %v2903 = vsel %vm810, 1, 0
        %v2904 = vsel %vm811, 1, 0
        %v2905 = vsel %vm812, 1, 0
        %v2906 = vsel %vm813, 1, 0
        %v2907 = vsel %vm814, 1, 0
        %v2908 = vsel %vm815, 1, 0
        %v2909 = vsel %vm816, 1, 0
        %v2910 = vsel %vm817, 1, 0
        %v2911 = vsel %vm818, 1, 0
        %v2912 = vsel %vm819, 1, 0
        %v2913 = vsel %vm820, 1, 0
        %v2914 = vsel %vm821, 1, 0
        %v2915 = vsel %vm822, 1, 0
        %v2916 = vsel %vm823, 1, 0
        %v2917 = vsel %vm824, 1, 0
        %v2918 = vsel %vm825, 1, 0
        %v2919 = vsel %vm826, 1, 0
        %v2920 = vsel %vm827, 1, 0
        %v2921 = vsel %vm828, 1, 0
        %v2922 = vsel %vm829, 1, 0
        %v2923 = vsel %vm830, 1, 0
        %v2924 = vsel %vm831, 1, 0
        %v2925 = vsel %vm832, 1, 0
        %v2926 = vsel %vm833, 1, 0
        %v2927 = vsel %vm834, 1, 0
        %v2928 = vsel %vm835, 1, 0
        %v2929 = vsel %vm836, 1, 0
        %vm2930 = vcmp.eq.s32.totalorder %v2898, 1
        %vm2931 = vcmp.eq.s32.totalorder %v2899, 1
        %vm2932 = vcmp.eq.s32.totalorder %v2900, 1
        %vm2933 = vcmp.eq.s32.totalorder %v2901, 1
        %vm2934 = vcmp.eq.s32.totalorder %v2902, 1
        %vm2935 = vcmp.eq.s32.totalorder %v2903, 1
        %vm2936 = vcmp.eq.s32.totalorder %v2904, 1
        %vm2937 = vcmp.eq.s32.totalorder %v2905, 1
        %vm2938 = vcmp.eq.s32.totalorder %v2906, 1
        %vm2939 = vcmp.eq.s32.totalorder %v2907, 1
        %vm2940 = vcmp.eq.s32.totalorder %v2908, 1
        %vm2941 = vcmp.eq.s32.totalorder %v2909, 1
        %vm2942 = vcmp.eq.s32.totalorder %v2910, 1
        %vm2943 = vcmp.eq.s32.totalorder %v2911, 1
        %vm2944 = vcmp.eq.s32.totalorder %v2912, 1
        %vm2945 = vcmp.eq.s32.totalorder %v2913, 1
        %vm2946 = vcmp.eq.s32.totalorder %v2914, 1
        %vm2947 = vcmp.eq.s32.totalorder %v2915, 1
        %vm2948 = vcmp.eq.s32.totalorder %v2916, 1
        %vm2949 = vcmp.eq.s32.totalorder %v2917, 1
        %vm2950 = vcmp.eq.s32.totalorder %v2918, 1
        %vm2951 = vcmp.eq.s32.totalorder %v2919, 1
        %vm2952 = vcmp.eq.s32.totalorder %v2920, 1
        %vm2953 = vcmp.eq.s32.totalorder %v2921, 1
        %vm2954 = vcmp.eq.s32.totalorder %v2922, 1
        %vm2955 = vcmp.eq.s32.totalorder %v2923, 1
        %vm2956 = vcmp.eq.s32.totalorder %v2924, 1
        %vm2957 = vcmp.eq.s32.totalorder %v2925, 1
        %vm2958 = vcmp.eq.s32.totalorder %v2926, 1
        %vm2959 = vcmp.eq.s32.totalorder %v2927, 1
        %vm2960 = vcmp.eq.s32.totalorder %v2928, 1
        %vm2961 = vcmp.eq.s32.totalorder %v2929, 1
        %vm2962 = vmpackc.low %vm2930, %vm2930
        %vm2963 = vmpackc.low %vm2931, %vm2931
        %vm2964 = vmpackc.low %vm2932, %vm2932
        %vm2965 = vmpackc.low %vm2933, %vm2933
        %vm2966 = vmpackc.low %vm2934, %vm2934
        %vm2967 = vmpackc.low %vm2935, %vm2935
        %vm2968 = vmpackc.low %vm2936, %vm2936
        %vm2969 = vmpackc.low %vm2937, %vm2937
        %vm2970 = vmpackc.low %vm2938, %vm2938
        %vm2971 = vmpackc.low %vm2939, %vm2939
        %vm2972 = vmpackc.low %vm2940, %vm2940
        %vm2973 = vmpackc.low %vm2941, %vm2941
        %vm2974 = vmpackc.low %vm2942, %vm2942
        %vm2975 = vmpackc.low %vm2943, %vm2943
        %vm2976 = vmpackc.low %vm2944, %vm2944
        %vm2977 = vmpackc.low %vm2945, %vm2945
        %vm2978 = vmpackc.low %vm2946, %vm2946
        %vm2979 = vmpackc.low %vm2947, %vm2947
        %vm2980 = vmpackc.low %vm2948, %vm2948
        %vm2981 = vmpackc.low %vm2949, %vm2949
        %vm2982 = vmpackc.low %vm2950, %vm2950
        %vm2983 = vmpackc.low %vm2951, %vm2951
        %vm2984 = vmpackc.low %vm2952, %vm2952
        %vm2985 = vmpackc.low %vm2953, %vm2953
        %vm2986 = vmpackc.low %vm2954, %vm2954
        %vm2987 = vmpackc.low %vm2955, %vm2955
        %vm2988 = vmpackc.low %vm2956, %vm2956
        %vm2989 = vmpackc.low %vm2957, %vm2957
        %vm2990 = vmpackc.low %vm2958, %vm2958
        %vm2991 = vmpackc.low %vm2959, %vm2959
        %vm2992 = vmpackc.low %vm2960, %vm2960
        %vm2993 = vmpackc.low %vm2961, %vm2961
        %v2994 = vsel %vm2962, 65537, 0
        %v2995 = vsel %vm2963, 65537, 0
        %v2996 = vsel %vm2964, 65537, 0
        %v2997 = vsel %vm2965, 65537, 0
        %v2998 = vsel %vm2966, 65537, 0
        %v2999 = vsel %vm2967, 65537, 0
        %v3000 = vsel %vm2968, 65537, 0
        %v3001 = vsel %vm2969, 65537, 0
        %v3002 = vsel %vm2970, 65537, 0
        %v3003 = vsel %vm2971, 65537, 0
        %v3004 = vsel %vm2972, 65537, 0
        %v3005 = vsel %vm2973, 65537, 0
        %v3006 = vsel %vm2974, 65537, 0
        %v3007 = vsel %vm2975, 65537, 0
        %v3008 = vsel %vm2976, 65537, 0
        %v3009 = vsel %vm2977, 65537, 0
        %v3010 = vsel %vm2978, 65537, 0
        %v3011 = vsel %vm2979, 65537, 0
        %v3012 = vsel %vm2980, 65537, 0
        %v3013 = vsel %vm2981, 65537, 0
        %v3014 = vsel %vm2982, 65537, 0
        %v3015 = vsel %vm2983, 65537, 0
        %v3016 = vsel %vm2984, 65537, 0
        %v3017 = vsel %vm2985, 65537, 0
        %v3018 = vsel %vm2986, 65537, 0
        %v3019 = vsel %vm2987, 65537, 0
        %v3020 = vsel %vm2988, 65537, 0
        %v3021 = vsel %vm2989, 65537, 0
        %v3022 = vsel %vm2990, 65537, 0
        %v3023 = vsel %vm2991, 65537, 0
        %v3024 = vsel %vm2992, 65537, 0
        %v3025 = vsel %vm2993, 65537, 0
        %v3026 = vunpack.c.l.b16 %v2994
        %v3027 = vunpack.c.l.b16 %v2995
        %v3028 = vunpack.c.l.b16 %v2996
        %v3029 = vunpack.c.l.b16 %v2997
        %v3030 = vunpack.c.l.b16 %v2998
        %v3031 = vunpack.c.l.b16 %v2999
        %v3032 = vunpack.c.l.b16 %v3000
        %v3033 = vunpack.c.l.b16 %v3001
        %v3034 = vunpack.c.l.b16 %v3002
        %v3035 = vunpack.c.l.b16 %v3003
        %v3036 = vunpack.c.l.b16 %v3004
        %v3037 = vunpack.c.l.b16 %v3005
        %v3038 = vunpack.c.l.b16 %v3006
        %v3039 = vunpack.c.l.b16 %v3007
        %v3040 = vunpack.c.l.b16 %v3008
        %v3041 = vunpack.c.l.b16 %v3009
        %v3042 = vunpack.c.l.b16 %v3010
        %v3043 = vunpack.c.l.b16 %v3011
        %v3044 = vunpack.c.l.b16 %v3012
        %v3045 = vunpack.c.l.b16 %v3013
        %v3046 = vunpack.c.l.b16 %v3014
        %v3047 = vunpack.c.l.b16 %v3015
        %v3048 = vunpack.c.l.b16 %v3016
        %v3049 = vunpack.c.l.b16 %v3017
        %v3050 = vunpack.c.l.b16 %v3018
        %v3051 = vunpack.c.l.b16 %v3019
        %v3052 = vunpack.c.l.b16 %v3020
        %v3053 = vunpack.c.l.b16 %v3021
        %v3054 = vunpack.c.l.b16 %v3022
        %v3055 = vunpack.c.l.b16 %v3023
        %v3056 = vunpack.c.l.b16 %v3024
        %v3057 = vunpack.c.l.b16 %v3025
        %v3058 = vpack.c.b16 %v3027, %v3026
        %v3059 = vpack.c.b16 %v3029, %v3028
        %v3060 = vpack.c.b16 %v3031, %v3030
        %v3061 = vpack.c.b16 %v3033, %v3032
        %v3062 = vpack.c.b16 %v3035, %v3034
        %v3063 = vpack.c.b16 %v3037, %v3036
        %v3064 = vpack.c.b16 %v3039, %v3038
        %v3065 = vpack.c.b16 %v3041, %v3040
        %v3066 = vpack.c.b16 %v3043, %v3042
        %v3067 = vpack.c.b16 %v3045, %v3044
        %v3068 = vpack.c.b16 %v3047, %v3046
        %v3069 = vpack.c.b16 %v3049, %v3048
        %v3070 = vpack.c.b16 %v3051, %v3050
        %v3071 = vpack.c.b16 %v3053, %v3052
        %v3072 = vpack.c.b16 %v3055, %v3054
        %v3073 = vpack.c.b16 %v3057, %v3056
        %vm3074 = vcmp.ne.s16.totalorder %v3058, 0
        %vm3075 = vcmp.ne.s16.totalorder %v3059, 0
        %vm3076 = vcmp.ne.s16.totalorder %v3060, 0
        %vm3077 = vcmp.ne.s16.totalorder %v3061, 0
        %vm3078 = vcmp.ne.s16.totalorder %v3062, 0
        %vm3079 = vcmp.ne.s16.totalorder %v3063, 0
        %vm3080 = vcmp.ne.s16.totalorder %v3064, 0
        %vm3081 = vcmp.ne.s16.totalorder %v3065, 0
        %vm3082 = vcmp.ne.s16.totalorder %v3066, 0
        %vm3083 = vcmp.ne.s16.totalorder %v3067, 0
        %vm3084 = vcmp.ne.s16.totalorder %v3068, 0
        %vm3085 = vcmp.ne.s16.totalorder %v3069, 0
        %vm3086 = vcmp.ne.s16.totalorder %v3070, 0
        %vm3087 = vcmp.ne.s16.totalorder %v3071, 0
        %vm3088 = vcmp.ne.s16.totalorder %v3072, 0
        %vm3089 = vcmp.ne.s16.totalorder %v3073, 0
        %v3090 = vsel %vm3074, %v1160, 0
        %v3091 = vsel %vm3075, %v1161, 0
        %v3092 = vsel %vm3076, %v1162, 0
        %v3093 = vsel %vm3077, %v1163, 0
        %v3094 = vsel %vm3078, %v1164, 0
        %v3095 = vsel %vm3079, %v1165, 0
        %v3096 = vsel %vm3080, %v1166, 0
        %v3097 = vsel %vm3081, %v1167, 0
        %v3098 = vsel %vm3082, %v1168, 0
        %v3099 = vsel %vm3083, %v1169, 0
        %v3100 = vsel %vm3084, %v1170, 0
        %v3101 = vsel %vm3085, %v1171, 0
        %v3102 = vsel %vm3086, %v1172, 0
        %v3103 = vsel %vm3087, %v1173, 0
        %v3104 = vsel %vm3088, %v1158, 0
        %v3105 = vsel %vm3089, %v1159, 0
        %v3106 = vld [vmem:[#allocation7 + $0x180] sm:$0xf]
        %v3107 = vld [vmem:[#allocation7 + $0x184] sm:$0xf]
        %v3108 = vld [vmem:[#allocation7 + $0x188] sm:$0xf]
        %v3109 = vld [vmem:[#allocation7 + $0x18c] sm:$0xf]
        %v3110 = vld [vmem:[#allocation7 + $0x190] sm:$0xf]
        %v3111 = vld [vmem:[#allocation7 + $0x194] sm:$0xf]
        %v3112 = vld [vmem:[#allocation7 + $0x198] sm:$0xf]
        %v3113 = vld [vmem:[#allocation7 + $0x19c] sm:$0xf]
        %v3114 = vld [vmem:[#allocation7 + $0x1a0] sm:$0xf]
        %v3115 = vld [vmem:[#allocation7 + $0x1a4] sm:$0xf]
        %v3116 = vld [vmem:[#allocation7 + $0x1a8] sm:$0xf]
        %v3117 = vld [vmem:[#allocation7 + $0x1ac] sm:$0xf]
        %v3118 = vld [vmem:[#allocation7 + $0x1b0] sm:$0xf]
        %v3119 = vld [vmem:[#allocation7 + $0x1b4] sm:$0xf]
        %v3120 = vld [vmem:[#allocation7 + $0x1b8] sm:$0xf]
        %v3121 = vld [vmem:[#allocation7 + $0x1bc] sm:$0xf]
        %v3122 = vld [vmem:[#allocation7 + $0x1c0] sm:$0xf]
        %v3123 = vld [vmem:[#allocation7 + $0x1c4] sm:$0xf]
        %v3124 = vld [vmem:[#allocation7 + $0x1c8] sm:$0xf]
        %v3125 = vld [vmem:[#allocation7 + $0x1cc] sm:$0xf]
        %v3126 = vld [vmem:[#allocation7 + $0x1d0] sm:$0xf]
        %v3127 = vld [vmem:[#allocation7 + $0x1d4] sm:$0xf]
        %v3128 = vld [vmem:[#allocation7 + $0x1d8] sm:$0xf]
        %v3129 = vld [vmem:[#allocation7 + $0x1dc] sm:$0xf]
        %v3130 = vld [vmem:[#allocation7 + $0x1e0] sm:$0xf]
        %v3131 = vld [vmem:[#allocation7 + $0x1e4] sm:$0xf]
        %v3132 = vld [vmem:[#allocation7 + $0x1e8] sm:$0xf]
        %v3133 = vld [vmem:[#allocation7 + $0x1ec] sm:$0xf]
        %v3134 = vld [vmem:[#allocation7 + $0x1f0] sm:$0xf]
        %v3135 = vld [vmem:[#allocation7 + $0x1f4] sm:$0xf]
        %v3136 = vld [vmem:[#allocation7 + $0x1f8] sm:$0xf]
        %v3137 = vld [vmem:[#allocation7 + $0x1fc] sm:$0xf]
        %v3170 = vunpack.c.l.b16 %v3106
        %v3171 = vunpack.c.l.b16 %v3107
        %v3172 = vunpack.c.l.b16 %v3108
        %v3173 = vunpack.c.l.b16 %v3109
        %v3174 = vunpack.c.l.b16 %v3110
        %v3175 = vunpack.c.l.b16 %v3111
        %v3176 = vunpack.c.l.b16 %v3112
        %v3177 = vunpack.c.l.b16 %v3113
        %v3178 = vunpack.c.l.b16 %v3114
        %v3179 = vunpack.c.l.b16 %v3115
        %v3180 = vunpack.c.l.b16 %v3116
        %v3181 = vunpack.c.l.b16 %v3117
        %v3182 = vunpack.c.l.b16 %v3118
        %v3183 = vunpack.c.l.b16 %v3119
        %v3184 = vunpack.c.l.b16 %v3120
        %v3185 = vunpack.c.l.b16 %v3121
        %v3186 = vunpack.c.l.b16 %v3122
        %v3187 = vunpack.c.l.b16 %v3123
        %v3188 = vunpack.c.l.b16 %v3124
        %v3189 = vunpack.c.l.b16 %v3125
        %v3190 = vunpack.c.l.b16 %v3126
        %v3191 = vunpack.c.l.b16 %v3127
        %v3192 = vunpack.c.l.b16 %v3128
        %v3193 = vunpack.c.l.b16 %v3129
        %v3194 = vunpack.c.l.b16 %v3130
        %v3195 = vunpack.c.l.b16 %v3131
        %v3196 = vunpack.c.l.b16 %v3132
        %v3197 = vunpack.c.l.b16 %v3133
        %v3198 = vunpack.c.l.b16 %v3134
        %v3199 = vunpack.c.l.b16 %v3135
        %v3200 = vunpack.c.l.b16 %v3136
        %v3201 = vunpack.c.l.b16 %v3137
        %v3202 = vpack.c.b16 %v3171, %v3170
        %v3203 = vpack.c.b16 %v3173, %v3172
        %v3204 = vpack.c.b16 %v3175, %v3174
        %v3205 = vpack.c.b16 %v3177, %v3176
        %v3206 = vpack.c.b16 %v3179, %v3178
        %v3207 = vpack.c.b16 %v3181, %v3180
        %v3208 = vpack.c.b16 %v3183, %v3182
        %v3209 = vpack.c.b16 %v3185, %v3184
        %v3210 = vpack.c.b16 %v3187, %v3186
        %v3211 = vpack.c.b16 %v3189, %v3188
        %v3212 = vpack.c.b16 %v3191, %v3190
        %v3213 = vpack.c.b16 %v3193, %v3192
        %v3214 = vpack.c.b16 %v3195, %v3194
        %v3215 = vpack.c.b16 %v3197, %v3196
        %v3216 = vpack.c.b16 %v3199, %v3198
        %v3217 = vpack.c.b16 %v3201, %v3200
        %3234 = vmatprep.subr.bf16.mxu0 0
        %3235 = vmatpush1.bf16.msra.mxu0 %v3202
        %3236 = vmatprep.subr.bf16.mxu0 0
        %3237 = vmatpush1.bf16.msra.mxu0 %v3203
        %3238 = vmatprep.subr.bf16.mxu0 0
        %3239 = vmatpush1.bf16.msra.mxu0 %v3204
        %3240 = vmatprep.subr.bf16.mxu0 0
        %3241 = vmatpush1.bf16.msra.mxu0 %v3205
        %3242 = vmatprep.subr.bf16.mxu0 0
        %3243 = vmatpush1.bf16.msra.mxu0 %v3206
        %3244 = vmatprep.subr.bf16.mxu0 0
        %3245 = vmatpush1.bf16.msra.mxu0 %v3207
        %3246 = vmatprep.subr.bf16.mxu0 0
        %3247 = vmatpush1.bf16.msra.mxu0 %v3208
        %3248 = vmatprep.subr.bf16.mxu0 0
        %3249 = vmatpush1.bf16.msra.mxu0 %v3209
        %3250 = vmatprep.subr.bf16.mxu0 0
        %3251 = vmatpush1.bf16.msra.mxu0 %v3210
        %3252 = vmatprep.subr.bf16.mxu0 0
        %3253 = vmatpush1.bf16.msra.mxu0 %v3211
        %3254 = vmatprep.subr.bf16.mxu0 0
        %3255 = vmatpush1.bf16.msra.mxu0 %v3212
        %3256 = vmatprep.subr.bf16.mxu0 0
        %3257 = vmatpush1.bf16.msra.mxu0 %v3213
        %3258 = vmatprep.subr.bf16.mxu0 0
        %3259 = vmatpush1.bf16.msra.mxu0 %v3214
        %3260 = vmatprep.subr.bf16.mxu0 0
        %3261 = vmatpush1.bf16.msra.mxu0 %v3215
        %3262 = vmatprep.subr.bf16.mxu0 0
        %3263 = vmatpush1.bf16.msra.mxu0 %v3216
        %3264 = vmatprep.subr.bf16.mxu0 0
        %3265 = vmatpush1.bf16.msra.mxu0 %v3217
        %3266 = vmatprep.mubr.bf16.mxu0 %v3090
        %3267 = vmatmul.mubr.bf16.gmra.mrb[0].mxu0 %v2882
        %v3268 = vpop.f32.mrb[0].mxu0
        %v3269 = vadd.f32 0.0, %v3268
        %v3270 = vpop.f32.mrb[0].mxu0
        %v3271 = vpop.f32.mrb[0].mxu0
        %v3272 = vadd.f32 0.0, %v3271
        %v3273 = vpop.f32.mrb[0].mxu0
        %3274 = vmatprep.mubr.bf16.mxu0 %v3091
        %3275 = vmatmul.mubr.bf16.gmra.mrb[0].mxu0 %v2883
        %v3276 = vpop.f32.mrb[0].mxu0
        %v3277 = vadd.f32 0.0, %v3276
        %v3278 = vpop.f32.mrb[0].mxu0
        %v3279 = vpop.f32.mrb[0].mxu0
        %v3280 = vadd.f32 0.0, %v3279
        %v3281 = vpop.f32.mrb[0].mxu0
        %3282 = vmatprep.mubr.bf16.mxu0 %v3092
        %3283 = vmatmul.mubr.bf16.gmra.mrb[0].mxu0 %v2884
        %v3284 = vpop.f32.mrb[0].mxu0
        %v3285 = vadd.f32 0.0, %v3284
        %v3286 = vpop.f32.mrb[0].mxu0
        %v3287 = vpop.f32.mrb[0].mxu0
        %v3288 = vadd.f32 0.0, %v3287
        %v3289 = vpop.f32.mrb[0].mxu0
        %3290 = vmatprep.mubr.bf16.mxu0 %v3093
        %3291 = vmatmul.mubr.bf16.gmra.mrb[0].mxu0 %v2885
        %v3292 = vpop.f32.mrb[0].mxu0
        %v3293 = vadd.f32 0.0, %v3292
        %v3294 = vpop.f32.mrb[0].mxu0
        %v3295 = vpop.f32.mrb[0].mxu0
        %v3296 = vadd.f32 0.0, %v3295
        %v3297 = vpop.f32.mrb[0].mxu0
        %3298 = vmatprep.mubr.bf16.mxu0 %v3094
        %3299 = vmatmul.mubr.bf16.gmra.mrb[0].mxu0 %v2886
        %v3300 = vpop.f32.mrb[0].mxu0
        %v3301 = vadd.f32 0.0, %v3300
        %v3302 = vpop.f32.mrb[0].mxu0
        %v3303 = vpop.f32.mrb[0].mxu0
        %v3304 = vadd.f32 0.0, %v3303
        %v3305 = vpop.f32.mrb[0].mxu0
        %3306 = vmatprep.mubr.bf16.mxu0 %v3095
        %3307 = vmatmul.mubr.bf16.gmra.mrb[0].mxu0 %v2887
        %v3308 = vpop.f32.mrb[0].mxu0
        %v3309 = vadd.f32 0.0, %v3308
        %v3310 = vpop.f32.mrb[0].mxu0
        %v3311 = vpop.f32.mrb[0].mxu0
        %v3312 = vadd.f32 0.0, %v3311
        %v3313 = vpop.f32.mrb[0].mxu0
        %3314 = vmatprep.mubr.bf16.mxu0 %v3096
        %3315 = vmatmul.mubr.bf16.gmra.mrb[0].mxu0 %v2888
        %v3316 = vpop.f32.mrb[0].mxu0
        %v3317 = vadd.f32 0.0, %v3316
        %v3318 = vpop.f32.mrb[0].mxu0
        %v3319 = vpop.f32.mrb[0].mxu0
        %v3320 = vadd.f32 0.0, %v3319
        %v3321 = vpop.f32.mrb[0].mxu0
        %3322 = vmatprep.mubr.bf16.mxu0 %v3097
        %3323 = vmatmul.mubr.bf16.gmra.mrb[0].mxu0 %v2889
        %v3324 = vpop.f32.mrb[0].mxu0
        %v3325 = vadd.f32 0.0, %v3324
        %v3326 = vpop.f32.mrb[0].mxu0
        %v3327 = vpop.f32.mrb[0].mxu0
        %v3328 = vadd.f32 0.0, %v3327
        %v3329 = vpop.f32.mrb[0].mxu0
        %3330 = vmatprep.mubr.bf16.mxu0 %v3098
        %3331 = vmatmul.mubr.bf16.gmra.mrb[0].mxu0 %v2890
        %v3332 = vpop.f32.mrb[0].mxu0
        %v3333 = vadd.f32 0.0, %v3332
        %v3334 = vpop.f32.mrb[0].mxu0
        %v3335 = vpop.f32.mrb[0].mxu0
        %v3336 = vadd.f32 0.0, %v3335
        %v3337 = vpop.f32.mrb[0].mxu0
        %3338 = vmatprep.mubr.bf16.mxu0 %v3099
        %3339 = vmatmul.mubr.bf16.gmra.mrb[0].mxu0 %v2891
        %v3340 = vpop.f32.mrb[0].mxu0
        %v3341 = vadd.f32 0.0, %v3340
        %v3342 = vpop.f32.mrb[0].mxu0
        %v3343 = vpop.f32.mrb[0].mxu0
        %v3344 = vadd.f32 0.0, %v3343
        %v3345 = vpop.f32.mrb[0].mxu0
        %3346 = vmatprep.mubr.bf16.mxu0 %v3100
        %3347 = vmatmul.mubr.bf16.gmra.mrb[0].mxu0 %v2892
        %v3348 = vpop.f32.mrb[0].mxu0
        %v3349 = vadd.f32 0.0, %v3348
        %v3350 = vpop.f32.mrb[0].mxu0
        %v3351 = vpop.f32.mrb[0].mxu0
        %v3352 = vadd.f32 0.0, %v3351
        %v3353 = vpop.f32.mrb[0].mxu0
        %3354 = vmatprep.mubr.bf16.mxu0 %v3101
        %3355 = vmatmul.mubr.bf16.gmra.mrb[0].mxu0 %v2893
        %v3356 = vpop.f32.mrb[0].mxu0
        %v3357 = vadd.f32 0.0, %v3356
        %v3358 = vpop.f32.mrb[0].mxu0
        %v3359 = vpop.f32.mrb[0].mxu0
        %v3360 = vadd.f32 0.0, %v3359
        %v3361 = vpop.f32.mrb[0].mxu0
        %3362 = vmatprep.mubr.bf16.mxu0 %v3102
        %3363 = vmatmul.mubr.bf16.gmra.mrb[0].mxu0 %v2894
        %v3364 = vpop.f32.mrb[0].mxu0
        %v3365 = vadd.f32 0.0, %v3364
        %v3366 = vpop.f32.mrb[0].mxu0
        %v3367 = vpop.f32.mrb[0].mxu0
        %v3368 = vadd.f32 0.0, %v3367
        %v3369 = vpop.f32.mrb[0].mxu0
        %3370 = vmatprep.mubr.bf16.mxu0 %v3103
        %3371 = vmatmul.mubr.bf16.gmra.mrb[0].mxu0 %v2895
        %v3372 = vpop.f32.mrb[0].mxu0
        %v3373 = vadd.f32 0.0, %v3372
        %v3374 = vpop.f32.mrb[0].mxu0
        %v3375 = vpop.f32.mrb[0].mxu0
        %v3376 = vadd.f32 0.0, %v3375
        %v3377 = vpop.f32.mrb[0].mxu0
        %3378 = vmatprep.mubr.bf16.mxu0 %v3104
        %3379 = vmatmul.mubr.bf16.gmra.mrb[0].mxu0 %v2896
        %v3380 = vpop.f32.mrb[0].mxu0
        %v3381 = vadd.f32 0.0, %v3380
        %v3382 = vpop.f32.mrb[0].mxu0
        %v3383 = vpop.f32.mrb[0].mxu0
        %v3384 = vadd.f32 0.0, %v3383
        %v3385 = vpop.f32.mrb[0].mxu0
        %3386 = vmatprep.mubr.bf16.mxu0 %v3105
        %3387 = vmatmul.mubr.bf16.gmra.mrb[0].mxu0 %v2897
        %v3388 = vpop.f32.mrb[0].mxu0
        %v3389 = vadd.f32 0.0, %v3388
        %v3390 = vpop.f32.mrb[0].mxu0
        %v3391 = vpop.f32.mrb[0].mxu0
        %v3392 = vadd.f32 0.0, %v3391
        %v3393 = vpop.f32.mrb[0].mxu0
        %3394 = vdwg.mxu0
        %v3395 = vadd.f32 %v2626, %v3269
        %v3396 = vadd.f32 %v2627, %v3272
        %v3397 = vadd.f32 %v2628, %v3277
        %v3398 = vadd.f32 %v2629, %v3280
        %v3399 = vadd.f32 %v2630, %v3285
        %v3400 = vadd.f32 %v2631, %v3288
        %v3401 = vadd.f32 %v2632, %v3293
        %v3402 = vadd.f32 %v2633, %v3296
        %v3403 = vadd.f32 %v2634, %v3301
        %v3404 = vadd.f32 %v2635, %v3304
        %v3405 = vadd.f32 %v2636, %v3309
        %v3406 = vadd.f32 %v2637, %v3312
        %v3407 = vadd.f32 %v2638, %v3317
        %v3408 = vadd.f32 %v2639, %v3320
        %v3409 = vadd.f32 %v2640, %v3325
        %v3410 = vadd.f32 %v2641, %v3328
        %v3411 = vadd.f32 %v2642, %v3333
        %v3412 = vadd.f32 %v2643, %v3336
        %v3413 = vadd.f32 %v2644, %v3341
        %v3414 = vadd.f32 %v2645, %v3344
        %v3415 = vadd.f32 %v2646, %v3349
        %v3416 = vadd.f32 %v2647, %v3352
        %v3417 = vadd.f32 %v2648, %v3357
        %v3418 = vadd.f32 %v2649, %v3360
        %v3419 = vadd.f32 %v2650, %v3365
        %v3420 = vadd.f32 %v2651, %v3368
        %v3421 = vadd.f32 %v2652, %v3373
        %v3422 = vadd.f32 %v2653, %v3376
        %v3423 = vadd.f32 %v2654, %v3381
        %v3424 = vadd.f32 %v2655, %v3384
        %v3425 = vadd.f32 %v2656, %v3389
        %v3426 = vadd.f32 %v2657, %v3392
        %vm3427 = vmand %vm805, %vm771
        %vm3428 = vmand %vm806, %vm772
        %vm3429 = vmand %vm807, %vm771
        %vm3430 = vmand %vm808, %vm772
        %vm3431 = vmand %vm809, %vm771
        %vm3432 = vmand %vm810, %vm772
        %vm3433 = vmand %vm811, %vm771
        %vm3434 = vmand %vm812, %vm772
        %vm3435 = vmand %vm813, %vm771
        %vm3436 = vmand %vm814, %vm772
        %vm3437 = vmand %vm815, %vm771
        %vm3438 = vmand %vm816, %vm772
        %vm3439 = vmand %vm817, %vm771
        %vm3440 = vmand %vm818, %vm772
        %vm3441 = vmand %vm819, %vm771
        %vm3442 = vmand %vm820, %vm772
        %vm3443 = vmand %vm821, %vm771
        %vm3444 = vmand %vm822, %vm772
        %vm3445 = vmand %vm823, %vm771
        %vm3446 = vmand %vm824, %vm772
        %vm3447 = vmand %vm825, %vm771
        %vm3448 = vmand %vm826, %vm772
        %vm3449 = vmand %vm827, %vm771
        %vm3450 = vmand %vm828, %vm772
        %vm3451 = vmand %vm829, %vm771
        %vm3452 = vmand %vm830, %vm772
        %vm3453 = vmand %vm831, %vm771
        %vm3454 = vmand %vm832, %vm772
        %vm3455 = vmand %vm833, %vm771
        %vm3456 = vmand %vm834, %vm772
        %vm3457 = vmand %vm835, %vm771
        %vm3458 = vmand %vm836, %vm772
        %v3459 = vsel %vm3427, 1, 0
        %v3460 = vsel %vm3428, 1, 0
        %v3461 = vsel %vm3429, 1, 0
        %v3462 = vsel %vm3430, 1, 0
        %v3463 = vsel %vm3431, 1, 0
        %v3464 = vsel %vm3432, 1, 0
        %v3465 = vsel %vm3433, 1, 0
        %v3466 = vsel %vm3434, 1, 0
        %v3467 = vsel %vm3435, 1, 0
        %v3468 = vsel %vm3436, 1, 0
        %v3469 = vsel %vm3437, 1, 0
        %v3470 = vsel %vm3438, 1, 0
        %v3471 = vsel %vm3439, 1, 0
        %v3472 = vsel %vm3440, 1, 0
        %v3473 = vsel %vm3441, 1, 0
        %v3474 = vsel %vm3442, 1, 0
        %v3475 = vsel %vm3443, 1, 0
        %v3476 = vsel %vm3444, 1, 0
        %v3477 = vsel %vm3445, 1, 0
        %v3478 = vsel %vm3446, 1, 0
        %v3479 = vsel %vm3447, 1, 0
        %v3480 = vsel %vm3448, 1, 0
        %v3481 = vsel %vm3449, 1, 0
        %v3482 = vsel %vm3450, 1, 0
        %v3483 = vsel %vm3451, 1, 0
        %v3484 = vsel %vm3452, 1, 0
        %v3485 = vsel %vm3453, 1, 0
        %v3486 = vsel %vm3454, 1, 0
        %v3487 = vsel %vm3455, 1, 0
        %v3488 = vsel %vm3456, 1, 0
        %v3489 = vsel %vm3457, 1, 0
        %v3490 = vsel %vm3458, 1, 0
        %vm3491 = vcmp.eq.s32.totalorder %v3459, 1
        %vm3492 = vcmp.eq.s32.totalorder %v3460, 1
        %vm3493 = vcmp.eq.s32.totalorder %v3461, 1
        %vm3494 = vcmp.eq.s32.totalorder %v3462, 1
        %vm3495 = vcmp.eq.s32.totalorder %v3463, 1
        %vm3496 = vcmp.eq.s32.totalorder %v3464, 1
        %vm3497 = vcmp.eq.s32.totalorder %v3465, 1
        %vm3498 = vcmp.eq.s32.totalorder %v3466, 1
        %vm3499 = vcmp.eq.s32.totalorder %v3467, 1
        %vm3500 = vcmp.eq.s32.totalorder %v3468, 1
        %vm3501 = vcmp.eq.s32.totalorder %v3469, 1
        %vm3502 = vcmp.eq.s32.totalorder %v3470, 1
        %vm3503 = vcmp.eq.s32.totalorder %v3471, 1
        %vm3504 = vcmp.eq.s32.totalorder %v3472, 1
        %vm3505 = vcmp.eq.s32.totalorder %v3473, 1
        %vm3506 = vcmp.eq.s32.totalorder %v3474, 1
        %vm3507 = vcmp.eq.s32.totalorder %v3475, 1
        %vm3508 = vcmp.eq.s32.totalorder %v3476, 1
        %vm3509 = vcmp.eq.s32.totalorder %v3477, 1
        %vm3510 = vcmp.eq.s32.totalorder %v3478, 1
        %vm3511 = vcmp.eq.s32.totalorder %v3479, 1
        %vm3512 = vcmp.eq.s32.totalorder %v3480, 1
        %vm3513 = vcmp.eq.s32.totalorder %v3481, 1
        %vm3514 = vcmp.eq.s32.totalorder %v3482, 1
        %vm3515 = vcmp.eq.s32.totalorder %v3483, 1
        %vm3516 = vcmp.eq.s32.totalorder %v3484, 1
        %vm3517 = vcmp.eq.s32.totalorder %v3485, 1
        %vm3518 = vcmp.eq.s32.totalorder %v3486, 1
        %vm3519 = vcmp.eq.s32.totalorder %v3487, 1
        %vm3520 = vcmp.eq.s32.totalorder %v3488, 1
        %vm3521 = vcmp.eq.s32.totalorder %v3489, 1
        %vm3522 = vcmp.eq.s32.totalorder %v3490, 1
        %vm3523 = vmpackc.low %vm3491, %vm3491
        %vm3524 = vmpackc.low %vm3492, %vm3492
        %vm3525 = vmpackc.low %vm3493, %vm3493
        %vm3526 = vmpackc.low %vm3494, %vm3494
        %vm3527 = vmpackc.low %vm3495, %vm3495
        %vm3528 = vmpackc.low %vm3496, %vm3496
        %vm3529 = vmpackc.low %vm3497, %vm3497
        %vm3530 = vmpackc.low %vm3498, %vm3498
        %vm3531 = vmpackc.low %vm3499, %vm3499
        %vm3532 = vmpackc.low %vm3500, %vm3500
        %vm3533 = vmpackc.low %vm3501, %vm3501
        %vm3534 = vmpackc.low %vm3502, %vm3502
        %vm3535 = vmpackc.low %vm3503, %vm3503
        %vm3536 = vmpackc.low %vm3504, %vm3504
        %vm3537 = vmpackc.low %vm3505, %vm3505
        %vm3538 = vmpackc.low %vm3506, %vm3506
        %vm3539 = vmpackc.low %vm3507, %vm3507
        %vm3540 = vmpackc.low %vm3508, %vm3508
        %vm3541 = vmpackc.low %vm3509, %vm3509
        %vm3542 = vmpackc.low %vm3510, %vm3510
        %vm3543 = vmpackc.low %vm3511, %vm3511
        %vm3544 = vmpackc.low %vm3512, %vm3512
        %vm3545 = vmpackc.low %vm3513, %vm3513
        %vm3546 = vmpackc.low %vm3514, %vm3514
        %vm3547 = vmpackc.low %vm3515, %vm3515
        %vm3548 = vmpackc.low %vm3516, %vm3516
        %vm3549 = vmpackc.low %vm3517, %vm3517
        %vm3550 = vmpackc.low %vm3518, %vm3518
        %vm3551 = vmpackc.low %vm3519, %vm3519
        %vm3552 = vmpackc.low %vm3520, %vm3520
        %vm3553 = vmpackc.low %vm3521, %vm3521
        %vm3554 = vmpackc.low %vm3522, %vm3522
        %v3555 = vsel %vm3523, 65537, 0
        %v3556 = vsel %vm3524, 65537, 0
        %v3557 = vsel %vm3525, 65537, 0
        %v3558 = vsel %vm3526, 65537, 0
        %v3559 = vsel %vm3527, 65537, 0
        %v3560 = vsel %vm3528, 65537, 0
        %v3561 = vsel %vm3529, 65537, 0
        %v3562 = vsel %vm3530, 65537, 0
        %v3563 = vsel %vm3531, 65537, 0
        %v3564 = vsel %vm3532, 65537, 0
        %v3565 = vsel %vm3533, 65537, 0
        %v3566 = vsel %vm3534, 65537, 0
        %v3567 = vsel %vm3535, 65537, 0
        %v3568 = vsel %vm3536, 65537, 0
        %v3569 = vsel %vm3537, 65537, 0
        %v3570 = vsel %vm3538, 65537, 0
        %v3571 = vsel %vm3539, 65537, 0
        %v3572 = vsel %vm3540, 65537, 0
        %v3573 = vsel %vm3541, 65537, 0
        %v3574 = vsel %vm3542, 65537, 0
        %v3575 = vsel %vm3543, 65537, 0
        %v3576 = vsel %vm3544, 65537, 0
        %v3577 = vsel %vm3545, 65537, 0
        %v3578 = vsel %vm3546, 65537, 0
        %v3579 = vsel %vm3547, 65537, 0
        %v3580 = vsel %vm3548, 65537, 0
        %v3581 = vsel %vm3549, 65537, 0
        %v3582 = vsel %vm3550, 65537, 0
        %v3583 = vsel %vm3551, 65537, 0
        %v3584 = vsel %vm3552, 65537, 0
        %v3585 = vsel %vm3553, 65537, 0
        %v3586 = vsel %vm3554, 65537, 0
        %v3587 = vunpack.c.l.b16 %v3555
        %v3588 = vunpack.c.l.b16 %v3556
        %v3589 = vunpack.c.l.b16 %v3557
        %v3590 = vunpack.c.l.b16 %v3558
        %v3591 = vunpack.c.l.b16 %v3559
        %v3592 = vunpack.c.l.b16 %v3560
        %v3593 = vunpack.c.l.b16 %v3561
        %v3594 = vunpack.c.l.b16 %v3562
        %v3595 = vunpack.c.l.b16 %v3563
        %v3596 = vunpack.c.l.b16 %v3564
        %v3597 = vunpack.c.l.b16 %v3565
        %v3598 = vunpack.c.l.b16 %v3566
        %v3599 = vunpack.c.l.b16 %v3567
        %v3600 = vunpack.c.l.b16 %v3568
        %v3601 = vunpack.c.l.b16 %v3569
        %v3602 = vunpack.c.l.b16 %v3570
        %v3603 = vunpack.c.l.b16 %v3571
        %v3604 = vunpack.c.l.b16 %v3572
        %v3605 = vunpack.c.l.b16 %v3573
        %v3606 = vunpack.c.l.b16 %v3574
        %v3607 = vunpack.c.l.b16 %v3575
        %v3608 = vunpack.c.l.b16 %v3576
        %v3609 = vunpack.c.l.b16 %v3577
        %v3610 = vunpack.c.l.b16 %v3578
        %v3611 = vunpack.c.l.b16 %v3579
        %v3612 = vunpack.c.l.b16 %v3580
        %v3613 = vunpack.c.l.b16 %v3581
        %v3614 = vunpack.c.l.b16 %v3582
        %v3615 = vunpack.c.l.b16 %v3583
        %v3616 = vunpack.c.l.b16 %v3584
        %v3617 = vunpack.c.l.b16 %v3585
        %v3618 = vunpack.c.l.b16 %v3586
        %v3619 = vpack.c.b16 %v3588, %v3587
        %v3620 = vpack.c.b16 %v3590, %v3589
        %v3621 = vpack.c.b16 %v3592, %v3591
        %v3622 = vpack.c.b16 %v3594, %v3593
        %v3623 = vpack.c.b16 %v3596, %v3595
        %v3624 = vpack.c.b16 %v3598, %v3597
        %v3625 = vpack.c.b16 %v3600, %v3599
        %v3626 = vpack.c.b16 %v3602, %v3601
        %v3627 = vpack.c.b16 %v3604, %v3603
        %v3628 = vpack.c.b16 %v3606, %v3605
        %v3629 = vpack.c.b16 %v3608, %v3607
        %v3630 = vpack.c.b16 %v3610, %v3609
        %v3631 = vpack.c.b16 %v3612, %v3611
        %v3632 = vpack.c.b16 %v3614, %v3613
        %v3633 = vpack.c.b16 %v3616, %v3615
        %v3634 = vpack.c.b16 %v3618, %v3617
        %vm3635 = vcmp.ne.s16.totalorder %v3619, 0
        %vm3636 = vcmp.ne.s16.totalorder %v3620, 0
        %vm3637 = vcmp.ne.s16.totalorder %v3621, 0
        %vm3638 = vcmp.ne.s16.totalorder %v3622, 0
        %vm3639 = vcmp.ne.s16.totalorder %v3623, 0
        %vm3640 = vcmp.ne.s16.totalorder %v3624, 0
        %vm3641 = vcmp.ne.s16.totalorder %v3625, 0
        %vm3642 = vcmp.ne.s16.totalorder %v3626, 0
        %vm3643 = vcmp.ne.s16.totalorder %v3627, 0
        %vm3644 = vcmp.ne.s16.totalorder %v3628, 0
        %vm3645 = vcmp.ne.s16.totalorder %v3629, 0
        %vm3646 = vcmp.ne.s16.totalorder %v3630, 0
        %vm3647 = vcmp.ne.s16.totalorder %v3631, 0
        %vm3648 = vcmp.ne.s16.totalorder %v3632, 0
        %vm3649 = vcmp.ne.s16.totalorder %v3633, 0
        %vm3650 = vcmp.ne.s16.totalorder %v3634, 0
        %v3651 = vsel %vm3635, %v1481, 0
        %v3652 = vsel %vm3636, %v1482, 0
        %v3653 = vsel %vm3637, %v1483, 0
        %v3654 = vsel %vm3638, %v1484, 0
        %v3655 = vsel %vm3639, %v1485, 0
        %v3656 = vsel %vm3640, %v1486, 0
        %v3657 = vsel %vm3641, %v1487, 0
        %v3658 = vsel %vm3642, %v1488, 0
        %v3659 = vsel %vm3643, %v1489, 0
        %v3660 = vsel %vm3644, %v1490, 0
        %v3661 = vsel %vm3645, %v1491, 0
        %v3662 = vsel %vm3646, %v1492, 0
        %v3663 = vsel %vm3647, %v1493, 0
        %v3664 = vsel %vm3648, %v1494, 0
        %v3665 = vsel %vm3649, %v1479, 0
        %v3666 = vsel %vm3650, %v1480, 0
        %v3667 = vld [vmem:[#allocation7 + $0x200] sm:$0xf]
        %v3668 = vld [vmem:[#allocation7 + $0x204] sm:$0xf]
        %v3669 = vld [vmem:[#allocation7 + $0x208] sm:$0xf]
        %v3670 = vld [vmem:[#allocation7 + $0x20c] sm:$0xf]
        %v3671 = vld [vmem:[#allocation7 + $0x210] sm:$0xf]
        %v3672 = vld [vmem:[#allocation7 + $0x214] sm:$0xf]
        %v3673 = vld [vmem:[#allocation7 + $0x218] sm:$0xf]
        %v3674 = vld [vmem:[#allocation7 + $0x21c] sm:$0xf]
        %v3675 = vld [vmem:[#allocation7 + $0x220] sm:$0xf]
        %v3676 = vld [vmem:[#allocation7 + $0x224] sm:$0xf]
        %v3677 = vld [vmem:[#allocation7 + $0x228] sm:$0xf]
        %v3678 = vld [vmem:[#allocation7 + $0x22c] sm:$0xf]
        %v3679 = vld [vmem:[#allocation7 + $0x230] sm:$0xf]
        %v3680 = vld [vmem:[#allocation7 + $0x234] sm:$0xf]
        %v3681 = vld [vmem:[#allocation7 + $0x238] sm:$0xf]
        %v3682 = vld [vmem:[#allocation7 + $0x23c] sm:$0xf]
        %v3699 = vunpack.c.l.b16 %v3667
        %v3700 = vunpack.c.l.b16 %v3668
        %v3701 = vunpack.c.l.b16 %v3669
        %v3702 = vunpack.c.l.b16 %v3670
        %v3703 = vunpack.c.l.b16 %v3671
        %v3704 = vunpack.c.l.b16 %v3672
        %v3705 = vunpack.c.l.b16 %v3673
        %v3706 = vunpack.c.l.b16 %v3674
        %v3707 = vunpack.c.l.b16 %v3675
        %v3708 = vunpack.c.l.b16 %v3676
        %v3709 = vunpack.c.l.b16 %v3677
        %v3710 = vunpack.c.l.b16 %v3678
        %v3711 = vunpack.c.l.b16 %v3679
        %v3712 = vunpack.c.l.b16 %v3680
        %v3713 = vunpack.c.l.b16 %v3681
        %v3714 = vunpack.c.l.b16 %v3682
        %v3715 = vpack.c.b16 %v3700, %v3699
        %v3716 = vpack.c.b16 %v3702, %v3701
        %v3717 = vpack.c.b16 %v3704, %v3703
        %v3718 = vpack.c.b16 %v3706, %v3705
        %v3719 = vpack.c.b16 %v3708, %v3707
        %v3720 = vpack.c.b16 %v3710, %v3709
        %v3721 = vpack.c.b16 %v3712, %v3711
        %v3722 = vpack.c.b16 %v3714, %v3713
        %3731 = vmatprep.subr.bf16.mxu0 0
        %3732 = vmatpush1.bf16.msra.mxu0 %v3715
        %3733 = vmatprep.subr.bf16.mxu0 0
        %3734 = vmatpush1.bf16.msra.mxu0 %v3716
        %3735 = vmatprep.subr.bf16.mxu0 0
        %3736 = vmatpush1.bf16.msra.mxu0 %v3717
        %3737 = vmatprep.subr.bf16.mxu0 0
        %3738 = vmatpush1.bf16.msra.mxu0 %v3718
        %3739 = vmatprep.subr.bf16.mxu0 0
        %3740 = vmatpush1.bf16.msra.mxu0 %v3719
        %3741 = vmatprep.subr.bf16.mxu0 0
        %3742 = vmatpush1.bf16.msra.mxu0 %v3720
        %3743 = vmatprep.subr.bf16.mxu0 0
        %3744 = vmatpush1.bf16.msra.mxu0 %v3721
        %3745 = vmatprep.subr.bf16.mxu0 0
        %3746 = vmatpush1.bf16.msra.mxu0 %v3722
        %3747 = vmatprep.subr.bf16.mxu0 0
        %3748 = vmatpush1.bf16.msra.mxu0 0
        %3749 = vmatprep.subr.bf16.mxu0 0
        %3750 = vmatpush1.bf16.msra.mxu0 0
        %3751 = vmatprep.subr.bf16.mxu0 0
        %3752 = vmatpush1.bf16.msra.mxu0 0
        %3753 = vmatprep.subr.bf16.mxu0 0
        %3754 = vmatpush1.bf16.msra.mxu0 0
        %3755 = vmatprep.subr.bf16.mxu0 0
        %3756 = vmatpush1.bf16.msra.mxu0 0
        %3757 = vmatprep.subr.bf16.mxu0 0
        %3758 = vmatpush1.bf16.msra.mxu0 0
        %3759 = vmatprep.subr.bf16.mxu0 0
        %3760 = vmatpush1.bf16.msra.mxu0 0
        %3761 = vmatprep.subr.bf16.mxu0 0
        %3762 = vmatpush1.bf16.msra.mxu0 0
        %3763 = vmatprep.mubr.bf16.mxu0 0
        %3764 = vmatmul.mubr.bf16.gmra.mrb[0].mxu0 %v3651
        %v3765 = vpop.f32.mrb[0].mxu0
        %v3766 = vadd.f32 0.0, %v3765
        %v3767 = vpop.f32.mrb[0].mxu0
        %v3768 = vpop.f32.mrb[0].mxu0
        %v3769 = vadd.f32 0.0, %v3768
        %v3770 = vpop.f32.mrb[0].mxu0
        %3771 = vmatprep.mubr.bf16.mxu0 0
        %3772 = vmatmul.mubr.bf16.gmra.mrb[0].mxu0 %v3652
        %v3773 = vpop.f32.mrb[0].mxu0
        %v3774 = vadd.f32 0.0, %v3773
        %v3775 = vpop.f32.mrb[0].mxu0
        %v3776 = vpop.f32.mrb[0].mxu0
        %v3777 = vadd.f32 0.0, %v3776
        %v3778 = vpop.f32.mrb[0].mxu0
        %3779 = vmatprep.mubr.bf16.mxu0 0
        %3780 = vmatmul.mubr.bf16.gmra.mrb[0].mxu0 %v3653
        %v3781 = vpop.f32.mrb[0].mxu0
        %v3782 = vadd.f32 0.0, %v3781
        %v3783 = vpop.f32.mrb[0].mxu0
        %v3784 = vpop.f32.mrb[0].mxu0
        %v3785 = vadd.f32 0.0, %v3784
        %v3786 = vpop.f32.mrb[0].mxu0
        %3787 = vmatprep.mubr.bf16.mxu0 0
        %3788 = vmatmul.mubr.bf16.gmra.mrb[0].mxu0 %v3654
        %v3789 = vpop.f32.mrb[0].mxu0
        %v3790 = vadd.f32 0.0, %v3789
        %v3791 = vpop.f32.mrb[0].mxu0
        %v3792 = vpop.f32.mrb[0].mxu0
        %v3793 = vadd.f32 0.0, %v3792
        %v3794 = vpop.f32.mrb[0].mxu0
        %3795 = vmatprep.mubr.bf16.mxu0 0
        %3796 = vmatmul.mubr.bf16.gmra.mrb[0].mxu0 %v3655
        %v3797 = vpop.f32.mrb[0].mxu0
        %v3798 = vadd.f32 0.0, %v3797
        %v3799 = vpop.f32.mrb[0].mxu0
        %v3800 = vpop.f32.mrb[0].mxu0
        %v3801 = vadd.f32 0.0, %v3800
        %v3802 = vpop.f32.mrb[0].mxu0
        %3803 = vmatprep.mubr.bf16.mxu0 0
        %3804 = vmatmul.mubr.bf16.gmra.mrb[0].mxu0 %v3656
        %v3805 = vpop.f32.mrb[0].mxu0
        %v3806 = vadd.f32 0.0, %v3805
        %v3807 = vpop.f32.mrb[0].mxu0
        %v3808 = vpop.f32.mrb[0].mxu0
        %v3809 = vadd.f32 0.0, %v3808
        %v3810 = vpop.f32.mrb[0].mxu0
        %3811 = vmatprep.mubr.bf16.mxu0 0
        %3812 = vmatmul.mubr.bf16.gmra.mrb[0].mxu0 %v3657
        %v3813 = vpop.f32.mrb[0].mxu0
        %v3814 = vadd.f32 0.0, %v3813
        %v3815 = vpop.f32.mrb[0].mxu0
        %v3816 = vpop.f32.mrb[0].mxu0
        %v3817 = vadd.f32 0.0, %v3816
        %v3818 = vpop.f32.mrb[0].mxu0
        %3819 = vmatprep.mubr.bf16.mxu0 0
        %3820 = vmatmul.mubr.bf16.gmra.mrb[0].mxu0 %v3658
        %v3821 = vpop.f32.mrb[0].mxu0
        %v3822 = vadd.f32 0.0, %v3821
        %v3823 = vpop.f32.mrb[0].mxu0
        %v3824 = vpop.f32.mrb[0].mxu0
        %v3825 = vadd.f32 0.0, %v3824
        %v3826 = vpop.f32.mrb[0].mxu0
        %3827 = vmatprep.mubr.bf16.mxu0 0
        %3828 = vmatmul.mubr.bf16.gmra.mrb[0].mxu0 %v3659
        %v3829 = vpop.f32.mrb[0].mxu0
        %v3830 = vadd.f32 0.0, %v3829
        %v3831 = vpop.f32.mrb[0].mxu0
        %v3832 = vpop.f32.mrb[0].mxu0
        %v3833 = vadd.f32 0.0, %v3832
        %v3834 = vpop.f32.mrb[0].mxu0
        %3835 = vmatprep.mubr.bf16.mxu0 0
        %3836 = vmatmul.mubr.bf16.gmra.mrb[0].mxu0 %v3660
        %v3837 = vpop.f32.mrb[0].mxu0
        %v3838 = vadd.f32 0.0, %v3837
        %v3839 = vpop.f32.mrb[0].mxu0
        %v3840 = vpop.f32.mrb[0].mxu0
        %v3841 = vadd.f32 0.0, %v3840
        %v3842 = vpop.f32.mrb[0].mxu0
        %3843 = vmatprep.mubr.bf16.mxu0 0
        %3844 = vmatmul.mubr.bf16.gmra.mrb[0].mxu0 %v3661
        %v3845 = vpop.f32.mrb[0].mxu0
        %v3846 = vadd.f32 0.0, %v3845
        %v3847 = vpop.f32.mrb[0].mxu0
        %v3848 = vpop.f32.mrb[0].mxu0
        %v3849 = vadd.f32 0.0, %v3848
        %v3850 = vpop.f32.mrb[0].mxu0
        %3851 = vmatprep.mubr.bf16.mxu0 0
        %3852 = vmatmul.mubr.bf16.gmra.mrb[0].mxu0 %v3662
        %v3853 = vpop.f32.mrb[0].mxu0
        %v3854 = vadd.f32 0.0, %v3853
        %v3855 = vpop.f32.mrb[0].mxu0
        %v3856 = vpop.f32.mrb[0].mxu0
        %v3857 = vadd.f32 0.0, %v3856
        %v3858 = vpop.f32.mrb[0].mxu0
        %3859 = vmatprep.mubr.bf16.mxu0 0
        %3860 = vmatmul.mubr.bf16.gmra.mrb[0].mxu0 %v3663
        %v3861 = vpop.f32.mrb[0].mxu0
        %v3862 = vadd.f32 0.0, %v3861
        %v3863 = vpop.f32.mrb[0].mxu0
        %v3864 = vpop.f32.mrb[0].mxu0
        %v3865 = vadd.f32 0.0, %v3864
        %v3866 = vpop.f32.mrb[0].mxu0
        %3867 = vmatprep.mubr.bf16.mxu0 0
        %3868 = vmatmul.mubr.bf16.gmra.mrb[0].mxu0 %v3664
        %v3869 = vpop.f32.mrb[0].mxu0
        %v3870 = vadd.f32 0.0, %v3869
        %v3871 = vpop.f32.mrb[0].mxu0
        %v3872 = vpop.f32.mrb[0].mxu0
        %v3873 = vadd.f32 0.0, %v3872
        %v3874 = vpop.f32.mrb[0].mxu0
        %3875 = vmatprep.mubr.bf16.mxu0 0
        %3876 = vmatmul.mubr.bf16.gmra.mrb[0].mxu0 %v3665
        %v3877 = vpop.f32.mrb[0].mxu0
        %v3878 = vadd.f32 0.0, %v3877
        %v3879 = vpop.f32.mrb[0].mxu0
        %v3880 = vpop.f32.mrb[0].mxu0
        %v3881 = vadd.f32 0.0, %v3880
        %v3882 = vpop.f32.mrb[0].mxu0
        %3883 = vmatprep.mubr.bf16.mxu0 0
        %3884 = vmatmul.mubr.bf16.gmra.mrb[0].mxu0 %v3666
        %v3885 = vpop.f32.mrb[0].mxu0
        %v3886 = vadd.f32 0.0, %v3885
        %v3887 = vpop.f32.mrb[0].mxu0
        %v3888 = vpop.f32.mrb[0].mxu0
        %v3889 = vadd.f32 0.0, %v3888
        %v3890 = vpop.f32.mrb[0].mxu0
        %3891 = vdwg.mxu0
        %v3892 = vadd.f32 %v3395, %v3766
        %v3893 = vadd.f32 %v3396, %v3769
        %v3894 = vadd.f32 %v3397, %v3774
        %v3895 = vadd.f32 %v3398, %v3777
        %v3896 = vadd.f32 %v3399, %v3782
        %v3897 = vadd.f32 %v3400, %v3785
        %v3898 = vadd.f32 %v3401, %v3790
        %v3899 = vadd.f32 %v3402, %v3793
        %v3900 = vadd.f32 %v3403, %v3798
        %v3901 = vadd.f32 %v3404, %v3801
        %v3902 = vadd.f32 %v3405, %v3806
        %v3903 = vadd.f32 %v3406, %v3809
        %v3904 = vadd.f32 %v3407, %v3814
        %v3905 = vadd.f32 %v3408, %v3817
        %v3906 = vadd.f32 %v3409, %v3822
        %v3907 = vadd.f32 %v3410, %v3825
        %v3908 = vadd.f32 %v3411, %v3830
        %v3909 = vadd.f32 %v3412, %v3833
        %v3910 = vadd.f32 %v3413, %v3838
        %v3911 = vadd.f32 %v3414, %v3841
        %v3912 = vadd.f32 %v3415, %v3846
        %v3913 = vadd.f32 %v3416, %v3849
        %v3914 = vadd.f32 %v3417, %v3854
        %v3915 = vadd.f32 %v3418, %v3857
        %v3916 = vadd.f32 %v3419, %v3862
        %v3917 = vadd.f32 %v3420, %v3865
        %v3918 = vadd.f32 %v3421, %v3870
        %v3919 = vadd.f32 %v3422, %v3873
        %v3920 = vadd.f32 %v3423, %v3878
        %v3921 = vadd.f32 %v3424, %v3881
        %v3922 = vadd.f32 %v3425, %v3886
        %v3923 = vadd.f32 %v3426, %v3889
        %v3924 = vld [vmem:[%s4] sm:$0x1]
        %v3926 = vlaneseq
        %v3927 = vshrl.u32 %v3926, 7
        %v3928 = vsub.s32 0, %v3927
        %v3929 = vrot.slane %v3924, %v3928
        %v3931 = vadd.f32 %v3892, %v3929
        %v3932 = vadd.f32 %v3893, %v3929
        %v3933 = vadd.f32 %v3894, %v3929
        %v3934 = vadd.f32 %v3895, %v3929
        %v3935 = vadd.f32 %v3896, %v3929
        %v3936 = vadd.f32 %v3897, %v3929
        %v3937 = vadd.f32 %v3898, %v3929
        %v3938 = vadd.f32 %v3899, %v3929
        %v3939 = vadd.f32 %v3900, %v3929
        %v3940 = vadd.f32 %v3901, %v3929
        %v3941 = vadd.f32 %v3902, %v3929
        %v3942 = vadd.f32 %v3903, %v3929
        %v3943 = vadd.f32 %v3904, %v3929
        %v3944 = vadd.f32 %v3905, %v3929
        %v3945 = vadd.f32 %v3906, %v3929
        %v3946 = vadd.f32 %v3907, %v3929
        %v3947 = vadd.f32 %v3908, %v3929
        %v3948 = vadd.f32 %v3909, %v3929
        %v3949 = vadd.f32 %v3910, %v3929
        %v3950 = vadd.f32 %v3911, %v3929
        %v3951 = vadd.f32 %v3912, %v3929
        %v3952 = vadd.f32 %v3913, %v3929
        %v3953 = vadd.f32 %v3914, %v3929
        %v3954 = vadd.f32 %v3915, %v3929
        %v3955 = vadd.f32 %v3916, %v3929
        %v3956 = vadd.f32 %v3917, %v3929
        %v3957 = vadd.f32 %v3918, %v3929
        %v3958 = vadd.f32 %v3919, %v3929
        %v3959 = vadd.f32 %v3920, %v3929
        %v3960 = vadd.f32 %v3921, %v3929
        %v3961 = vadd.f32 %v3922, %v3929
        %v3962 = vadd.f32 %v3923, %v3929
        %v3963 = vmax.f32 %v3931, 0.0
        %v3964 = vmax.f32 %v3932, 0.0
        %v3965 = vmax.f32 %v3933, 0.0
        %v3966 = vmax.f32 %v3934, 0.0
        %v3967 = vmax.f32 %v3935, 0.0
        %v3968 = vmax.f32 %v3936, 0.0
        %v3969 = vmax.f32 %v3937, 0.0
        %v3970 = vmax.f32 %v3938, 0.0
        %v3971 = vmax.f32 %v3939, 0.0
        %v3972 = vmax.f32 %v3940, 0.0
        %v3973 = vmax.f32 %v3941, 0.0
        %v3974 = vmax.f32 %v3942, 0.0
        %v3975 = vmax.f32 %v3943, 0.0
        %v3976 = vmax.f32 %v3944, 0.0
        %v3977 = vmax.f32 %v3945, 0.0
        %v3978 = vmax.f32 %v3946, 0.0
        %v3979 = vmax.f32 %v3947, 0.0
        %v3980 = vmax.f32 %v3948, 0.0
        %v3981 = vmax.f32 %v3949, 0.0
        %v3982 = vmax.f32 %v3950, 0.0
        %v3983 = vmax.f32 %v3951, 0.0
        %v3984 = vmax.f32 %v3952, 0.0
        %v3985 = vmax.f32 %v3953, 0.0
        %v3986 = vmax.f32 %v3954, 0.0
        %v3987 = vmax.f32 %v3955, 0.0
        %v3988 = vmax.f32 %v3956, 0.0
        %v3989 = vmax.f32 %v3957, 0.0
        %v3990 = vmax.f32 %v3958, 0.0
        %v3991 = vmax.f32 %v3959, 0.0
        %v3992 = vmax.f32 %v3960, 0.0
        %v3993 = vmax.f32 %v3961, 0.0
        %v3994 = vmax.f32 %v3962, 0.0
        %v3995 = vpack.c.bf16 %v3964, %v3963
        %v3996 = vpack.c.bf16 %v3966, %v3965
        %v3997 = vpack.c.bf16 %v3968, %v3967
        %v3998 = vpack.c.bf16 %v3970, %v3969
        %v3999 = vpack.c.bf16 %v3972, %v3971
        %v4000 = vpack.c.bf16 %v3974, %v3973
        %v4001 = vpack.c.bf16 %v3976, %v3975
        %v4002 = vpack.c.bf16 %v3978, %v3977
        %v4003 = vpack.c.bf16 %v3980, %v3979
        %v4004 = vpack.c.bf16 %v3982, %v3981
        %v4005 = vpack.c.bf16 %v3984, %v3983
        %v4006 = vpack.c.bf16 %v3986, %v3985
        %v4007 = vpack.c.bf16 %v3988, %v3987
        %v4008 = vpack.c.bf16 %v3990, %v3989
        %v4009 = vpack.c.bf16 %v3992, %v3991
        %v4010 = vpack.c.bf16 %v3994, %v3993
        %v4011 = vld [vmem:[#allocation8] sm:$0xf]
        %v4012 = vld [vmem:[#allocation8 + $0x4] sm:$0xf]
        %v4013 = vld [vmem:[#allocation8 + $0x8] sm:$0xf]
        %v4014 = vld [vmem:[#allocation8 + $0xc] sm:$0xf]
        %v4015 = vld [vmem:[#allocation8 + $0x10] sm:$0xf]
        %v4016 = vld [vmem:[#allocation8 + $0x14] sm:$0xf]
        %v4017 = vld [vmem:[#allocation8 + $0x18] sm:$0xf]
        %v4018 = vld [vmem:[#allocation8 + $0x1c] sm:$0xf]
        %v4019 = vld [vmem:[#allocation8 + $0x20] sm:$0xf]
        %v4020 = vld [vmem:[#allocation8 + $0x24] sm:$0xf]
        %v4021 = vld [vmem:[#allocation8 + $0x28] sm:$0xf]
        %v4022 = vld [vmem:[#allocation8 + $0x2c] sm:$0xf]
        %v4023 = vld [vmem:[#allocation8 + $0x30] sm:$0xf]
        %v4024 = vld [vmem:[#allocation8 + $0x34] sm:$0xf]
        %v4025 = vld [vmem:[#allocation8 + $0x38] sm:$0xf]
        %v4026 = vld [vmem:[#allocation8 + $0x3c] sm:$0xf]
        %v4027 = vld [vmem:[%s6] sm:$0x1]
        %v4029 = vlaneseq
        %v4030 = vshrl.u32 %v4029, 7
        %v4031 = vsub.s32 0, %v4030
        %v4032 = vrot.slane %v4027, %v4031
        %v4050 = vunpack.c.l.b16 %v4011
        %v4051 = vunpack.c.l.b16 %v4012
        %v4052 = vunpack.c.l.b16 %v4013
        %v4053 = vunpack.c.l.b16 %v4014
        %v4054 = vunpack.c.l.b16 %v4015
        %v4055 = vunpack.c.l.b16 %v4016
        %v4056 = vunpack.c.l.b16 %v4017
        %v4057 = vunpack.c.l.b16 %v4018
        %v4058 = vunpack.c.l.b16 %v4019
        %v4059 = vunpack.c.l.b16 %v4020
        %v4060 = vunpack.c.l.b16 %v4021
        %v4061 = vunpack.c.l.b16 %v4022
        %v4062 = vunpack.c.l.b16 %v4023
        %v4063 = vunpack.c.l.b16 %v4024
        %v4064 = vunpack.c.l.b16 %v4025
        %v4065 = vunpack.c.l.b16 %v4026
        %v4066 = vpack.c.b16 %v4051, %v4050
        %v4067 = vpack.c.b16 %v4053, %v4052
        %v4068 = vpack.c.b16 %v4055, %v4054
        %v4069 = vpack.c.b16 %v4057, %v4056
        %v4070 = vpack.c.b16 %v4059, %v4058
        %v4071 = vpack.c.b16 %v4061, %v4060
        %v4072 = vpack.c.b16 %v4063, %v4062
        %v4073 = vpack.c.b16 %v4065, %v4064
        %4082 = vmatprep.subr.bf16.mxu0 0
        %4083 = vmatpush1.bf16.msra.mxu0 %v4066
        %4084 = vmatprep.subr.bf16.mxu0 0
        %4085 = vmatpush1.bf16.msra.mxu0 %v4067
        %4086 = vmatprep.subr.bf16.mxu0 0
        %4087 = vmatpush1.bf16.msra.mxu0 %v4068
        %4088 = vmatprep.subr.bf16.mxu0 0
        %4089 = vmatpush1.bf16.msra.mxu0 %v4069
        %4090 = vmatprep.subr.bf16.mxu0 0
        %4091 = vmatpush1.bf16.msra.mxu0 %v4070
        %4092 = vmatprep.subr.bf16.mxu0 0
        %4093 = vmatpush1.bf16.msra.mxu0 %v4071
        %4094 = vmatprep.subr.bf16.mxu0 0
        %4095 = vmatpush1.bf16.msra.mxu0 %v4072
        %4096 = vmatprep.subr.bf16.mxu0 0
        %4097 = vmatpush1.bf16.msra.mxu0 %v4073
        %4098 = vmatprep.subr.bf16.mxu0 0
        %4099 = vmatpush1.bf16.msra.mxu0 0
        %4100 = vmatprep.subr.bf16.mxu0 0
        %4101 = vmatpush1.bf16.msra.mxu0 0
        %4102 = vmatprep.subr.bf16.mxu0 0
        %4103 = vmatpush1.bf16.msra.mxu0 0
        %4104 = vmatprep.subr.bf16.mxu0 0
        %4105 = vmatpush1.bf16.msra.mxu0 0
        %4106 = vmatprep.subr.bf16.mxu0 0
        %4107 = vmatpush1.bf16.msra.mxu0 0
        %4108 = vmatprep.subr.bf16.mxu0 0
        %4109 = vmatpush1.bf16.msra.mxu0 0
        %4110 = vmatprep.subr.bf16.mxu0 0
        %4111 = vmatpush1.bf16.msra.mxu0 0
        %4112 = vmatprep.subr.bf16.mxu0 0
        %4113 = vmatpush1.bf16.msra.mxu0 0
        %4114 = vmatprep.mubr.bf16.mxu0 0
        %4115 = vmatmul.mubr.bf16.gmra.mrb[0].mxu0 %v3995
        %v4116 = vpop.f32.mrb[0].mxu0
        %v4117 = vadd.f32 %v4032, %v4116
        %v4118 = vpop.f32.mrb[0].mxu0
        %v4119 = vpop.f32.mrb[0].mxu0
        %v4120 = vadd.f32 %v4032, %v4119
        %v4121 = vpop.f32.mrb[0].mxu0
        %4122 = vmatprep.mubr.bf16.mxu0 0
        %4123 = vmatmul.mubr.bf16.gmra.mrb[0].mxu0 %v3996
        %v4124 = vpop.f32.mrb[0].mxu0
        %v4125 = vadd.f32 %v4032, %v4124
        %v4126 = vpop.f32.mrb[0].mxu0
        %v4127 = vpop.f32.mrb[0].mxu0
        %v4128 = vadd.f32 %v4032, %v4127
        %v4129 = vpop.f32.mrb[0].mxu0
        %4130 = vmatprep.mubr.bf16.mxu0 0
        %4131 = vmatmul.mubr.bf16.gmra.mrb[0].mxu0 %v3997
        %v4132 = vpop.f32.mrb[0].mxu0
        %v4133 = vadd.f32 %v4032, %v4132
        %v4134 = vpop.f32.mrb[0].mxu0
        %v4135 = vpop.f32.mrb[0].mxu0
        %v4136 = vadd.f32 %v4032, %v4135
        %v4137 = vpop.f32.mrb[0].mxu0
        %4138 = vmatprep.mubr.bf16.mxu0 0
        %4139 = vmatmul.mubr.bf16.gmra.mrb[0].mxu0 %v3998
        %v4140 = vpop.f32.mrb[0].mxu0
        %v4141 = vadd.f32 %v4032, %v4140
        %v4142 = vpop.f32.mrb[0].mxu0
        %v4143 = vpop.f32.mrb[0].mxu0
        %v4144 = vadd.f32 %v4032, %v4143
        %v4145 = vpop.f32.mrb[0].mxu0
        %4146 = vmatprep.mubr.bf16.mxu0 0
        %4147 = vmatmul.mubr.bf16.gmra.mrb[0].mxu0 %v3999
        %v4148 = vpop.f32.mrb[0].mxu0
        %v4149 = vadd.f32 %v4032, %v4148
        %v4150 = vpop.f32.mrb[0].mxu0
        %v4151 = vpop.f32.mrb[0].mxu0
        %v4152 = vadd.f32 %v4032, %v4151
        %v4153 = vpop.f32.mrb[0].mxu0
        %4154 = vmatprep.mubr.bf16.mxu0 0
        %4155 = vmatmul.mubr.bf16.gmra.mrb[0].mxu0 %v4000
        %v4156 = vpop.f32.mrb[0].mxu0
        %v4157 = vadd.f32 %v4032, %v4156
        %v4158 = vpop.f32.mrb[0].mxu0
        %v4159 = vpop.f32.mrb[0].mxu0
        %v4160 = vadd.f32 %v4032, %v4159
        %v4161 = vpop.f32.mrb[0].mxu0
        %4162 = vmatprep.mubr.bf16.mxu0 0
        %4163 = vmatmul.mubr.bf16.gmra.mrb[0].mxu0 %v4001
        %v4164 = vpop.f32.mrb[0].mxu0
        %v4165 = vadd.f32 %v4032, %v4164
        %v4166 = vpop.f32.mrb[0].mxu0
        %v4167 = vpop.f32.mrb[0].mxu0
        %v4168 = vadd.f32 %v4032, %v4167
        %v4169 = vpop.f32.mrb[0].mxu0
        %4170 = vmatprep.mubr.bf16.mxu0 0
        %4171 = vmatmul.mubr.bf16.gmra.mrb[0].mxu0 %v4002
        %v4172 = vpop.f32.mrb[0].mxu0
        %v4173 = vadd.f32 %v4032, %v4172
        %v4174 = vpop.f32.mrb[0].mxu0
        %v4175 = vpop.f32.mrb[0].mxu0
        %v4176 = vadd.f32 %v4032, %v4175
        %v4177 = vpop.f32.mrb[0].mxu0
        %4178 = vmatprep.mubr.bf16.mxu0 0
        %4179 = vmatmul.mubr.bf16.gmra.mrb[0].mxu0 %v4003
        %v4180 = vpop.f32.mrb[0].mxu0
        %v4181 = vadd.f32 %v4032, %v4180
        %v4182 = vpop.f32.mrb[0].mxu0
        %v4183 = vpop.f32.mrb[0].mxu0
        %v4184 = vadd.f32 %v4032, %v4183
        %v4185 = vpop.f32.mrb[0].mxu0
        %4186 = vmatprep.mubr.bf16.mxu0 0
        %4187 = vmatmul.mubr.bf16.gmra.mrb[0].mxu0 %v4004
        %v4188 = vpop.f32.mrb[0].mxu0
        %v4189 = vadd.f32 %v4032, %v4188
        %v4190 = vpop.f32.mrb[0].mxu0
        %v4191 = vpop.f32.mrb[0].mxu0
        %v4192 = vadd.f32 %v4032, %v4191
        %v4193 = vpop.f32.mrb[0].mxu0
        %4194 = vmatprep.mubr.bf16.mxu0 0
        %4195 = vmatmul.mubr.bf16.gmra.mrb[0].mxu0 %v4005
        %v4196 = vpop.f32.mrb[0].mxu0
        %v4197 = vadd.f32 %v4032, %v4196
        %v4198 = vpop.f32.mrb[0].mxu0
        %v4199 = vpop.f32.mrb[0].mxu0
        %v4200 = vadd.f32 %v4032, %v4199
        %v4201 = vpop.f32.mrb[0].mxu0
        %4202 = vmatprep.mubr.bf16.mxu0 0
        %4203 = vmatmul.mubr.bf16.gmra.mrb[0].mxu0 %v4006
        %v4204 = vpop.f32.mrb[0].mxu0
        %v4205 = vadd.f32 %v4032, %v4204
        %v4206 = vpop.f32.mrb[0].mxu0
        %v4207 = vpop.f32.mrb[0].mxu0
        %v4208 = vadd.f32 %v4032, %v4207
        %v4209 = vpop.f32.mrb[0].mxu0
        %4210 = vmatprep.mubr.bf16.mxu0 0
        %4211 = vmatmul.mubr.bf16.gmra.mrb[0].mxu0 %v4007
        %v4212 = vpop.f32.mrb[0].mxu0
        %v4213 = vadd.f32 %v4032, %v4212
        %v4214 = vpop.f32.mrb[0].mxu0
        %v4215 = vpop.f32.mrb[0].mxu0
        %v4216 = vadd.f32 %v4032, %v4215
        %v4217 = vpop.f32.mrb[0].mxu0
        %4218 = vmatprep.mubr.bf16.mxu0 0
        %4219 = vmatmul.mubr.bf16.gmra.mrb[0].mxu0 %v4008
        %v4220 = vpop.f32.mrb[0].mxu0
        %v4221 = vadd.f32 %v4032, %v4220
        %v4222 = vpop.f32.mrb[0].mxu0
        %v4223 = vpop.f32.mrb[0].mxu0
        %v4224 = vadd.f32 %v4032, %v4223
        %v4225 = vpop.f32.mrb[0].mxu0
        %4226 = vmatprep.mubr.bf16.mxu0 0
        %4227 = vmatmul.mubr.bf16.gmra.mrb[0].mxu0 %v4009
        %v4228 = vpop.f32.mrb[0].mxu0
        %v4229 = vadd.f32 %v4032, %v4228
        %v4230 = vpop.f32.mrb[0].mxu0
        %v4231 = vpop.f32.mrb[0].mxu0
        %v4232 = vadd.f32 %v4032, %v4231
        %v4233 = vpop.f32.mrb[0].mxu0
        %4234 = vmatprep.mubr.bf16.mxu0 0
        %4235 = vmatmul.mubr.bf16.gmra.mrb[0].mxu0 %v4010
        %v4236 = vpop.f32.mrb[0].mxu0
        %v4237 = vadd.f32 %v4032, %v4236
        %v4238 = vpop.f32.mrb[0].mxu0
        %v4239 = vpop.f32.mrb[0].mxu0
        %v4240 = vadd.f32 %v4032, %v4239
        %v4241 = vpop.f32.mrb[0].mxu0
        %4242 = vdwg.mxu0
        %v4243 = vunpack.c.l.bf16 %v344
        %v4244 = vunpack.c.l.bf16 %v345
        %v4245 = vunpack.c.l.bf16 %v346
        %v4246 = vunpack.c.l.bf16 %v347
        %v4247 = vunpack.c.l.bf16 %v348
        %v4248 = vunpack.c.l.bf16 %v349
        %v4249 = vunpack.c.l.bf16 %v350
        %v4250 = vunpack.c.l.bf16 %v351
        %v4251 = vunpack.c.l.bf16 %v352
        %v4252 = vunpack.c.l.bf16 %v353
        %v4253 = vunpack.c.l.bf16 %v354
        %v4254 = vunpack.c.l.bf16 %v355
        %v4255 = vunpack.c.l.bf16 %v356
        %v4256 = vunpack.c.l.bf16 %v357
        %v4257 = vunpack.c.l.bf16 %v358
        %v4258 = vunpack.c.l.bf16 %v359
        %v4259 = vunpack.c.l.bf16 %v360
        %v4260 = vunpack.c.l.bf16 %v361
        %v4261 = vunpack.c.l.bf16 %v362
        %v4262 = vunpack.c.l.bf16 %v363
        %v4263 = vunpack.c.l.bf16 %v364
        %v4264 = vunpack.c.l.bf16 %v365
        %v4265 = vunpack.c.l.bf16 %v366
        %v4266 = vunpack.c.l.bf16 %v367
        %v4267 = vunpack.c.l.bf16 %v368
        %v4268 = vunpack.c.l.bf16 %v369
        %v4269 = vunpack.c.l.bf16 %v370
        %v4270 = vunpack.c.l.bf16 %v371
        %v4271 = vunpack.c.l.bf16 %v372
        %v4272 = vunpack.c.l.bf16 %v373
        %v4273 = vunpack.c.l.bf16 %v374
        %v4274 = vunpack.c.l.bf16 %v375
        %v4275 = vadd.f32 %v4117, %v4243
        %v4276 = vadd.f32 %v4120, %v4244
        %v4277 = vadd.f32 %v4125, %v4245
        %v4278 = vadd.f32 %v4128, %v4246
        %v4279 = vadd.f32 %v4133, %v4247
        %v4280 = vadd.f32 %v4136, %v4248
        %v4281 = vadd.f32 %v4141, %v4249
        %v4282 = vadd.f32 %v4144, %v4250
        %v4283 = vadd.f32 %v4149, %v4251
        %v4284 = vadd.f32 %v4152, %v4252
        %v4285 = vadd.f32 %v4157, %v4253
        %v4286 = vadd.f32 %v4160, %v4254
        %v4287 = vadd.f32 %v4165, %v4255
        %v4288 = vadd.f32 %v4168, %v4256
        %v4289 = vadd.f32 %v4173, %v4257
        %v4290 = vadd.f32 %v4176, %v4258
        %v4291 = vadd.f32 %v4181, %v4259
        %v4292 = vadd.f32 %v4184, %v4260
        %v4293 = vadd.f32 %v4189, %v4261
        %v4294 = vadd.f32 %v4192, %v4262
        %v4295 = vadd.f32 %v4197, %v4263
        %v4296 = vadd.f32 %v4200, %v4264
        %v4297 = vadd.f32 %v4205, %v4265
        %v4298 = vadd.f32 %v4208, %v4266
        %v4299 = vadd.f32 %v4213, %v4267
        %v4300 = vadd.f32 %v4216, %v4268
        %v4301 = vadd.f32 %v4221, %v4269
        %v4302 = vadd.f32 %v4224, %v4270
        %v4303 = vadd.f32 %v4229, %v4271
        %v4304 = vadd.f32 %v4232, %v4272
        %v4305 = vadd.f32 %v4237, %v4273
        %v4306 = vadd.f32 %v4240, %v4274
        %v4307 = vmax.f32 %v4275, 0.0
        %v4308 = vmax.f32 %v4276, 0.0
        %v4309 = vmax.f32 %v4277, 0.0
        %v4310 = vmax.f32 %v4278, 0.0
        %v4311 = vmax.f32 %v4279, 0.0
        %v4312 = vmax.f32 %v4280, 0.0
        %v4313 = vmax.f32 %v4281, 0.0
        %v4314 = vmax.f32 %v4282, 0.0
        %v4315 = vmax.f32 %v4283, 0.0
        %v4316 = vmax.f32 %v4284, 0.0
        %v4317 = vmax.f32 %v4285, 0.0
        %v4318 = vmax.f32 %v4286, 0.0
        %v4319 = vmax.f32 %v4287, 0.0
        %v4320 = vmax.f32 %v4288, 0.0
        %v4321 = vmax.f32 %v4289, 0.0
        %v4322 = vmax.f32 %v4290, 0.0
        %v4323 = vmax.f32 %v4291, 0.0
        %v4324 = vmax.f32 %v4292, 0.0
        %v4325 = vmax.f32 %v4293, 0.0
        %v4326 = vmax.f32 %v4294, 0.0
        %v4327 = vmax.f32 %v4295, 0.0
        %v4328 = vmax.f32 %v4296, 0.0
        %v4329 = vmax.f32 %v4297, 0.0
        %v4330 = vmax.f32 %v4298, 0.0
        %v4331 = vmax.f32 %v4299, 0.0
        %v4332 = vmax.f32 %v4300, 0.0
        %v4333 = vmax.f32 %v4301, 0.0
        %v4334 = vmax.f32 %v4302, 0.0
        %v4335 = vmax.f32 %v4303, 0.0
        %v4336 = vmax.f32 %v4304, 0.0
        %v4337 = vmax.f32 %v4305, 0.0
        %v4338 = vmax.f32 %v4306, 0.0
        %v4339 = vpack.c.bf16 %v4308, %v4307
        %v4340 = vpack.c.bf16 %v4310, %v4309
        %v4341 = vpack.c.bf16 %v4312, %v4311
        %v4342 = vpack.c.bf16 %v4314, %v4313
        %v4343 = vpack.c.bf16 %v4316, %v4315
        %v4344 = vpack.c.bf16 %v4318, %v4317
        %v4345 = vpack.c.bf16 %v4320, %v4319
        %v4346 = vpack.c.bf16 %v4322, %v4321
        %v4347 = vpack.c.bf16 %v4324, %v4323
        %v4348 = vpack.c.bf16 %v4326, %v4325
        %v4349 = vpack.c.bf16 %v4328, %v4327
        %v4350 = vpack.c.bf16 %v4330, %v4329
        %v4351 = vpack.c.bf16 %v4332, %v4331
        %v4352 = vpack.c.bf16 %v4334, %v4333
        %v4353 = vpack.c.bf16 %v4336, %v4335
        %v4354 = vpack.c.bf16 %v4338, %v4337
        %v4371 = vunpack.c.l.b16 %v4339
        %v4372 = vunpack.c.h.b16 %v4339
        %v4373 = vunpack.c.l.b16 %v4340
        %v4374 = vunpack.c.h.b16 %v4340
        %v4375 = vunpack.c.l.b16 %v4341
        %v4376 = vunpack.c.h.b16 %v4341
        %v4377 = vunpack.c.l.b16 %v4342
        %v4378 = vunpack.c.h.b16 %v4342
        %v4379 = vunpack.c.l.b16 %v4343
        %v4380 = vunpack.c.h.b16 %v4343
        %v4381 = vunpack.c.l.b16 %v4344
        %v4382 = vunpack.c.h.b16 %v4344
        %v4383 = vunpack.c.l.b16 %v4345
        %v4384 = vunpack.c.h.b16 %v4345
        %v4385 = vunpack.c.l.b16 %v4346
        %v4386 = vunpack.c.h.b16 %v4346
        %v4387 = vunpack.c.l.b16 %v4347
        %v4388 = vunpack.c.h.b16 %v4347
        %v4389 = vunpack.c.l.b16 %v4348
        %v4390 = vunpack.c.h.b16 %v4348
        %v4391 = vunpack.c.l.b16 %v4349
        %v4392 = vunpack.c.h.b16 %v4349
        %v4393 = vunpack.c.l.b16 %v4350
        %v4394 = vunpack.c.h.b16 %v4350
        %v4395 = vunpack.c.l.b16 %v4351
        %v4396 = vunpack.c.h.b16 %v4351
        %v4397 = vunpack.c.l.b16 %v4352
        %v4398 = vunpack.c.h.b16 %v4352
        %v4399 = vunpack.c.l.b16 %v4353
        %v4400 = vunpack.c.h.b16 %v4353
        %v4401 = vunpack.c.l.b16 %v4354
        %v4402 = vunpack.c.h.b16 %v4354
        %v4403 = vpack.c.b16 %v4371, %v4371
        %v4404 = vpack.c.b16 %v4372, %v4372
        %v4405 = vpack.c.b16 %v4373, %v4373
        %v4406 = vpack.c.b16 %v4374, %v4374
        %v4407 = vpack.c.b16 %v4375, %v4375
        %v4408 = vpack.c.b16 %v4376, %v4376
        %v4409 = vpack.c.b16 %v4377, %v4377
        %v4410 = vpack.c.b16 %v4378, %v4378
        %v4411 = vpack.c.b16 %v4379, %v4379
        %v4412 = vpack.c.b16 %v4380, %v4380
        %v4413 = vpack.c.b16 %v4381, %v4381
        %v4414 = vpack.c.b16 %v4382, %v4382
        %v4415 = vpack.c.b16 %v4383, %v4383
        %v4416 = vpack.c.b16 %v4384, %v4384
        %v4417 = vpack.c.b16 %v4385, %v4385
        %v4418 = vpack.c.b16 %v4386, %v4386
        %v4419 = vpack.c.b16 %v4387, %v4387
        %v4420 = vpack.c.b16 %v4388, %v4388
        %v4421 = vpack.c.b16 %v4389, %v4389
        %v4422 = vpack.c.b16 %v4390, %v4390
        %v4423 = vpack.c.b16 %v4391, %v4391
        %v4424 = vpack.c.b16 %v4392, %v4392
        %v4425 = vpack.c.b16 %v4393, %v4393
        %v4426 = vpack.c.b16 %v4394, %v4394
        %v4427 = vpack.c.b16 %v4395, %v4395
        %v4428 = vpack.c.b16 %v4396, %v4396
        %v4429 = vpack.c.b16 %v4397, %v4397
        %v4430 = vpack.c.b16 %v4398, %v4398
        %v4431 = vpack.c.b16 %v4399, %v4399
        %v4432 = vpack.c.b16 %v4400, %v4400
        %v4433 = vpack.c.b16 %v4401, %v4401
        %v4434 = vpack.c.b16 %v4402, %v4402
        %4467 = vst [vmem:[%s340] sm:$0xf] %v4403
        %4468 = vst [vmem:[%s340 + $0x4] sm:$0xf] %v4404
        %4469 = vst [vmem:[%s340 + $0x8] sm:$0xf] %v4405
        %4470 = vst [vmem:[%s340 + $0xc] sm:$0xf] %v4406
        %4471 = vst [vmem:[%s340 + $0x10] sm:$0xf] %v4407
        %4472 = vst [vmem:[%s340 + $0x14] sm:$0xf] %v4408
        %4473 = vst [vmem:[%s340 + $0x18] sm:$0xf] %v4409
        %4474 = vst [vmem:[%s340 + $0x1c] sm:$0xf] %v4410
        %4475 = vst [vmem:[%s340 + $0x20] sm:$0xf] %v4411
        %4476 = vst [vmem:[%s340 + $0x24] sm:$0xf] %v4412
        %4477 = vst [vmem:[%s340 + $0x28] sm:$0xf] %v4413
        %4478 = vst [vmem:[%s340 + $0x2c] sm:$0xf] %v4414
        %4479 = vst [vmem:[%s340 + $0x30] sm:$0xf] %v4415
        %4480 = vst [vmem:[%s340 + $0x34] sm:$0xf] %v4416
        %4481 = vst [vmem:[%s340 + $0x38] sm:$0xf] %v4417
        %4482 = vst [vmem:[%s340 + $0x3c] sm:$0xf] %v4418
        %4483 = vst [vmem:[%s340 + $0x40] sm:$0xf] %v4419
        %4484 = vst [vmem:[%s340 + $0x44] sm:$0xf] %v4420
        %4485 = vst [vmem:[%s340 + $0x48] sm:$0xf] %v4421
        %4486 = vst [vmem:[%s340 + $0x4c] sm:$0xf] %v4422
        %4487 = vst [vmem:[%s340 + $0x50] sm:$0xf] %v4423
        %4488 = vst [vmem:[%s340 + $0x54] sm:$0xf] %v4424
        %4489 = vst [vmem:[%s340 + $0x58] sm:$0xf] %v4425
        %4490 = vst [vmem:[%s340 + $0x5c] sm:$0xf] %v4426
        %4491 = vst [vmem:[%s340 + $0x60] sm:$0xf] %v4427
        %4492 = vst [vmem:[%s340 + $0x64] sm:$0xf] %v4428
        %4493 = vst [vmem:[%s340 + $0x68] sm:$0xf] %v4429
        %4494 = vst [vmem:[%s340 + $0x6c] sm:$0xf] %v4430
        %4495 = vst [vmem:[%s340 + $0x70] sm:$0xf] %v4431
        %4496 = vst [vmem:[%s340 + $0x74] sm:$0xf] %v4432
        %4497 = vst [vmem:[%s340 + $0x78] sm:$0xf] %v4433
        %4498 = vst [vmem:[%s340 + $0x7c] sm:$0xf] %v4434
        %s4499 = sand.u32 %s186, 1
        %s4500 = scalar_lea.sflag [#allocation4], %s4499
        %s4501 = sand.u32 %s186, 1
        %s4502 = smul.addr %s4501, 128
        %s4503 = scalar_lea.vmem [#allocation10], %s4502
        // Predicated region
        $region65: #{tpu_custom_call.1} parent=47 // pred_check
          %p4504 = pneg %p196
        $region66: #{tpu_custom_call.1} parent=47 // pred_check_branch
          %4506 = sbr.rel (%p4504) target = $region68
        $region67: #{tpu_custom_call.1} parent=47 // pred_region
          %s4508 = ssub.s32 2048, 2048
          %4509 = vsyncadd %s4500, %s4508
          %s4510 = smul.addr %s26, 32
          %s4511 = smul.addr %s4510, 64
          %s4512 = scalar_lea.hbm %s7, %s4511
          %s4513 = sshll.u32 %s4503, 4
          %s4514 = int_to_ptr.vmem [resolvable:$true] %s4513
          %4519 = dma.vmem_to_hbm [thread:$0]  %s4514, 2048, %s4512, %s4500, 64, 64, 4
        $region68: #{tpu_custom_call.1} parent=47 // pred_fallthru
          _
      $region48: #{tpu_custom_call.1} parent=5 // pred_fallthru
        _
      %p4520 = scmp.le.s32.totalorder 2, %s21
      // Predicated region
      $region69: #{tpu_custom_call.1} parent=5 // pred_check
        %p4521 = pneg %p4520
      $region70: #{tpu_custom_call.1} parent=5 // pred_check_branch
        %4523 = sbr.rel (%p4521) target = $region72
      $region71: #{tpu_custom_call.1} parent=5 // pred_region
        %s4524 = ssub.s32 %s21, 2
        // Predicated region
        $region73: #{tpu_custom_call.1} parent=71 // pred_check
          %p4525 = pneg %p202
        $region74: #{tpu_custom_call.1} parent=71 // pred_check_branch
          %4527 = sbr.rel (%p4525) target = $region76
        $region75: #{tpu_custom_call.1} parent=71 // pred_region
          %s4528 = sand.u32 %s187, 1
          %s4529 = scalar_lea.sflag [#allocation4], %s4528
          %s4530 = sand.u32 %s187, 1
          %s4531 = smul.addr %s4530, 128
          %s4532 = scalar_lea.vmem [#allocation10], %s4531
          %4533 = dma.done %s4529, 2048
        $region76: #{tpu_custom_call.1} parent=71 // pred_fallthru
          _
      $region72: #{tpu_custom_call.1} parent=5 // pred_fallthru
        _
    $region6: #{tpu_custom_call.1} parent=1 // loop_footer
      %s25 = sadd.s32 1, %s21
    $region7: #{tpu_custom_call.1} parent=1 // loop_footer_branch
      %20 = sbr.rel target = $region3
    $region8: #{tpu_custom_call.1} parent=1 // loop_exit
      _
    %4534 = vsyncpa [#allocation3], 1
    %s4535 = scalar_lea.sflag [#allocation3], 1
    %4536 = vsyncpa %s4535, 1
    %4537 = vsyncpa [#allocation6], 1
    %4538 = vsyncpa [#allocation9], 1
    %4539 = vsyncpa [#allocation4], 1
    %s4540 = scalar_lea.sflag [#allocation4], 1
    %4541 = vsyncpa %s4540, 1

</llo_original>
